<compile_context>
chip_gen: v5e
topology: v5e:2x2
jax: 0.10.0
libtpu: 0.0.40
codegen_flags: <defaults>
</compile_context>

<pallas_src>
import math

import jax
import jax.numpy as jnp
from jax.experimental import pallas as pl
from jax.experimental.pallas import tpu as pltpu

# ----- small, BERT-style config (real bert-base: seq=320, H=768, 12L, 12 heads)
BATCH = 2
SEQ = 16
HIDDEN = 128
NUM_HEADS = 4
HEAD_DIM = HIDDEN // NUM_HEADS
INTERMEDIATE = 256
NUM_LAYERS = 2
VOCAB = 100
TYPE_VOCAB = 2
LN_EPS = 1e-12


# ----------------------------- kernel helpers --------------------------------
def _layernorm(x, g, b):
    # Single-pass variance (E[x^2] - mu^2); clamp guards cancellation.
    mu = jnp.mean(x, axis=-1, keepdims=True)
    var = jnp.maximum(jnp.mean(x * x, axis=-1, keepdims=True) - mu * mu, 0.0)
    return (x - mu) * jax.lax.rsqrt(var + LN_EPS) * g + b


def _gelu(x):
    # tanh-approximate GELU (HF "gelu_new"); exact erf GELU differs slightly.
    c = math.sqrt(2.0 / math.pi)
    return 0.5 * x * (1.0 + jnp.tanh(c * (x + 0.044715 * x * x * x)))


# ----------------------------- fused encoder kernel ---------------------------
def _encoder_kernel(x_ref, bias_ref, eg_ref, eb_ref,
                    wqkv_ref, bqkv_ref, wo_ref, bo_ref,
                    ln1g_ref, ln1b_ref,
                    w1_ref, b1_ref, w2_ref, b2_ref,
                    ln2g_ref, ln2b_ref,
                    out_ref):
    """Embedding LayerNorm + all BERT encoder layers, fully unrolled."""
    H, HD, NH = HIDDEN, HEAD_DIM, NUM_HEADS

    bias = bias_ref[...]                                     # [N, N] f32

    # Embedding LayerNorm; activation stays a live value across all layers.
    x = _layernorm(x_ref[...], eg_ref[...], eb_ref[...])     # [N, H] f32

    for l in range(NUM_LAYERS):                              # static full unroll
        xb = x.astype(jnp.bfloat16)

        # --- fused QKV: one lane-dense [N,H] x [H,3H] matmul ------------------
        # 1/sqrt(HEAD_DIM) is folded into the Q weight/bias at pack time.
        qkv = jnp.dot(xb, wqkv_ref[l],
                      preferred_element_type=jnp.float32) + bqkv_ref[l]  # [N,3H]

        # Split heads (columns are [q | k | v], head-major within each block).
        q = jnp.stack([qkv[:, h * HD:(h + 1) * HD]
                       for h in range(NH)], axis=0).astype(jnp.bfloat16)
        k = jnp.stack([qkv[:, H + h * HD:H + (h + 1) * HD]
                       for h in range(NH)], axis=0).astype(jnp.bfloat16)
        v = jnp.stack([qkv[:, 2 * H + h * HD:2 * H + (h + 1) * HD]
                       for h in range(NH)], axis=0).astype(jnp.bfloat16)

        # --- batched per-head scores + softmax (heads on leading axis) -------
        s = jnp.einsum("hqd,hkd->hqk", q, k,
                       preferred_element_type=jnp.float32) + bias       # [NH,N,N]
        s = s - jnp.max(s, axis=-1, keepdims=True)
        p = jnp.exp(s)
        p = p * pl.reciprocal(jnp.sum(p, axis=-1, keepdims=True), approx=True)

        ctx = jnp.einsum("hqk,hkd->hqd", p.astype(jnp.bfloat16), v,
                         preferred_element_type=jnp.float32)            # [NH,N,HD]

        # --- output projection: concat heads along lanes, one [N,H]x[H,H] dot
        ctx_flat = jnp.concatenate([ctx[h] for h in range(NH)], axis=-1)  # [N,H]
        attn = jnp.dot(ctx_flat.astype(jnp.bfloat16), wo_ref[l],
                       preferred_element_type=jnp.float32) + bo_ref[l]

        h1 = _layernorm(x + attn, ln1g_ref[l], ln1b_ref[l])   # post-attn LN

        # --- feed-forward -----------------------------------------------------
        ff = jnp.dot(h1.astype(jnp.bfloat16), w1_ref[l],
                     preferred_element_type=jnp.float32) + b1_ref[l]
        ff = _gelu(ff)
        ff = jnp.dot(ff.astype(jnp.bfloat16), w2_ref[l],
                     preferred_element_type=jnp.float32) + b2_ref[l]
        x = _layernorm(h1 + ff, ln2g_ref[l], ln2b_ref[l])     # post-FFN LN

    out_ref[...] = x              # single HBM writeback, after the last layer


# ----------------------------- wrapper ----------------------------------------
def pretrained_bert_forward(input_ids, token_type_ids, attention_mask, p):
    # TODO(synk): BertTokenizer.batch_encode_plus is string processing with no
    # Pallas equivalent; input_ids / attention_mask are provided directly.
    B, S = input_ids.shape
    N = B * S
    H = HIDDEN

    # Embedding gather stays in XLA (no clean dense-Pallas equivalent at this
    # scale); the embedding LayerNorm is fused into the encoder kernel.
    we = jnp.take(p["word_emb"], input_ids, axis=0)                 # [B, S, H]
    pe = p["pos_emb"][None, :S, :]                                  # [1, S, H]
    te = jnp.take(p["type_emb"], token_type_ids, axis=0)            # [B, S, H]
    x = (we + pe + te).astype(jnp.float32).reshape(N, H)

    # Additive attention bias, hoisted out of the kernel: key padding mask plus
    # a block-diagonal batch mask (batch is folded into the sequence axis).
    kmask = attention_mask.astype(jnp.float32).reshape(N)
    bids = jnp.repeat(jnp.arange(B), S)
    keep = (bids[:, None] == bids[None, :]).astype(jnp.float32) * kmask[None, :]
    attn_bias = (1.0 - keep) * -1e9                                 # [N, N] f32

    vmem = pl.BlockSpec(memory_space=pltpu.MemorySpace.VMEM)
    out = pl.pallas_call(
        _encoder_kernel,
        out_shape=jax.ShapeDtypeStruct((N, H), jnp.float32),
        in_specs=[vmem] * 16,            # everything whole-array, VMEM-resident
        out_specs=vmem,
    )(x, attn_bias, p["emb_ln_g"], p["emb_ln_b"],
      p["wqkv"], p["bqkv"], p["wo"], p["bo"], p["ln1_g"], p["ln1_b"],
      p["w1"], p["b1"], p["w2"], p["b2"], p["ln2_g"], p["ln2_b"])

    # last_hidden_state; the PyTorch forward prints shapes and exit()s here.
    # TODO(synk): start_weights / end_weights (nn.Linear(320, 320)) are declared
    # in __init__ but never applied in forward, so they are not executed here.
    return out.reshape(B, S, H)


# ----------------------------- parameter init / packing -----------------------
def init_params(key):
    def normal(k, shape, std=0.02):
        return std * jax.random.normal(k, shape, dtype=jnp.float32)

    keys = iter(jax.random.split(key, 8 + NUM_LAYERS * 8))
    params = {
        "word_emb": normal(next(keys), (VOCAB, HIDDEN)),
        "pos_emb": normal(next(keys), (SEQ, HIDDEN)),
        "type_emb": normal(next(keys), (TYPE_VOCAB, HIDDEN)),
        "emb_ln_g": jnp.ones((1, HIDDEN), jnp.float32),
        "emb_ln_b": jnp.zeros((1, HIDDEN), jnp.float32),
        "layers": [],
    }
    for _ in range(NUM_LAYERS):
        params["layers"].append({
            "wq": normal(next(keys), (HIDDEN, HIDDEN)),
            "bq": jnp.zeros((1, HIDDEN), jnp.float32),
            "wk": normal(next(keys), (HIDDEN, HIDDEN)),
            "bk": jnp.zeros((1, HIDDEN), jnp.float32),
            "wv": normal(next(keys), (HIDDEN, HIDDEN)),
            "bv": jnp.zeros((1, HIDDEN), jnp.float32),
            "wo": normal(next(keys), (HIDDEN, HIDDEN)),
            "bo": jnp.zeros((1, HIDDEN), jnp.float32),
            "ln1_g": jnp.ones((1, HIDDEN), jnp.float32),
            "ln1_b": jnp.zeros((1, HIDDEN), jnp.float32),
            "w1": normal(next(keys), (HIDDEN, INTERMEDIATE)),
            "b1": jnp.zeros((1, INTERMEDIATE), jnp.float32),
            "w2": normal(next(keys), (INTERMEDIATE, HIDDEN)),
            "b2": jnp.zeros((1, HIDDEN), jnp.float32),
            "ln2_g": jnp.ones((1, HIDDEN), jnp.float32),
            "ln2_b": jnp.zeros((1, HIDDEN), jnp.float32),
        })
    return params


def pack_params(params):
    """Stack per-layer weights on an L axis, fuse QKV as one lane-dense
    [H, 3H] weight, cast matmul weights to bf16, fold 1/sqrt(HEAD_DIM) into Q.
    Note: HF nn.Linear checkpoints store weights [out, in]; this packing
    assumes [in, out] (self-initialized weights here)."""
    scale = 1.0 / math.sqrt(HEAD_DIM)

    acc = {k: [] for k in ("wqkv", "bqkv", "wo", "bo", "ln1_g", "ln1_b",
                           "w1", "b1", "w2", "b2", "ln2_g", "ln2_b")}
    for lp in params["layers"]:
        acc["wqkv"].append(jnp.concatenate(
            [lp["wq"] * scale, lp["wk"], lp["wv"]], axis=-1))       # [H, 3H]
        acc["bqkv"].append(jnp.concatenate(
            [lp["bq"] * scale, lp["bk"], lp["bv"]], axis=-1))       # [1, 3H]
        acc["wo"].append(lp["wo"])                                   # [H, H]
        acc["bo"].append(lp["bo"])
        acc["ln1_g"].append(lp["ln1_g"]); acc["ln1_b"].append(lp["ln1_b"])
        acc["w1"].append(lp["w1"]); acc["b1"].append(lp["b1"])
        acc["w2"].append(lp["w2"]); acc["b2"].append(lp["b2"])
        acc["ln2_g"].append(lp["ln2_g"]); acc["ln2_b"].append(lp["ln2_b"])

    packed = {k: jnp.stack(v, axis=0) for k, v in acc.items()}
    for k in ("wqkv", "wo", "w1", "w2"):                            # bf16 matmul weights
        packed[k] = packed[k].astype(jnp.bfloat16)
    for k in ("word_emb", "pos_emb", "type_emb", "emb_ln_g", "emb_ln_b"):
        packed[k] = params[k]
    return packed


# ----------------------------- main -------------------------------------------
if __name__ == "__main__":
    key = jax.random.PRNGKey(0)
    pkey, ikey = jax.random.split(key)
    params = pack_params(init_params(pkey))

    # Synthetic tokenizer output: [CLS] context [SEP] question [SEP] + padding.
    input_ids = jax.random.randint(ikey, (BATCH, SEQ), 0, VOCAB, dtype=jnp.int32)
    token_type_ids = jnp.concatenate(
        [jnp.zeros((BATCH, SEQ // 2), jnp.int32),
         jnp.ones((BATCH, SEQ // 2), jnp.int32)], axis=1)
    attention_mask = jnp.ones((BATCH, SEQ), jnp.int32).at[:, SEQ - 3:].set(0)

    last_hidden_state = pretrained_bert_forward(
        input_ids, token_type_ids, attention_mask, params)
    last_hidden_state = jax.block_until_ready(last_hidden_state)

    assert last_hidden_state.shape == (BATCH, SEQ, HIDDEN)
    assert bool(jnp.all(jnp.isfinite(last_hidden_state)))
    print("KERNEL_OK")
</pallas_src>

<mosaic_0001>
module attributes {stable_mosaic.version = 11 : i64} {
  func.func @_encoder_kernel(%arg0: memref<32x128xf32, #tpu.memory_space<vmem>>, %arg1: memref<32x32xf32, #tpu.memory_space<vmem>>, %arg2: memref<1x128xf32, #tpu.memory_space<vmem>>, %arg3: memref<1x128xf32, #tpu.memory_space<vmem>>, %arg4: memref<2x128x384xbf16, #tpu.memory_space<vmem>>, %arg5: memref<2x1x384xf32, #tpu.memory_space<vmem>>, %arg6: memref<2x128x128xbf16, #tpu.memory_space<vmem>>, %arg7: memref<2x1x128xf32, #tpu.memory_space<vmem>>, %arg8: memref<2x1x128xf32, #tpu.memory_space<vmem>>, %arg9: memref<2x1x128xf32, #tpu.memory_space<vmem>>, %arg10: memref<2x128x256xbf16, #tpu.memory_space<vmem>>, %arg11: memref<2x1x256xf32, #tpu.memory_space<vmem>>, %arg12: memref<2x256x128xbf16, #tpu.memory_space<vmem>>, %arg13: memref<2x1x128xf32, #tpu.memory_space<vmem>>, %arg14: memref<2x1x128xf32, #tpu.memory_space<vmem>>, %arg15: memref<2x1x128xf32, #tpu.memory_space<vmem>>, %arg16: memref<32x128xf32, #tpu.memory_space<vmem>>) attributes {dimension_semantics = [], scalar_prefetch = 0 : i64, scratch_operands = 0 : i64, tpu.core_type = #tpu.core_type<tc>} {
    %c0 = arith.constant 0 : index
    %c0_0 = arith.constant 0 : index
    %0 = vector.load %arg1[%c0, %c0_0] : memref<32x32xf32, #tpu.memory_space<vmem>>, vector<32x32xf32>
    %c0_1 = arith.constant 0 : index
    %c0_2 = arith.constant 0 : index
    %1 = vector.load %arg0[%c0_1, %c0_2] : memref<32x128xf32, #tpu.memory_space<vmem>>, vector<32x128xf32>
    %c0_3 = arith.constant 0 : index
    %c0_4 = arith.constant 0 : index
    %2 = vector.load %arg2[%c0_3, %c0_4] : memref<1x128xf32, #tpu.memory_space<vmem>>, vector<1x128xf32>
    %c0_5 = arith.constant 0 : index
    %c0_6 = arith.constant 0 : index
    %3 = vector.load %arg3[%c0_5, %c0_6] : memref<1x128xf32, #tpu.memory_space<vmem>>, vector<1x128xf32>
    %cst = arith.constant dense<0.000000e+00> : vector<32xf32>
    %4 = vector.multi_reduction <add>, %1, %cst [1] : vector<32x128xf32> to vector<32xf32>
    %5 = vector.shape_cast %4 : vector<32xf32> to vector<32x1xf32>
    %cst_7 = arith.constant 1.280000e+02 : f32
    %6 = vector.broadcast %cst_7 : f32 to vector<32x1xf32>
    %7 = arith.divf %5, %6 : vector<32x1xf32>
    %8 = arith.mulf %1, %1 : vector<32x128xf32>
    %cst_8 = arith.constant dense<0.000000e+00> : vector<32xf32>
    %9 = vector.multi_reduction <add>, %8, %cst_8 [1] : vector<32x128xf32> to vector<32xf32>
    %10 = vector.shape_cast %9 : vector<32xf32> to vector<32x1xf32>
    %cst_9 = arith.constant 1.280000e+02 : f32
    %11 = vector.broadcast %cst_9 : f32 to vector<32x1xf32>
    %12 = arith.divf %10, %11 : vector<32x1xf32>
    %13 = arith.mulf %7, %7 : vector<32x1xf32>
    %14 = arith.subf %12, %13 : vector<32x1xf32>
    %cst_10 = arith.constant 0.000000e+00 : f32
    %15 = vector.broadcast %cst_10 : f32 to vector<32x1xf32>
    %16 = arith.maximumf %14, %15 : vector<32x1xf32>
    %17 = vector.broadcast %7 : vector<32x1xf32> to vector<32x128xf32>
    %18 = arith.subf %1, %17 : vector<32x128xf32>
    %cst_11 = arith.constant 9.99999996E-13 : f32
    %19 = vector.broadcast %cst_11 : f32 to vector<32x1xf32>
    %20 = arith.addf %16, %19 : vector<32x1xf32>
    %21 = math.rsqrt %20 : vector<32x1xf32>
    %22 = vector.broadcast %21 : vector<32x1xf32> to vector<32x128xf32>
    %23 = arith.mulf %18, %22 : vector<32x128xf32>
    %24 = vector.broadcast %2 : vector<1x128xf32> to vector<32x128xf32>
    %25 = arith.mulf %23, %24 : vector<32x128xf32>
    %26 = vector.broadcast %3 : vector<1x128xf32> to vector<32x128xf32>
    %27 = arith.addf %25, %26 : vector<32x128xf32>
    %28 = arith.truncf %27 : vector<32x128xf32> to vector<32x128xbf16>
    %c0_12 = arith.constant 0 : index
    %c0_13 = arith.constant 0 : index
    %c0_14 = arith.constant 0 : index
    %29 = vector.load %arg4[%c0_12, %c0_13, %c0_14] : memref<2x128x384xbf16, #tpu.memory_space<vmem>>, vector<1x128x384xbf16>
    %30 = vector.shape_cast %29 : vector<1x128x384xbf16> to vector<128x384xbf16>
    %cst_15 = arith.constant dense<0.000000e+00> : vector<32x384xf32>
    %31 = tpu.matmul %28, %30, %cst_15 {dimension_numbers = #tpu.dot_dimension_numbers<[1], [0], [0], [1], [0, 0, 1, 1], [], []>} : vector<32x128xbf16>, vector<128x384xbf16>, vector<32x384xf32> -> vector<32x384xf32>
    %c0_16 = arith.constant 0 : index
    %c0_17 = arith.constant 0 : index
    %c0_18 = arith.constant 0 : index
    %32 = vector.load %arg5[%c0_16, %c0_17, %c0_18] : memref<2x1x384xf32, #tpu.memory_space<vmem>>, vector<1x1x384xf32>
    %33 = vector.shape_cast %32 : vector<1x1x384xf32> to vector<1x384xf32>
    %34 = vector.broadcast %33 : vector<1x384xf32> to vector<32x384xf32>
    %35 = arith.addf %31, %34 : vector<32x384xf32>
    %36 = vector.extract_strided_slice %35 {offsets = [0, 0], sizes = [32, 32], strides = [1, 1]} : vector<32x384xf32> to vector<32x32xf32>
    %37 = vector.extract_strided_slice %35 {offsets = [0, 32], sizes = [32, 32], strides = [1, 1]} : vector<32x384xf32> to vector<32x32xf32>
    %38 = vector.extract_strided_slice %35 {offsets = [0, 64], sizes = [32, 32], strides = [1, 1]} : vector<32x384xf32> to vector<32x32xf32>
    %39 = vector.extract_strided_slice %35 {offsets = [0, 96], sizes = [32, 32], strides = [1, 1]} : vector<32x384xf32> to vector<32x32xf32>
    %40 = vector.shape_cast %36 : vector<32x32xf32> to vector<1x32x32xf32>
    %41 = vector.shape_cast %37 : vector<32x32xf32> to vector<1x32x32xf32>
    %42 = vector.shape_cast %38 : vector<32x32xf32> to vector<1x32x32xf32>
    %43 = vector.shape_cast %39 : vector<32x32xf32> to vector<1x32x32xf32>
    %44 = tpu.concatenate %40, %41, %42, %43 in 0 : vector<1x32x32xf32>, vector<1x32x32xf32>, vector<1x32x32xf32>, vector<1x32x32xf32> -> vector<4x32x32xf32>
    %45 = arith.truncf %44 : vector<4x32x32xf32> to vector<4x32x32xbf16>
    %46 = vector.extract_strided_slice %35 {offsets = [0, 128], sizes = [32, 32], strides = [1, 1]} : vector<32x384xf32> to vector<32x32xf32>
    %47 = vector.extract_strided_slice %35 {offsets = [0, 160], sizes = [32, 32], strides = [1, 1]} : vector<32x384xf32> to vector<32x32xf32>
    %48 = vector.extract_strided_slice %35 {offsets = [0, 192], sizes = [32, 32], strides = [1, 1]} : vector<32x384xf32> to vector<32x32xf32>
    %49 = vector.extract_strided_slice %35 {offsets = [0, 224], sizes = [32, 32], strides = [1, 1]} : vector<32x384xf32> to vector<32x32xf32>
    %50 = vector.shape_cast %46 : vector<32x32xf32> to vector<1x32x32xf32>
    %51 = vector.shape_cast %47 : vector<32x32xf32> to vector<1x32x32xf32>
    %52 = vector.shape_cast %48 : vector<32x32xf32> to vector<1x32x32xf32>
    %53 = vector.shape_cast %49 : vector<32x32xf32> to vector<1x32x32xf32>
    %54 = tpu.concatenate %50, %51, %52, %53 in 0 : vector<1x32x32xf32>, vector<1x32x32xf32>, vector<1x32x32xf32>, vector<1x32x32xf32> -> vector<4x32x32xf32>
    %55 = arith.truncf %54 : vector<4x32x32xf32> to vector<4x32x32xbf16>
    %56 = vector.extract_strided_slice %35 {offsets = [0, 256], sizes = [32, 32], strides = [1, 1]} : vector<32x384xf32> to vector<32x32xf32>
    %57 = vector.extract_strided_slice %35 {offsets = [0, 288], sizes = [32, 32], strides = [1, 1]} : vector<32x384xf32> to vector<32x32xf32>
    %58 = vector.extract_strided_slice %35 {offsets = [0, 320], sizes = [32, 32], strides = [1, 1]} : vector<32x384xf32> to vector<32x32xf32>
    %59 = vector.extract_strided_slice %35 {offsets = [0, 352], sizes = [32, 32], strides = [1, 1]} : vector<32x384xf32> to vector<32x32xf32>
    %60 = vector.shape_cast %56 : vector<32x32xf32> to vector<1x32x32xf32>
    %61 = vector.shape_cast %57 : vector<32x32xf32> to vector<1x32x32xf32>
    %62 = vector.shape_cast %58 : vector<32x32xf32> to vector<1x32x32xf32>
    %63 = vector.shape_cast %59 : vector<32x32xf32> to vector<1x32x32xf32>
    %64 = tpu.concatenate %60, %61, %62, %63 in 0 : vector<1x32x32xf32>, vector<1x32x32xf32>, vector<1x32x32xf32>, vector<1x32x32xf32> -> vector<4x32x32xf32>
    %65 = arith.truncf %64 : vector<4x32x32xf32> to vector<4x32x32xbf16>
    "tpu.trace_start"() <{level = 10 : i32, message = "hqd,hkd->hqk"}> : () -> ()
    %cst_19 = arith.constant dense<0.000000e+00> : vector<4x32x32xf32>
    %66 = tpu.matmul %45, %55, %cst_19 {dimension_numbers = #tpu.dot_dimension_numbers<[2], [2], [1], [1], [0, 0, 0, 1, 1, 1], [0], [0]>} : vector<4x32x32xbf16>, vector<4x32x32xbf16>, vector<4x32x32xf32> -> vector<4x32x32xf32>
    "tpu.trace_stop"() : () -> ()
    %67 = vector.shape_cast %0 : vector<32x32xf32> to vector<1x32x32xf32>
    %68 = vector.broadcast %67 : vector<1x32x32xf32> to vector<4x32x32xf32>
    %69 = arith.addf %66, %68 : vector<4x32x32xf32>
    %cst_20 = arith.constant dense<0xFF800000> : vector<4x32xf32>
    %70 = vector.multi_reduction <maximumf>, %69, %cst_20 [2] : vector<4x32x32xf32> to vector<4x32xf32>
    %71 = vector.shape_cast %70 : vector<4x32xf32> to vector<4x32x1xf32>
    %72 = vector.broadcast %71 : vector<4x32x1xf32> to vector<4x32x32xf32>
    %73 = arith.subf %69, %72 : vector<4x32x32xf32>
    %74 = math.exp %73 : vector<4x32x32xf32>
    %cst_21 = arith.constant dense<0.000000e+00> : vector<4x32xf32>
    %75 = vector.multi_reduction <add>, %74, %cst_21 [2] : vector<4x32x32xf32> to vector<4x32xf32>
    %76 = vector.shape_cast %75 : vector<4x32xf32> to vector<4x32x1xf32>
    %77 = tpu.reciprocal %76 {approx = true} : vector<4x32x1xf32> -> vector<4x32x1xf32>
    %78 = vector.broadcast %77 : vector<4x32x1xf32> to vector<4x32x32xf32>
    %79 = arith.mulf %74, %78 : vector<4x32x32xf32>
    %80 = arith.truncf %79 : vector<4x32x32xf32> to vector<4x32x32xbf16>
    "tpu.trace_start"() <{level = 10 : i32, message = "hqk,hkd->hqd"}> : () -> ()
    %cst_22 = arith.constant dense<0.000000e+00> : vector<4x32x32xf32>
    %81 = tpu.matmul %80, %65, %cst_22 {dimension_numbers = #tpu.dot_dimension_numbers<[2], [1], [1], [2], [0, 0, 0, 1, 1, 2], [0], [0]>} : vector<4x32x32xbf16>, vector<4x32x32xbf16>, vector<4x32x32xf32> -> vector<4x32x32xf32>
    "tpu.trace_stop"() : () -> ()
    %82 = vector.extract_strided_slice %81 {offsets = [0, 0, 0], sizes = [1, 32, 32], strides = [1, 1, 1]} : vector<4x32x32xf32> to vector<1x32x32xf32>
    %83 = vector.shape_cast %82 : vector<1x32x32xf32> to vector<32x32xf32>
    %84 = vector.extract_strided_slice %81 {offsets = [1, 0, 0], sizes = [1, 32, 32], strides = [1, 1, 1]} : vector<4x32x32xf32> to vector<1x32x32xf32>
    %85 = vector.shape_cast %84 : vector<1x32x32xf32> to vector<32x32xf32>
    %86 = vector.extract_strided_slice %81 {offsets = [2, 0, 0], sizes = [1, 32, 32], strides = [1, 1, 1]} : vector<4x32x32xf32> to vector<1x32x32xf32>
    %87 = vector.shape_cast %86 : vector<1x32x32xf32> to vector<32x32xf32>
    %88 = vector.extract_strided_slice %81 {offsets = [3, 0, 0], sizes = [1, 32, 32], strides = [1, 1, 1]} : vector<4x32x32xf32> to vector<1x32x32xf32>
    %89 = vector.shape_cast %88 : vector<1x32x32xf32> to vector<32x32xf32>
    %90 = tpu.concatenate %83, %85, %87, %89 in 1 : vector<32x32xf32>, vector<32x32xf32>, vector<32x32xf32>, vector<32x32xf32> -> vector<32x128xf32>
    %91 = arith.truncf %90 : vector<32x128xf32> to vector<32x128xbf16>
    %c0_23 = arith.constant 0 : index
    %c0_24 = arith.constant 0 : index
    %c0_25 = arith.constant 0 : index
    %92 = vector.load %arg6[%c0_23, %c0_24, %c0_25] : memref<2x128x128xbf16, #tpu.memory_space<vmem>>, vector<1x128x128xbf16>
    %93 = vector.shape_cast %92 : vector<1x128x128xbf16> to vector<128x128xbf16>
    %cst_26 = arith.constant dense<0.000000e+00> : vector<32x128xf32>
    %94 = tpu.matmul %91, %93, %cst_26 {dimension_numbers = #tpu.dot_dimension_numbers<[1], [0], [0], [1], [0, 0, 1, 1], [], []>} : vector<32x128xbf16>, vector<128x128xbf16>, vector<32x128xf32> -> vector<32x128xf32>
    %c0_27 = arith.constant 0 : index
    %c0_28 = arith.constant 0 : index
    %c0_29 = arith.constant 0 : index
    %95 = vector.load %arg7[%c0_27, %c0_28, %c0_29] : memref<2x1x128xf32, #tpu.memory_space<vmem>>, vector<1x1x128xf32>
    %96 = vector.shape_cast %95 : vector<1x1x128xf32> to vector<1x128xf32>
    %97 = vector.broadcast %96 : vector<1x128xf32> to vector<32x128xf32>
    %98 = arith.addf %94, %97 : vector<32x128xf32>
    %99 = arith.addf %27, %98 : vector<32x128xf32>
    %c0_30 = arith.constant 0 : index
    %c0_31 = arith.constant 0 : index
    %c0_32 = arith.constant 0 : index
    %100 = vector.load %arg8[%c0_30, %c0_31, %c0_32] : memref<2x1x128xf32, #tpu.memory_space<vmem>>, vector<1x1x128xf32>
    %101 = vector.shape_cast %100 : vector<1x1x128xf32> to vector<1x128xf32>
    %c0_33 = arith.constant 0 : index
    %c0_34 = arith.constant 0 : index
    %c0_35 = arith.constant 0 : index
    %102 = vector.load %arg9[%c0_33, %c0_34, %c0_35] : memref<2x1x128xf32, #tpu.memory_space<vmem>>, vector<1x1x128xf32>
    %103 = vector.shape_cast %102 : vector<1x1x128xf32> to vector<1x128xf32>
    %cst_36 = arith.constant dense<0.000000e+00> : vector<32xf32>
    %104 = vector.multi_reduction <add>, %99, %cst_36 [1] : vector<32x128xf32> to vector<32xf32>
    %105 = vector.shape_cast %104 : vector<32xf32> to vector<32x1xf32>
    %cst_37 = arith.constant 1.280000e+02 : f32
    %106 = vector.broadcast %cst_37 : f32 to vector<32x1xf32>
    %107 = arith.divf %105, %106 : vector<32x1xf32>
    %108 = arith.mulf %99, %99 : vector<32x128xf32>
    %cst_38 = arith.constant dense<0.000000e+00> : vector<32xf32>
    %109 = vector.multi_reduction <add>, %108, %cst_38 [1] : vector<32x128xf32> to vector<32xf32>
    %110 = vector.shape_cast %109 : vector<32xf32> to vector<32x1xf32>
    %cst_39 = arith.constant 1.280000e+02 : f32
    %111 = vector.broadcast %cst_39 : f32 to vector<32x1xf32>
    %112 = arith.divf %110, %111 : vector<32x1xf32>
    %113 = arith.mulf %107, %107 : vector<32x1xf32>
    %114 = arith.subf %112, %113 : vector<32x1xf32>
    %cst_40 = arith.constant 0.000000e+00 : f32
    %115 = vector.broadcast %cst_40 : f32 to vector<32x1xf32>
    %116 = arith.maximumf %114, %115 : vector<32x1xf32>
    %117 = vector.broadcast %107 : vector<32x1xf32> to vector<32x128xf32>
    %118 = arith.subf %99, %117 : vector<32x128xf32>
    %cst_41 = arith.constant 9.99999996E-13 : f32
    %119 = vector.broadcast %cst_41 : f32 to vector<32x1xf32>
    %120 = arith.addf %116, %119 : vector<32x1xf32>
    %121 = math.rsqrt %120 : vector<32x1xf32>
    %122 = vector.broadcast %121 : vector<32x1xf32> to vector<32x128xf32>
    %123 = arith.mulf %118, %122 : vector<32x128xf32>
    %124 = vector.broadcast %101 : vector<1x128xf32> to vector<32x128xf32>
    %125 = arith.mulf %123, %124 : vector<32x128xf32>
    %126 = vector.broadcast %103 : vector<1x128xf32> to vector<32x128xf32>
    %127 = arith.addf %125, %126 : vector<32x128xf32>
    %128 = arith.truncf %127 : vector<32x128xf32> to vector<32x128xbf16>
    %c0_42 = arith.constant 0 : index
    %c0_43 = arith.constant 0 : index
    %c0_44 = arith.constant 0 : index
    %129 = vector.load %arg10[%c0_42, %c0_43, %c0_44] : memref<2x128x256xbf16, #tpu.memory_space<vmem>>, vector<1x128x256xbf16>
    %130 = vector.shape_cast %129 : vector<1x128x256xbf16> to vector<128x256xbf16>
    %cst_45 = arith.constant dense<0.000000e+00> : vector<32x256xf32>
    %131 = tpu.matmul %128, %130, %cst_45 {dimension_numbers = #tpu.dot_dimension_numbers<[1], [0], [0], [1], [0, 0, 1, 1], [], []>} : vector<32x128xbf16>, vector<128x256xbf16>, vector<32x256xf32> -> vector<32x256xf32>
    %c0_46 = arith.constant 0 : index
    %c0_47 = arith.constant 0 : index
    %c0_48 = arith.constant 0 : index
    %132 = vector.load %arg11[%c0_46, %c0_47, %c0_48] : memref<2x1x256xf32, #tpu.memory_space<vmem>>, vector<1x1x256xf32>
    %133 = vector.shape_cast %132 : vector<1x1x256xf32> to vector<1x256xf32>
    %134 = vector.broadcast %133 : vector<1x256xf32> to vector<32x256xf32>
    %135 = arith.addf %131, %134 : vector<32x256xf32>
    %cst_49 = arith.constant 5.000000e-01 : f32
    %136 = vector.broadcast %cst_49 : f32 to vector<32x256xf32>
    %137 = arith.mulf %136, %135 : vector<32x256xf32>
    %cst_50 = arith.constant 4.471500e-02 : f32
    %138 = vector.broadcast %cst_50 : f32 to vector<32x256xf32>
    %139 = arith.mulf %138, %135 : vector<32x256xf32>
    %140 = arith.mulf %139, %135 : vector<32x256xf32>
    %141 = arith.mulf %140, %135 : vector<32x256xf32>
    %142 = arith.addf %135, %141 : vector<32x256xf32>
    %cst_51 = arith.constant 0.797884583 : f32
    %143 = vector.broadcast %cst_51 : f32 to vector<32x256xf32>
    %144 = arith.mulf %143, %142 : vector<32x256xf32>
    %145 = math.tanh %144 : vector<32x256xf32>
    %cst_52 = arith.constant 1.000000e+00 : f32
    %146 = vector.broadcast %cst_52 : f32 to vector<32x256xf32>
    %147 = arith.addf %146, %145 : vector<32x256xf32>
    %148 = arith.mulf %137, %147 : vector<32x256xf32>
    %149 = arith.truncf %148 : vector<32x256xf32> to vector<32x256xbf16>
    %c0_53 = arith.constant 0 : index
    %c0_54 = arith.constant 0 : index
    %c0_55 = arith.constant 0 : index
    %150 = vector.load %arg12[%c0_53, %c0_54, %c0_55] : memref<2x256x128xbf16, #tpu.memory_space<vmem>>, vector<1x256x128xbf16>
    %151 = vector.shape_cast %150 : vector<1x256x128xbf16> to vector<256x128xbf16>
    %cst_56 = arith.constant dense<0.000000e+00> : vector<32x128xf32>
    %152 = tpu.matmul %149, %151, %cst_56 {dimension_numbers = #tpu.dot_dimension_numbers<[1], [0], [0], [1], [0, 0, 1, 1], [], []>} : vector<32x256xbf16>, vector<256x128xbf16>, vector<32x128xf32> -> vector<32x128xf32>
    %c0_57 = arith.constant 0 : index
    %c0_58 = arith.constant 0 : index
    %c0_59 = arith.constant 0 : index
    %153 = vector.load %arg13[%c0_57, %c0_58, %c0_59] : memref<2x1x128xf32, #tpu.memory_space<vmem>>, vector<1x1x128xf32>
    %154 = vector.shape_cast %153 : vector<1x1x128xf32> to vector<1x128xf32>
    %155 = vector.broadcast %154 : vector<1x128xf32> to vector<32x128xf32>
    %156 = arith.addf %152, %155 : vector<32x128xf32>
    %157 = arith.addf %127, %156 : vector<32x128xf32>
    %c0_60 = arith.constant 0 : index
    %c0_61 = arith.constant 0 : index
    %c0_62 = arith.constant 0 : index
    %158 = vector.load %arg14[%c0_60, %c0_61, %c0_62] : memref<2x1x128xf32, #tpu.memory_space<vmem>>, vector<1x1x128xf32>
    %159 = vector.shape_cast %158 : vector<1x1x128xf32> to vector<1x128xf32>
    %c0_63 = arith.constant 0 : index
    %c0_64 = arith.constant 0 : index
    %c0_65 = arith.constant 0 : index
    %160 = vector.load %arg15[%c0_63, %c0_64, %c0_65] : memref<2x1x128xf32, #tpu.memory_space<vmem>>, vector<1x1x128xf32>
    %161 = vector.shape_cast %160 : vector<1x1x128xf32> to vector<1x128xf32>
    %cst_66 = arith.constant dense<0.000000e+00> : vector<32xf32>
    %162 = vector.multi_reduction <add>, %157, %cst_66 [1] : vector<32x128xf32> to vector<32xf32>
    %163 = vector.shape_cast %162 : vector<32xf32> to vector<32x1xf32>
    %cst_67 = arith.constant 1.280000e+02 : f32
    %164 = vector.broadcast %cst_67 : f32 to vector<32x1xf32>
    %165 = arith.divf %163, %164 : vector<32x1xf32>
    %166 = arith.mulf %157, %157 : vector<32x128xf32>
    %cst_68 = arith.constant dense<0.000000e+00> : vector<32xf32>
    %167 = vector.multi_reduction <add>, %166, %cst_68 [1] : vector<32x128xf32> to vector<32xf32>
    %168 = vector.shape_cast %167 : vector<32xf32> to vector<32x1xf32>
    %cst_69 = arith.constant 1.280000e+02 : f32
    %169 = vector.broadcast %cst_69 : f32 to vector<32x1xf32>
    %170 = arith.divf %168, %169 : vector<32x1xf32>
    %171 = arith.mulf %165, %165 : vector<32x1xf32>
    %172 = arith.subf %170, %171 : vector<32x1xf32>
    %cst_70 = arith.constant 0.000000e+00 : f32
    %173 = vector.broadcast %cst_70 : f32 to vector<32x1xf32>
    %174 = arith.maximumf %172, %173 : vector<32x1xf32>
    %175 = vector.broadcast %165 : vector<32x1xf32> to vector<32x128xf32>
    %176 = arith.subf %157, %175 : vector<32x128xf32>
    %cst_71 = arith.constant 9.99999996E-13 : f32
    %177 = vector.broadcast %cst_71 : f32 to vector<32x1xf32>
    %178 = arith.addf %174, %177 : vector<32x1xf32>
    %179 = math.rsqrt %178 : vector<32x1xf32>
    %180 = vector.broadcast %179 : vector<32x1xf32> to vector<32x128xf32>
    %181 = arith.mulf %176, %180 : vector<32x128xf32>
    %182 = vector.broadcast %159 : vector<1x128xf32> to vector<32x128xf32>
    %183 = arith.mulf %181, %182 : vector<32x128xf32>
    %184 = vector.broadcast %161 : vector<1x128xf32> to vector<32x128xf32>
    %185 = arith.addf %183, %184 : vector<32x128xf32>
    %186 = arith.truncf %185 : vector<32x128xf32> to vector<32x128xbf16>
    %c1 = arith.constant 1 : index
    %c0_72 = arith.constant 0 : index
    %c0_73 = arith.constant 0 : index
    %187 = vector.load %arg4[%c1, %c0_72, %c0_73] : memref<2x128x384xbf16, #tpu.memory_space<vmem>>, vector<1x128x384xbf16>
    %188 = vector.shape_cast %187 : vector<1x128x384xbf16> to vector<128x384xbf16>
    %cst_74 = arith.constant dense<0.000000e+00> : vector<32x384xf32>
    %189 = tpu.matmul %186, %188, %cst_74 {dimension_numbers = #tpu.dot_dimension_numbers<[1], [0], [0], [1], [0, 0, 1, 1], [], []>} : vector<32x128xbf16>, vector<128x384xbf16>, vector<32x384xf32> -> vector<32x384xf32>
    %c1_75 = arith.constant 1 : index
    %c0_76 = arith.constant 0 : index
    %c0_77 = arith.constant 0 : index
    %190 = vector.load %arg5[%c1_75, %c0_76, %c0_77] : memref<2x1x384xf32, #tpu.memory_space<vmem>>, vector<1x1x384xf32>
    %191 = vector.shape_cast %190 : vector<1x1x384xf32> to vector<1x384xf32>
    %192 = vector.broadcast %191 : vector<1x384xf32> to vector<32x384xf32>
    %193 = arith.addf %189, %192 : vector<32x384xf32>
    %194 = vector.extract_strided_slice %193 {offsets = [0, 0], sizes = [32, 32], strides = [1, 1]} : vector<32x384xf32> to vector<32x32xf32>
    %195 = vector.extract_strided_slice %193 {offsets = [0, 32], sizes = [32, 32], strides = [1, 1]} : vector<32x384xf32> to vector<32x32xf32>
    %196 = vector.extract_strided_slice %193 {offsets = [0, 64], sizes = [32, 32], strides = [1, 1]} : vector<32x384xf32> to vector<32x32xf32>
    %197 = vector.extract_strided_slice %193 {offsets = [0, 96], sizes = [32, 32], strides = [1, 1]} : vector<32x384xf32> to vector<32x32xf32>
    %198 = vector.shape_cast %194 : vector<32x32xf32> to vector<1x32x32xf32>
    %199 = vector.shape_cast %195 : vector<32x32xf32> to vector<1x32x32xf32>
    %200 = vector.shape_cast %196 : vector<32x32xf32> to vector<1x32x32xf32>
    %201 = vector.shape_cast %197 : vector<32x32xf32> to vector<1x32x32xf32>
    %202 = tpu.concatenate %198, %199, %200, %201 in 0 : vector<1x32x32xf32>, vector<1x32x32xf32>, vector<1x32x32xf32>, vector<1x32x32xf32> -> vector<4x32x32xf32>
    %203 = arith.truncf %202 : vector<4x32x32xf32> to vector<4x32x32xbf16>
    %204 = vector.extract_strided_slice %193 {offsets = [0, 128], sizes = [32, 32], strides = [1, 1]} : vector<32x384xf32> to vector<32x32xf32>
    %205 = vector.extract_strided_slice %193 {offsets = [0, 160], sizes = [32, 32], strides = [1, 1]} : vector<32x384xf32> to vector<32x32xf32>
    %206 = vector.extract_strided_slice %193 {offsets = [0, 192], sizes = [32, 32], strides = [1, 1]} : vector<32x384xf32> to vector<32x32xf32>
    %207 = vector.extract_strided_slice %193 {offsets = [0, 224], sizes = [32, 32], strides = [1, 1]} : vector<32x384xf32> to vector<32x32xf32>
    %208 = vector.shape_cast %204 : vector<32x32xf32> to vector<1x32x32xf32>
    %209 = vector.shape_cast %205 : vector<32x32xf32> to vector<1x32x32xf32>
    %210 = vector.shape_cast %206 : vector<32x32xf32> to vector<1x32x32xf32>
    %211 = vector.shape_cast %207 : vector<32x32xf32> to vector<1x32x32xf32>
    %212 = tpu.concatenate %208, %209, %210, %211 in 0 : vector<1x32x32xf32>, vector<1x32x32xf32>, vector<1x32x32xf32>, vector<1x32x32xf32> -> vector<4x32x32xf32>
    %213 = arith.truncf %212 : vector<4x32x32xf32> to vector<4x32x32xbf16>
    %214 = vector.extract_strided_slice %193 {offsets = [0, 256], sizes = [32, 32], strides = [1, 1]} : vector<32x384xf32> to vector<32x32xf32>
    %215 = vector.extract_strided_slice %193 {offsets = [0, 288], sizes = [32, 32], strides = [1, 1]} : vector<32x384xf32> to vector<32x32xf32>
    %216 = vector.extract_strided_slice %193 {offsets = [0, 320], sizes = [32, 32], strides = [1, 1]} : vector<32x384xf32> to vector<32x32xf32>
    %217 = vector.extract_strided_slice %193 {offsets = [0, 352], sizes = [32, 32], strides = [1, 1]} : vector<32x384xf32> to vector<32x32xf32>
    %218 = vector.shape_cast %214 : vector<32x32xf32> to vector<1x32x32xf32>
    %219 = vector.shape_cast %215 : vector<32x32xf32> to vector<1x32x32xf32>
    %220 = vector.shape_cast %216 : vector<32x32xf32> to vector<1x32x32xf32>
    %221 = vector.shape_cast %217 : vector<32x32xf32> to vector<1x32x32xf32>
    %222 = tpu.concatenate %218, %219, %220, %221 in 0 : vector<1x32x32xf32>, vector<1x32x32xf32>, vector<1x32x32xf32>, vector<1x32x32xf32> -> vector<4x32x32xf32>
    %223 = arith.truncf %222 : vector<4x32x32xf32> to vector<4x32x32xbf16>
    "tpu.trace_start"() <{level = 10 : i32, message = "hqd,hkd->hqk"}> : () -> ()
    %cst_78 = arith.constant dense<0.000000e+00> : vector<4x32x32xf32>
    %224 = tpu.matmul %203, %213, %cst_78 {dimension_numbers = #tpu.dot_dimension_numbers<[2], [2], [1], [1], [0, 0, 0, 1, 1, 1], [0], [0]>} : vector<4x32x32xbf16>, vector<4x32x32xbf16>, vector<4x32x32xf32> -> vector<4x32x32xf32>
    "tpu.trace_stop"() : () -> ()
    %225 = vector.shape_cast %0 : vector<32x32xf32> to vector<1x32x32xf32>
    %226 = vector.broadcast %225 : vector<1x32x32xf32> to vector<4x32x32xf32>
    %227 = arith.addf %224, %226 : vector<4x32x32xf32>
    %cst_79 = arith.constant dense<0xFF800000> : vector<4x32xf32>
    %228 = vector.multi_reduction <maximumf>, %227, %cst_79 [2] : vector<4x32x32xf32> to vector<4x32xf32>
    %229 = vector.shape_cast %228 : vector<4x32xf32> to vector<4x32x1xf32>
    %230 = vector.broadcast %229 : vector<4x32x1xf32> to vector<4x32x32xf32>
    %231 = arith.subf %227, %230 : vector<4x32x32xf32>
    %232 = math.exp %231 : vector<4x32x32xf32>
    %cst_80 = arith.constant dense<0.000000e+00> : vector<4x32xf32>
    %233 = vector.multi_reduction <add>, %232, %cst_80 [2] : vector<4x32x32xf32> to vector<4x32xf32>
    %234 = vector.shape_cast %233 : vector<4x32xf32> to vector<4x32x1xf32>
    %235 = tpu.reciprocal %234 {approx = true} : vector<4x32x1xf32> -> vector<4x32x1xf32>
    %236 = vector.broadcast %235 : vector<4x32x1xf32> to vector<4x32x32xf32>
    %237 = arith.mulf %232, %236 : vector<4x32x32xf32>
    %238 = arith.truncf %237 : vector<4x32x32xf32> to vector<4x32x32xbf16>
    "tpu.trace_start"() <{level = 10 : i32, message = "hqk,hkd->hqd"}> : () -> ()
    %cst_81 = arith.constant dense<0.000000e+00> : vector<4x32x32xf32>
    %239 = tpu.matmul %238, %223, %cst_81 {dimension_numbers = #tpu.dot_dimension_numbers<[2], [1], [1], [2], [0, 0, 0, 1, 1, 2], [0], [0]>} : vector<4x32x32xbf16>, vector<4x32x32xbf16>, vector<4x32x32xf32> -> vector<4x32x32xf32>
    "tpu.trace_stop"() : () -> ()
    %240 = vector.extract_strided_slice %239 {offsets = [0, 0, 0], sizes = [1, 32, 32], strides = [1, 1, 1]} : vector<4x32x32xf32> to vector<1x32x32xf32>
    %241 = vector.shape_cast %240 : vector<1x32x32xf32> to vector<32x32xf32>
    %242 = vector.extract_strided_slice %239 {offsets = [1, 0, 0], sizes = [1, 32, 32], strides = [1, 1, 1]} : vector<4x32x32xf32> to vector<1x32x32xf32>
    %243 = vector.shape_cast %242 : vector<1x32x32xf32> to vector<32x32xf32>
    %244 = vector.extract_strided_slice %239 {offsets = [2, 0, 0], sizes = [1, 32, 32], strides = [1, 1, 1]} : vector<4x32x32xf32> to vector<1x32x32xf32>
    %245 = vector.shape_cast %244 : vector<1x32x32xf32> to vector<32x32xf32>
    %246 = vector.extract_strided_slice %239 {offsets = [3, 0, 0], sizes = [1, 32, 32], strides = [1, 1, 1]} : vector<4x32x32xf32> to vector<1x32x32xf32>
    %247 = vector.shape_cast %246 : vector<1x32x32xf32> to vector<32x32xf32>
    %248 = tpu.concatenate %241, %243, %245, %247 in 1 : vector<32x32xf32>, vector<32x32xf32>, vector<32x32xf32>, vector<32x32xf32> -> vector<32x128xf32>
    %249 = arith.truncf %248 : vector<32x128xf32> to vector<32x128xbf16>
    %c1_82 = arith.constant 1 : index
    %c0_83 = arith.constant 0 : index
    %c0_84 = arith.constant 0 : index
    %250 = vector.load %arg6[%c1_82, %c0_83, %c0_84] : memref<2x128x128xbf16, #tpu.memory_space<vmem>>, vector<1x128x128xbf16>
    %251 = vector.shape_cast %250 : vector<1x128x128xbf16> to vector<128x128xbf16>
    %cst_85 = arith.constant dense<0.000000e+00> : vector<32x128xf32>
    %252 = tpu.matmul %249, %251, %cst_85 {dimension_numbers = #tpu.dot_dimension_numbers<[1], [0], [0], [1], [0, 0, 1, 1], [], []>} : vector<32x128xbf16>, vector<128x128xbf16>, vector<32x128xf32> -> vector<32x128xf32>
    %c1_86 = arith.constant 1 : index
    %c0_87 = arith.constant 0 : index
    %c0_88 = arith.constant 0 : index
    %253 = vector.load %arg7[%c1_86, %c0_87, %c0_88] : memref<2x1x128xf32, #tpu.memory_space<vmem>>, vector<1x1x128xf32>
    %254 = vector.shape_cast %253 : vector<1x1x128xf32> to vector<1x128xf32>
    %255 = vector.broadcast %254 : vector<1x128xf32> to vector<32x128xf32>
    %256 = arith.addf %252, %255 : vector<32x128xf32>
    %257 = arith.addf %185, %256 : vector<32x128xf32>
    %c1_89 = arith.constant 1 : index
    %c0_90 = arith.constant 0 : index
    %c0_91 = arith.constant 0 : index
    %258 = vector.load %arg8[%c1_89, %c0_90, %c0_91] : memref<2x1x128xf32, #tpu.memory_space<vmem>>, vector<1x1x128xf32>
    %259 = vector.shape_cast %258 : vector<1x1x128xf32> to vector<1x128xf32>
    %c1_92 = arith.constant 1 : index
    %c0_93 = arith.constant 0 : index
    %c0_94 = arith.constant 0 : index
    %260 = vector.load %arg9[%c1_92, %c0_93, %c0_94] : memref<2x1x128xf32, #tpu.memory_space<vmem>>, vector<1x1x128xf32>
    %261 = vector.shape_cast %260 : vector<1x1x128xf32> to vector<1x128xf32>
    %cst_95 = arith.constant dense<0.000000e+00> : vector<32xf32>
    %262 = vector.multi_reduction <add>, %257, %cst_95 [1] : vector<32x128xf32> to vector<32xf32>
    %263 = vector.shape_cast %262 : vector<32xf32> to vector<32x1xf32>
    %cst_96 = arith.constant 1.280000e+02 : f32
    %264 = vector.broadcast %cst_96 : f32 to vector<32x1xf32>
    %265 = arith.divf %263, %264 : vector<32x1xf32>
    %266 = arith.mulf %257, %257 : vector<32x128xf32>
    %cst_97 = arith.constant dense<0.000000e+00> : vector<32xf32>
    %267 = vector.multi_reduction <add>, %266, %cst_97 [1] : vector<32x128xf32> to vector<32xf32>
    %268 = vector.shape_cast %267 : vector<32xf32> to vector<32x1xf32>
    %cst_98 = arith.constant 1.280000e+02 : f32
    %269 = vector.broadcast %cst_98 : f32 to vector<32x1xf32>
    %270 = arith.divf %268, %269 : vector<32x1xf32>
    %271 = arith.mulf %265, %265 : vector<32x1xf32>
    %272 = arith.subf %270, %271 : vector<32x1xf32>
    %cst_99 = arith.constant 0.000000e+00 : f32
    %273 = vector.broadcast %cst_99 : f32 to vector<32x1xf32>
    %274 = arith.maximumf %272, %273 : vector<32x1xf32>
    %275 = vector.broadcast %265 : vector<32x1xf32> to vector<32x128xf32>
    %276 = arith.subf %257, %275 : vector<32x128xf32>
    %cst_100 = arith.constant 9.99999996E-13 : f32
    %277 = vector.broadcast %cst_100 : f32 to vector<32x1xf32>
    %278 = arith.addf %274, %277 : vector<32x1xf32>
    %279 = math.rsqrt %278 : vector<32x1xf32>
    %280 = vector.broadcast %279 : vector<32x1xf32> to vector<32x128xf32>
    %281 = arith.mulf %276, %280 : vector<32x128xf32>
    %282 = vector.broadcast %259 : vector<1x128xf32> to vector<32x128xf32>
    %283 = arith.mulf %281, %282 : vector<32x128xf32>
    %284 = vector.broadcast %261 : vector<1x128xf32> to vector<32x128xf32>
    %285 = arith.addf %283, %284 : vector<32x128xf32>
    %286 = arith.truncf %285 : vector<32x128xf32> to vector<32x128xbf16>
    %c1_101 = arith.constant 1 : index
    %c0_102 = arith.constant 0 : index
    %c0_103 = arith.constant 0 : index
    %287 = vector.load %arg10[%c1_101, %c0_102, %c0_103] : memref<2x128x256xbf16, #tpu.memory_space<vmem>>, vector<1x128x256xbf16>
    %288 = vector.shape_cast %287 : vector<1x128x256xbf16> to vector<128x256xbf16>
    %cst_104 = arith.constant dense<0.000000e+00> : vector<32x256xf32>
    %289 = tpu.matmul %286, %288, %cst_104 {dimension_numbers = #tpu.dot_dimension_numbers<[1], [0], [0], [1], [0, 0, 1, 1], [], []>} : vector<32x128xbf16>, vector<128x256xbf16>, vector<32x256xf32> -> vector<32x256xf32>
    %c1_105 = arith.constant 1 : index
    %c0_106 = arith.constant 0 : index
    %c0_107 = arith.constant 0 : index
    %290 = vector.load %arg11[%c1_105, %c0_106, %c0_107] : memref<2x1x256xf32, #tpu.memory_space<vmem>>, vector<1x1x256xf32>
    %291 = vector.shape_cast %290 : vector<1x1x256xf32> to vector<1x256xf32>
    %292 = vector.broadcast %291 : vector<1x256xf32> to vector<32x256xf32>
    %293 = arith.addf %289, %292 : vector<32x256xf32>
    %cst_108 = arith.constant 5.000000e-01 : f32
    %294 = vector.broadcast %cst_108 : f32 to vector<32x256xf32>
    %295 = arith.mulf %294, %293 : vector<32x256xf32>
    %cst_109 = arith.constant 4.471500e-02 : f32
    %296 = vector.broadcast %cst_109 : f32 to vector<32x256xf32>
    %297 = arith.mulf %296, %293 : vector<32x256xf32>
    %298 = arith.mulf %297, %293 : vector<32x256xf32>
    %299 = arith.mulf %298, %293 : vector<32x256xf32>
    %300 = arith.addf %293, %299 : vector<32x256xf32>
    %cst_110 = arith.constant 0.797884583 : f32
    %301 = vector.broadcast %cst_110 : f32 to vector<32x256xf32>
    %302 = arith.mulf %301, %300 : vector<32x256xf32>
    %303 = math.tanh %302 : vector<32x256xf32>
    %cst_111 = arith.constant 1.000000e+00 : f32
    %304 = vector.broadcast %cst_111 : f32 to vector<32x256xf32>
    %305 = arith.addf %304, %303 : vector<32x256xf32>
    %306 = arith.mulf %295, %305 : vector<32x256xf32>
    %307 = arith.truncf %306 : vector<32x256xf32> to vector<32x256xbf16>
    %c1_112 = arith.constant 1 : index
    %c0_113 = arith.constant 0 : index
    %c0_114 = arith.constant 0 : index
    %308 = vector.load %arg12[%c1_112, %c0_113, %c0_114] : memref<2x256x128xbf16, #tpu.memory_space<vmem>>, vector<1x256x128xbf16>
    %309 = vector.shape_cast %308 : vector<1x256x128xbf16> to vector<256x128xbf16>
    %cst_115 = arith.constant dense<0.000000e+00> : vector<32x128xf32>
    %310 = tpu.matmul %307, %309, %cst_115 {dimension_numbers = #tpu.dot_dimension_numbers<[1], [0], [0], [1], [0, 0, 1, 1], [], []>} : vector<32x256xbf16>, vector<256x128xbf16>, vector<32x128xf32> -> vector<32x128xf32>
    %c1_116 = arith.constant 1 : index
    %c0_117 = arith.constant 0 : index
    %c0_118 = arith.constant 0 : index
    %311 = vector.load %arg13[%c1_116, %c0_117, %c0_118] : memref<2x1x128xf32, #tpu.memory_space<vmem>>, vector<1x1x128xf32>
    %312 = vector.shape_cast %311 : vector<1x1x128xf32> to vector<1x128xf32>
    %313 = vector.broadcast %312 : vector<1x128xf32> to vector<32x128xf32>
    %314 = arith.addf %310, %313 : vector<32x128xf32>
    %315 = arith.addf %285, %314 : vector<32x128xf32>
    %c1_119 = arith.constant 1 : index
    %c0_120 = arith.constant 0 : index
    %c0_121 = arith.constant 0 : index
    %316 = vector.load %arg14[%c1_119, %c0_120, %c0_121] : memref<2x1x128xf32, #tpu.memory_space<vmem>>, vector<1x1x128xf32>
    %317 = vector.shape_cast %316 : vector<1x1x128xf32> to vector<1x128xf32>
    %c1_122 = arith.constant 1 : index
    %c0_123 = arith.constant 0 : index
    %c0_124 = arith.constant 0 : index
    %318 = vector.load %arg15[%c1_122, %c0_123, %c0_124] : memref<2x1x128xf32, #tpu.memory_space<vmem>>, vector<1x1x128xf32>
    %319 = vector.shape_cast %318 : vector<1x1x128xf32> to vector<1x128xf32>
    %cst_125 = arith.constant dense<0.000000e+00> : vector<32xf32>
    %320 = vector.multi_reduction <add>, %315, %cst_125 [1] : vector<32x128xf32> to vector<32xf32>
    %321 = vector.shape_cast %320 : vector<32xf32> to vector<32x1xf32>
    %cst_126 = arith.constant 1.280000e+02 : f32
    %322 = vector.broadcast %cst_126 : f32 to vector<32x1xf32>
    %323 = arith.divf %321, %322 : vector<32x1xf32>
    %324 = arith.mulf %315, %315 : vector<32x128xf32>
    %cst_127 = arith.constant dense<0.000000e+00> : vector<32xf32>
    %325 = vector.multi_reduction <add>, %324, %cst_127 [1] : vector<32x128xf32> to vector<32xf32>
    %326 = vector.shape_cast %325 : vector<32xf32> to vector<32x1xf32>
    %cst_128 = arith.constant 1.280000e+02 : f32
    %327 = vector.broadcast %cst_128 : f32 to vector<32x1xf32>
    %328 = arith.divf %326, %327 : vector<32x1xf32>
    %329 = arith.mulf %323, %323 : vector<32x1xf32>
    %330 = arith.subf %328, %329 : vector<32x1xf32>
    %cst_129 = arith.constant 0.000000e+00 : f32
    %331 = vector.broadcast %cst_129 : f32 to vector<32x1xf32>
    %332 = arith.maximumf %330, %331 : vector<32x1xf32>
    %333 = vector.broadcast %323 : vector<32x1xf32> to vector<32x128xf32>
    %334 = arith.subf %315, %333 : vector<32x128xf32>
    %cst_130 = arith.constant 9.99999996E-13 : f32
    %335 = vector.broadcast %cst_130 : f32 to vector<32x1xf32>
    %336 = arith.addf %332, %335 : vector<32x1xf32>
    %337 = math.rsqrt %336 : vector<32x1xf32>
    %338 = vector.broadcast %337 : vector<32x1xf32> to vector<32x128xf32>
    %339 = arith.mulf %334, %338 : vector<32x128xf32>
    %340 = vector.broadcast %317 : vector<1x128xf32> to vector<32x128xf32>
    %341 = arith.mulf %339, %340 : vector<32x128xf32>
    %342 = vector.broadcast %319 : vector<1x128xf32> to vector<32x128xf32>
    %343 = arith.addf %341, %342 : vector<32x128xf32>
    %c0_131 = arith.constant 0 : index
    %c0_132 = arith.constant 0 : index
    %344 = vector.load %arg16[%c0_131, %c0_132] : memref<32x128xf32, #tpu.memory_space<vmem>>, vector<32x128xf32>
    tpu.vector_store %arg16[%c0_131, %c0_132], %343 {strides = array<i32>} : memref<32x128xf32, #tpu.memory_space<vmem>>, vector<32x128xf32>,
    return
  }
}

</mosaic_0001>

<llo_original>
// kernel: tpu_custom_call.1
$region0: #{tpu_custom_call.1}
  #allocation0 [shape = 'u32[]', space=smem, size = 0x4, offset = 0x4, fixed_abs, tag = 'smem constant byte address 0x4 - core index']
  #allocation1 [shape = 'u32[72,128]{1,0:T(1,128)}', space=vmem, size = 0x9000, scoped, tag = 'internal scratch']
  %s0 = inlined_call_operand.hbm [shape: f32[32,128], index: 0, kind: input, shape index: {}]
  %s1 = inlined_call_operand.hbm [shape: f32[32,32], index: 1, kind: input, shape index: {}]
  %s2 = inlined_call_operand.hbm [shape: f32[1,128], index: 2, kind: input, shape index: {}]
  %s3 = inlined_call_operand.hbm [shape: f32[1,128], index: 3, kind: input, shape index: {}]
  %s4 = inlined_call_operand.hbm [shape: bf16[2,128,384], index: 4, kind: input, shape index: {}]
  %s5 = inlined_call_operand.hbm [shape: f32[2,1,384], index: 5, kind: input, shape index: {}]
  %s6 = inlined_call_operand.hbm [shape: bf16[2,128,128], index: 6, kind: input, shape index: {}]
  %s7 = inlined_call_operand.vmem [shape: f32[2,1,128], index: 7, kind: input, shape index: {}]
  %s8 = inlined_call_operand.hbm [shape: f32[2,1,128], index: 8, kind: input, shape index: {}]
  %s9 = inlined_call_operand.vmem [shape: f32[2,1,128], index: 9, kind: input, shape index: {}]
  %s10 = inlined_call_operand.hbm [shape: bf16[2,128,256], index: 10, kind: input, shape index: {}]
  %s11 = inlined_call_operand.vmem [shape: f32[2,1,256], index: 11, kind: input, shape index: {}]
  %s12 = inlined_call_operand.hbm [shape: bf16[2,256,128], index: 12, kind: input, shape index: {}]
  %s13 = inlined_call_operand.vmem [shape: f32[2,1,128], index: 13, kind: input, shape index: {}]
  %s14 = inlined_call_operand.vmem [shape: f32[2,1,128], index: 14, kind: input, shape index: {}]
  %s15 = inlined_call_operand.vmem [shape: f32[2,1,128], index: 15, kind: input, shape index: {}]
  %s16 = inlined_call_operand.hbm [shape: f32[32,128], index: 16, kind: output, shape index: {}]
  %s17 = sld [smem:[#allocation0]]
  $region114: #{tpu_custom_call.1} parent=0
    _
  %s19 = ssub.s32 1, %s17
  %s20 = scalar_select 0, %s19, %s17
  $region1: #{tpu_custom_call.1} parent=0
    #allocation2 [shape = 'u8[16384]{0}', space=vmem, size = 0x4000, scoped, tag = 'input window, operand 0, single buffered']
    #allocation3 [shape = 's32[1]{0}', space=sflag, size = 0x4, scoped, tag = 'scoped memory for tpu_custom_call.1']
    #allocation4 [shape = 's32[1]{0}', space=sflag, size = 0x4, scoped, tag = 'scoped memory for tpu_custom_call.1']
    #allocation5 [shape = 'u8[16384]{0}', space=vmem, size = 0x4000, scoped, tag = 'input window, operand 1, single buffered']
    #allocation6 [shape = 's32[1]{0}', space=sflag, size = 0x4, scoped, tag = 'scoped memory for tpu_custom_call.1']
    #allocation7 [shape = 'u8[512]{0}', space=vmem, size = 0x400, scoped, tag = 'input window, operand 2, single buffered']
    #allocation8 [shape = 'u8[512]{0}', space=vmem, size = 0x400, scoped, tag = 'input window, operand 3, single buffered']
    #allocation9 [shape = 's32[1]{0}', space=sflag, size = 0x4, scoped, tag = 'scoped memory for tpu_custom_call.1']
    #allocation10 [shape = 'u8[196608]{0}', space=vmem, size = 0x30000, scoped, tag = 'input window, operand 4, single buffered']
    #allocation11 [shape = 'u8[3072]{0}', space=vmem, size = 0xc00, scoped, tag = 'input window, operand 5, single buffered']
    #allocation12 [shape = 's32[1]{0}', space=sflag, size = 0x4, scoped, tag = 'scoped memory for tpu_custom_call.1']
    #allocation13 [shape = 'u8[65536]{0}', space=vmem, size = 0x10000, scoped, tag = 'input window, operand 6, single buffered']
    #allocation14 [shape = 'u8[1024]{0}', space=vmem, size = 0x400, scoped, tag = 'input window, operand 8, single buffered']
    #allocation15 [shape = 's32[1]{0}', space=sflag, size = 0x4, scoped, tag = 'scoped memory for tpu_custom_call.1']
    #allocation16 [shape = 'u8[131072]{0}', space=vmem, size = 0x20000, scoped, tag = 'input window, operand 10, single buffered']
    #allocation17 [shape = 'u8[131072]{0}', space=vmem, size = 0x20000, scoped, tag = 'input window, operand 12, single buffered']
    #allocation18 [shape = 's32[1]{0}', space=sflag, size = 0x4, scoped, tag = 'scoped memory for tpu_custom_call.1']
    #allocation19 [shape = 'u8[16384]{0}', space=vmem, size = 0x4000, scoped, tag = 'output window, operand 0, single buffered']
    %21 = vsyncpa [#allocation3], 0
    %22 = vsyncpa [#allocation6], 0
    %23 = vsyncpa [#allocation9], 0
    %24 = vsyncpa [#allocation12], 0
    %25 = vsyncpa [#allocation15], 0
    %26 = vsyncpa [#allocation18], 0
    %27 = vsyncpa [#allocation4], 0
    // Predicated region
    $region2: #{tpu_custom_call.1} parent=1 // pred_check
      _
    $region3: #{tpu_custom_call.1} parent=1 // pred_check_branch
      %29 = sbr.rel (0) target = $region5
    $region4: #{tpu_custom_call.1} parent=1 // pred_region
      %31 = vsyncadd [#allocation3], 0
      %s32 = sshll.u32 %s0, 4
      %s33 = int_to_ptr.hbm [resolvable:$true] %s32
      %s34 = sshll.u32 [#allocation2], 4
      %s35 = int_to_ptr.vmem [resolvable:$true] %s34
      %40 = dma.hbm_to_vmem [thread:$0]  %s33, 512, %s35, [#allocation3], 128, 128, 8
    $region5: #{tpu_custom_call.1} parent=1 // pred_fallthru
      _
    // Predicated region
    $region6: #{tpu_custom_call.1} parent=1 // pred_check
      _
    $region7: #{tpu_custom_call.1} parent=1 // pred_check_branch
      %42 = sbr.rel (0) target = $region9
    $region8: #{tpu_custom_call.1} parent=1 // pred_region
      %44 = vsyncadd [#allocation6], 0
      %s45 = sshll.u32 %s1, 4
      %s46 = int_to_ptr.hbm [resolvable:$true] %s45
      %s47 = sshll.u32 [#allocation5], 4
      %s48 = int_to_ptr.vmem [resolvable:$true] %s47
      %53 = dma.hbm_to_vmem [thread:$0]  %s46, 512, %s48, [#allocation6], 128, 128, 8
    $region9: #{tpu_custom_call.1} parent=1 // pred_fallthru
      _
    // Predicated region
    $region10: #{tpu_custom_call.1} parent=1 // pred_check
      _
    $region11: #{tpu_custom_call.1} parent=1 // pred_check_branch
      %55 = sbr.rel (0) target = $region13
    $region12: #{tpu_custom_call.1} parent=1 // pred_region
      %57 = vsyncadd [#allocation6], 0
      %s59 = sshll.u32 %s2, 4
      %s60 = int_to_ptr.hbm [resolvable:$true] %s59
      %s61 = sshll.u32 [#allocation7], 4
      %s62 = int_to_ptr.vmem [resolvable:$true] %s61
      %64 = dma.hbm_to_vmem [thread:$0]  %s60, 16, %s62, [#allocation6]
    $region13: #{tpu_custom_call.1} parent=1 // pred_fallthru
      _
    // Predicated region
    $region14: #{tpu_custom_call.1} parent=1 // pred_check
      _
    $region15: #{tpu_custom_call.1} parent=1 // pred_check_branch
      %66 = sbr.rel (0) target = $region17
    $region16: #{tpu_custom_call.1} parent=1 // pred_region
      %68 = vsyncadd [#allocation9], 0
      %s70 = sshll.u32 %s3, 4
      %s71 = int_to_ptr.hbm [resolvable:$true] %s70
      %s72 = sshll.u32 [#allocation8], 4
      %s73 = int_to_ptr.vmem [resolvable:$true] %s72
      %75 = dma.hbm_to_vmem [thread:$0]  %s71, 16, %s73, [#allocation9]
    $region17: #{tpu_custom_call.1} parent=1 // pred_fallthru
      _
    // Predicated region
    $region18: #{tpu_custom_call.1} parent=1 // pred_check
      _
    $region19: #{tpu_custom_call.1} parent=1 // pred_check_branch
      %77 = sbr.rel (0) target = $region21
    $region20: #{tpu_custom_call.1} parent=1 // pred_region
      %79 = vsyncadd [#allocation9], 0
      %s80 = sshll.u32 %s4, 4
      %s81 = int_to_ptr.hbm [resolvable:$true] %s80
      %s82 = sshll.u32 [#allocation10], 4
      %s83 = int_to_ptr.vmem [resolvable:$true] %s82
      %88 = dma.hbm_to_vmem [thread:$0]  %s81, 6144, %s83, [#allocation9], 192, 192, 12
    $region21: #{tpu_custom_call.1} parent=1 // pred_fallthru
      _
    // Predicated region
    $region22: #{tpu_custom_call.1} parent=1 // pred_check
      _
    $region23: #{tpu_custom_call.1} parent=1 // pred_check_branch
      %90 = sbr.rel (0) target = $region25
    $region24: #{tpu_custom_call.1} parent=1 // pred_region
      %92 = vsyncadd [#allocation12], 0
      %s93 = sshll.u32 %s5, 4
      %s94 = int_to_ptr.hbm [resolvable:$true] %s93
      %s95 = sshll.u32 [#allocation11], 4
      %s96 = int_to_ptr.vmem [resolvable:$true] %s95
      %101 = dma.hbm_to_vmem [thread:$0]  %s94, 96, %s96, [#allocation12], 48, 48, 3
    $region25: #{tpu_custom_call.1} parent=1 // pred_fallthru
      _
    // Predicated region
    $region26: #{tpu_custom_call.1} parent=1 // pred_check
      _
    $region27: #{tpu_custom_call.1} parent=1 // pred_check_branch
      %103 = sbr.rel (0) target = $region29
    $region28: #{tpu_custom_call.1} parent=1 // pred_region
      %105 = vsyncadd [#allocation12], 0
      %s106 = sshll.u32 %s6, 4
      %s107 = int_to_ptr.hbm [resolvable:$true] %s106
      %s108 = sshll.u32 [#allocation13], 4
      %s109 = int_to_ptr.vmem [resolvable:$true] %s108
      %114 = dma.hbm_to_vmem [thread:$0]  %s107, 2048, %s109, [#allocation12], 64, 64, 4
    $region29: #{tpu_custom_call.1} parent=1 // pred_fallthru
      _
    // Predicated region
    $region30: #{tpu_custom_call.1} parent=1 // pred_check
      _
    $region31: #{tpu_custom_call.1} parent=1 // pred_check_branch
      %116 = sbr.rel (0) target = $region33
    $region32: #{tpu_custom_call.1} parent=1 // pred_region
      _
    $region33: #{tpu_custom_call.1} parent=1 // pred_fallthru
      _
    // Predicated region
    $region34: #{tpu_custom_call.1} parent=1 // pred_check
      _
    $region35: #{tpu_custom_call.1} parent=1 // pred_check_branch
      %118 = sbr.rel (0) target = $region37
    $region36: #{tpu_custom_call.1} parent=1 // pred_region
      %120 = vsyncadd [#allocation15], 0
      %s121 = sshll.u32 %s8, 4
      %s122 = int_to_ptr.hbm [resolvable:$true] %s121
      %s123 = sshll.u32 [#allocation14], 4
      %s124 = int_to_ptr.vmem [resolvable:$true] %s123
      %129 = dma.hbm_to_vmem [thread:$0]  %s122, 32, %s124, [#allocation15], 16, 16, 1
    $region37: #{tpu_custom_call.1} parent=1 // pred_fallthru
      _
    // Predicated region
    $region38: #{tpu_custom_call.1} parent=1 // pred_check
      _
    $region39: #{tpu_custom_call.1} parent=1 // pred_check_branch
      %131 = sbr.rel (0) target = $region41
    $region40: #{tpu_custom_call.1} parent=1 // pred_region
      _
    $region41: #{tpu_custom_call.1} parent=1 // pred_fallthru
      _
    // Predicated region
    $region42: #{tpu_custom_call.1} parent=1 // pred_check
      _
    $region43: #{tpu_custom_call.1} parent=1 // pred_check_branch
      %133 = sbr.rel (0) target = $region45
    $region44: #{tpu_custom_call.1} parent=1 // pred_region
      %135 = vsyncadd [#allocation15], 0
      %s136 = sshll.u32 %s10, 4
      %s137 = int_to_ptr.hbm [resolvable:$true] %s136
      %s138 = sshll.u32 [#allocation16], 4
      %s139 = int_to_ptr.vmem [resolvable:$true] %s138
      %144 = dma.hbm_to_vmem [thread:$0]  %s137, 4096, %s139, [#allocation15], 128, 128, 8
    $region45: #{tpu_custom_call.1} parent=1 // pred_fallthru
      _
    // Predicated region
    $region46: #{tpu_custom_call.1} parent=1 // pred_check
      _
    $region47: #{tpu_custom_call.1} parent=1 // pred_check_branch
      %146 = sbr.rel (0) target = $region49
    $region48: #{tpu_custom_call.1} parent=1 // pred_region
      _
    $region49: #{tpu_custom_call.1} parent=1 // pred_fallthru
      _
    // Predicated region
    $region50: #{tpu_custom_call.1} parent=1 // pred_check
      _
    $region51: #{tpu_custom_call.1} parent=1 // pred_check_branch
      %148 = sbr.rel (0) target = $region53
    $region52: #{tpu_custom_call.1} parent=1 // pred_region
      %150 = vsyncadd [#allocation18], 0
      %s151 = sshll.u32 %s12, 4
      %s152 = int_to_ptr.hbm [resolvable:$true] %s151
      %s153 = sshll.u32 [#allocation17], 4
      %s154 = int_to_ptr.vmem [resolvable:$true] %s153
      %159 = dma.hbm_to_vmem [thread:$0]  %s152, 4096, %s154, [#allocation18], 64, 64, 4
    $region53: #{tpu_custom_call.1} parent=1 // pred_fallthru
      _
    // Predicated region
    $region54: #{tpu_custom_call.1} parent=1 // pred_check
      _
    $region55: #{tpu_custom_call.1} parent=1 // pred_check_branch
      %161 = sbr.rel (0) target = $region57
    $region56: #{tpu_custom_call.1} parent=1 // pred_region
      _
    $region57: #{tpu_custom_call.1} parent=1 // pred_fallthru
      _
    // Predicated region
    $region58: #{tpu_custom_call.1} parent=1 // pred_check
      _
    $region59: #{tpu_custom_call.1} parent=1 // pred_check_branch
      %163 = sbr.rel (0) target = $region61
    $region60: #{tpu_custom_call.1} parent=1 // pred_region
      _
    $region61: #{tpu_custom_call.1} parent=1 // pred_fallthru
      _
    // Predicated region
    $region62: #{tpu_custom_call.1} parent=1 // pred_check
      _
    $region63: #{tpu_custom_call.1} parent=1 // pred_check_branch
      %165 = sbr.rel (0) target = $region65
    $region64: #{tpu_custom_call.1} parent=1 // pred_region
      _
    $region65: #{tpu_custom_call.1} parent=1 // pred_fallthru
      _
    // Predicated region
    $region66: #{tpu_custom_call.1} parent=1 // pred_check
      _
    $region67: #{tpu_custom_call.1} parent=1 // pred_check_branch
      %167 = sbr.rel (0) target = $region69
    $region68: #{tpu_custom_call.1} parent=1 // pred_region
      %169 = dma.done [#allocation3], 512
    $region69: #{tpu_custom_call.1} parent=1 // pred_fallthru
      _
    // Predicated region
    $region70: #{tpu_custom_call.1} parent=1 // pred_check
      _
    $region71: #{tpu_custom_call.1} parent=1 // pred_check_branch
      %171 = sbr.rel (0) target = $region73
    $region72: #{tpu_custom_call.1} parent=1 // pred_region
      %173 = dma.done [#allocation6], 512
    $region73: #{tpu_custom_call.1} parent=1 // pred_fallthru
      _
    // Predicated region
    $region74: #{tpu_custom_call.1} parent=1 // pred_check
      _
    $region75: #{tpu_custom_call.1} parent=1 // pred_check_branch
      %175 = sbr.rel (0) target = $region77
    $region76: #{tpu_custom_call.1} parent=1 // pred_region
      %177 = dma.done [#allocation6], 16
    $region77: #{tpu_custom_call.1} parent=1 // pred_fallthru
      _
    // Predicated region
    $region78: #{tpu_custom_call.1} parent=1 // pred_check
      _
    $region79: #{tpu_custom_call.1} parent=1 // pred_check_branch
      %179 = sbr.rel (0) target = $region81
    $region80: #{tpu_custom_call.1} parent=1 // pred_region
      %181 = dma.done [#allocation9], 16
    $region81: #{tpu_custom_call.1} parent=1 // pred_fallthru
      _
    // Predicated region
    $region82: #{tpu_custom_call.1} parent=1 // pred_check
      _
    $region83: #{tpu_custom_call.1} parent=1 // pred_check_branch
      %183 = sbr.rel (0) target = $region85
    $region84: #{tpu_custom_call.1} parent=1 // pred_region
      %185 = dma.done [#allocation9], 6144
    $region85: #{tpu_custom_call.1} parent=1 // pred_fallthru
      _
    // Predicated region
    $region86: #{tpu_custom_call.1} parent=1 // pred_check
      _
    $region87: #{tpu_custom_call.1} parent=1 // pred_check_branch
      %187 = sbr.rel (0) target = $region89
    $region88: #{tpu_custom_call.1} parent=1 // pred_region
      %189 = dma.done [#allocation12], 96
    $region89: #{tpu_custom_call.1} parent=1 // pred_fallthru
      _
    // Predicated region
    $region90: #{tpu_custom_call.1} parent=1 // pred_check
      _
    $region91: #{tpu_custom_call.1} parent=1 // pred_check_branch
      %191 = sbr.rel (0) target = $region93
    $region92: #{tpu_custom_call.1} parent=1 // pred_region
      %193 = dma.done [#allocation12], 2048
    $region93: #{tpu_custom_call.1} parent=1 // pred_fallthru
      _
    // Predicated region
    $region94: #{tpu_custom_call.1} parent=1 // pred_check
      _
    $region95: #{tpu_custom_call.1} parent=1 // pred_check_branch
      %195 = sbr.rel (0) target = $region97
    $region96: #{tpu_custom_call.1} parent=1 // pred_region
      %197 = dma.done [#allocation15], 32
    $region97: #{tpu_custom_call.1} parent=1 // pred_fallthru
      _
    // Predicated region
    $region98: #{tpu_custom_call.1} parent=1 // pred_check
      _
    $region99: #{tpu_custom_call.1} parent=1 // pred_check_branch
      %199 = sbr.rel (0) target = $region101
    $region100: #{tpu_custom_call.1} parent=1 // pred_region
      %201 = dma.done [#allocation15], 4096
    $region101: #{tpu_custom_call.1} parent=1 // pred_fallthru
      _
    // Predicated region
    $region102: #{tpu_custom_call.1} parent=1 // pred_check
      _
    $region103: #{tpu_custom_call.1} parent=1 // pred_check_branch
      %203 = sbr.rel (0) target = $region105
    $region104: #{tpu_custom_call.1} parent=1 // pred_region
      %205 = dma.done [#allocation18], 4096
    $region105: #{tpu_custom_call.1} parent=1 // pred_fallthru
      _
    %v207 = vld [vmem:[#allocation5] sm:$0xff]
    %v208 = vld [vmem:[#allocation5 + $0x8] sm:$0xff]
    %v209 = vld [vmem:[#allocation5 + $0x10] sm:$0xff]
    %v210 = vld [vmem:[#allocation5 + $0x18] sm:$0xff]
    %v211 = vld [vmem:[#allocation2] sm:$0xff]
    %v212 = vld [vmem:[#allocation2 + $0x8] sm:$0xff]
    %v213 = vld [vmem:[#allocation2 + $0x10] sm:$0xff]
    %v214 = vld [vmem:[#allocation2 + $0x18] sm:$0xff]
    %v215 = vld [vmem:[#allocation7] sm:$0x1]
    %v216 = vld [vmem:[#allocation8] sm:$0x1]
    %217 = vadd.xlane.f32.xlu0 %v211
    %v218 = vpop.xlane.xlu0 %217
    %219 = vadd.xlane.f32.xlu0 %v212
    %v220 = vpop.xlane.xlu0 %219
    %221 = vadd.xlane.f32.xlu0 %v213
    %v222 = vpop.xlane.xlu0 %221
    %223 = vadd.xlane.f32.xlu0 %v214
    %v224 = vpop.xlane.xlu0 %223
    %v225 = vrcp.pop 128.0
    %v226 = vmul.f32 128.0, %v225
    %v227 = vsub.f32 1.0, %v226
    %v228 = vmul.f32 %v225, %v227
    %v229 = vadd.f32 %v225, %v228
    %vm230 = vweird.f32 %v225
    %v231 = vsel %vm230, %v225, %v229
    %v232 = vmul.f32 %v218, %v231
    %v233 = vmul.f32 %v220, %v231
    %v234 = vmul.f32 %v222, %v231
    %v235 = vmul.f32 %v224, %v231
    %v236 = vmul.f32 %v211, %v211
    %v237 = vmul.f32 %v212, %v212
    %v238 = vmul.f32 %v213, %v213
    %v239 = vmul.f32 %v214, %v214
    %240 = vadd.xlane.f32.xlu0 %v236
    %v241 = vpop.xlane.xlu0 %240
    %242 = vadd.xlane.f32.xlu0 %v237
    %v243 = vpop.xlane.xlu0 %242
    %244 = vadd.xlane.f32.xlu0 %v238
    %v245 = vpop.xlane.xlu0 %244
    %246 = vadd.xlane.f32.xlu0 %v239
    %v247 = vpop.xlane.xlu0 %246
    %v248 = vmul.f32 %v241, %v231
    %v249 = vmul.f32 %v243, %v231
    %v250 = vmul.f32 %v245, %v231
    %v251 = vmul.f32 %v247, %v231
    %v252 = vmul.f32 %v232, %v232
    %v253 = vmul.f32 %v233, %v233
    %v254 = vmul.f32 %v234, %v234
    %v255 = vmul.f32 %v235, %v235
    %v256 = vsub.f32 %v248, %v252
    %v257 = vsub.f32 %v249, %v253
    %v258 = vsub.f32 %v250, %v254
    %v259 = vsub.f32 %v251, %v255
    %v260 = vmax.f32 %v256, 0.0
    %v261 = vmax.f32 %v257, 0.0
    %v262 = vmax.f32 %v258, 0.0
    %v263 = vmax.f32 %v259, 0.0
    %v264 = vsub.f32 %v211, %v232
    %v265 = vsub.f32 %v212, %v233
    %v266 = vsub.f32 %v213, %v234
    %v267 = vsub.f32 %v214, %v235
    %v268 = vadd.f32 %v260, 1e-12
    %v269 = vadd.f32 %v261, 1e-12
    %v270 = vadd.f32 %v262, 1e-12
    %v271 = vadd.f32 %v263, 1e-12
    %v272 = vrsqrt.pop %v268
    %v273 = vmul.f32 %v272, %v268
    %v274 = vmul.f32 %v273, %v272
    %v275 = vmul.f32 0.5, %v274
    %v276 = vsub.f32 1.5, %v275
    %v277 = vmul.f32 %v272, %v276
    %vm278 = vweird.f32 %v268
    %vm279 = vweird.f32 %v272
    %vm280 = vmor %vm278, %vm279
    %v281 = vsel %vm280, %v272, %v277
    %v282 = vrsqrt.pop %v269
    %v283 = vmul.f32 %v282, %v269
    %v284 = vmul.f32 %v283, %v282
    %v285 = vmul.f32 0.5, %v284
    %v286 = vsub.f32 1.5, %v285
    %v287 = vmul.f32 %v282, %v286
    %vm288 = vweird.f32 %v269
    %vm289 = vweird.f32 %v282
    %vm290 = vmor %vm288, %vm289
    %v291 = vsel %vm290, %v282, %v287
    %v292 = vrsqrt.pop %v270
    %v293 = vmul.f32 %v292, %v270
    %v294 = vmul.f32 %v293, %v292
    %v295 = vmul.f32 0.5, %v294
    %v296 = vsub.f32 1.5, %v295
    %v297 = vmul.f32 %v292, %v296
    %vm298 = vweird.f32 %v270
    %vm299 = vweird.f32 %v292
    %vm300 = vmor %vm298, %vm299
    %v301 = vsel %vm300, %v292, %v297
    %v302 = vrsqrt.pop %v271
    %v303 = vmul.f32 %v302, %v271
    %v304 = vmul.f32 %v303, %v302
    %v305 = vmul.f32 0.5, %v304
    %v306 = vsub.f32 1.5, %v305
    %v307 = vmul.f32 %v302, %v306
    %vm308 = vweird.f32 %v271
    %vm309 = vweird.f32 %v302
    %vm310 = vmor %vm308, %vm309
    %v311 = vsel %vm310, %v302, %v307
    %v312 = vmul.f32 %v264, %v281
    %v313 = vmul.f32 %v265, %v291
    %v314 = vmul.f32 %v266, %v301
    %v315 = vmul.f32 %v267, %v311
    %v317 = vperm.slane %v215, 0
    %v319 = vmul.f32 %v312, %v317
    %v320 = vmul.f32 %v313, %v317
    %v321 = vmul.f32 %v314, %v317
    %v322 = vmul.f32 %v315, %v317
    %v324 = vperm.slane %v216, 0
    %v326 = vadd.f32 %v319, %v324
    %v327 = vadd.f32 %v320, %v324
    %v328 = vadd.f32 %v321, %v324
    %v329 = vadd.f32 %v322, %v324
    %v330 = vpack.c.bf16 %v327, %v326
    %v331 = vpack.c.bf16 %v329, %v328
    %v332 = vld [vmem:[#allocation10] sm:$0xff]
    %v333 = vld [vmem:[#allocation10 + $0x8] sm:$0xf]
    %v334 = vld [vmem:[#allocation10 + $0xc] sm:$0xff]
    %v335 = vld [vmem:[#allocation10 + $0x14] sm:$0xf]
    %v336 = vld [vmem:[#allocation10 + $0x18] sm:$0xff]
    %v337 = vld [vmem:[#allocation10 + $0x20] sm:$0xf]
    %v338 = vld [vmem:[#allocation10 + $0x24] sm:$0xff]
    %v339 = vld [vmem:[#allocation10 + $0x2c] sm:$0xf]
    %v340 = vld [vmem:[#allocation10 + $0x30] sm:$0xff]
    %v341 = vld [vmem:[#allocation10 + $0x38] sm:$0xf]
    %v342 = vld [vmem:[#allocation10 + $0x3c] sm:$0xff]
    %v343 = vld [vmem:[#allocation10 + $0x44] sm:$0xf]
    %v344 = vld [vmem:[#allocation10 + $0x48] sm:$0xff]
    %v345 = vld [vmem:[#allocation10 + $0x50] sm:$0xf]
    %v346 = vld [vmem:[#allocation10 + $0x54] sm:$0xff]
    %v347 = vld [vmem:[#allocation10 + $0x5c] sm:$0xf]
    %v348 = vld [vmem:[#allocation10 + $0x60] sm:$0xff]
    %v349 = vld [vmem:[#allocation10 + $0x68] sm:$0xf]
    %v350 = vld [vmem:[#allocation10 + $0x6c] sm:$0xff]
    %v351 = vld [vmem:[#allocation10 + $0x74] sm:$0xf]
    %v352 = vld [vmem:[#allocation10 + $0x78] sm:$0xff]
    %v353 = vld [vmem:[#allocation10 + $0x80] sm:$0xf]
    %v354 = vld [vmem:[#allocation10 + $0x84] sm:$0xff]
    %v355 = vld [vmem:[#allocation10 + $0x8c] sm:$0xf]
    %v356 = vld [vmem:[#allocation10 + $0x90] sm:$0xff]
    %v357 = vld [vmem:[#allocation10 + $0x98] sm:$0xf]
    %v358 = vld [vmem:[#allocation10 + $0x9c] sm:$0xff]
    %v359 = vld [vmem:[#allocation10 + $0xa4] sm:$0xf]
    %v360 = vld [vmem:[#allocation10 + $0xa8] sm:$0xff]
    %v361 = vld [vmem:[#allocation10 + $0xb0] sm:$0xf]
    %v362 = vld [vmem:[#allocation10 + $0xb4] sm:$0xff]
    %v363 = vld [vmem:[#allocation10 + $0xbc] sm:$0xf]
    %v364 = vld [vmem:[#allocation11] sm:$0x7]
    %v366 = vperm.slane %v364, 0
    %v367 = vperm.slane %v364, 1
    %v368 = vperm.slane %v364, 2
    %v404 = vunpack.c.l.b16 %v332
    %v405 = vunpack.c.h.b16 %v332
    %v406 = vunpack.c.l.b16 %v333
    %v407 = vunpack.c.l.b16 %v334
    %v408 = vunpack.c.h.b16 %v334
    %v409 = vunpack.c.l.b16 %v335
    %v410 = vunpack.c.l.b16 %v336
    %v411 = vunpack.c.h.b16 %v336
    %v412 = vunpack.c.l.b16 %v337
    %v413 = vunpack.c.l.b16 %v338
    %v414 = vunpack.c.h.b16 %v338
    %v415 = vunpack.c.l.b16 %v339
    %v416 = vunpack.c.l.b16 %v340
    %v417 = vunpack.c.h.b16 %v340
    %v418 = vunpack.c.l.b16 %v341
    %v419 = vunpack.c.l.b16 %v342
    %v420 = vunpack.c.h.b16 %v342
    %v421 = vunpack.c.l.b16 %v343
    %v422 = vunpack.c.l.b16 %v344
    %v423 = vunpack.c.h.b16 %v344
    %v424 = vunpack.c.l.b16 %v345
    %v425 = vunpack.c.l.b16 %v346
    %v426 = vunpack.c.h.b16 %v346
    %v427 = vunpack.c.l.b16 %v347
    %v428 = vunpack.c.l.b16 %v348
    %v429 = vunpack.c.h.b16 %v348
    %v430 = vunpack.c.l.b16 %v349
    %v431 = vunpack.c.l.b16 %v350
    %v432 = vunpack.c.h.b16 %v350
    %v433 = vunpack.c.l.b16 %v351
    %v434 = vunpack.c.l.b16 %v352
    %v435 = vunpack.c.h.b16 %v352
    %v436 = vunpack.c.l.b16 %v353
    %v437 = vunpack.c.l.b16 %v354
    %v438 = vunpack.c.h.b16 %v354
    %v439 = vunpack.c.l.b16 %v355
    %v440 = vunpack.c.l.b16 %v356
    %v441 = vunpack.c.h.b16 %v356
    %v442 = vunpack.c.l.b16 %v357
    %v443 = vunpack.c.l.b16 %v358
    %v444 = vunpack.c.h.b16 %v358
    %v445 = vunpack.c.l.b16 %v359
    %v446 = vunpack.c.l.b16 %v360
    %v447 = vunpack.c.h.b16 %v360
    %v448 = vunpack.c.l.b16 %v361
    %v449 = vunpack.c.l.b16 %v362
    %v450 = vunpack.c.h.b16 %v362
    %v451 = vunpack.c.l.b16 %v363
    %v452 = vpack.c.b16 %v407, %v404
    %v453 = vpack.c.b16 %v408, %v405
    %v454 = vpack.c.b16 %v409, %v406
    %v455 = vpack.c.b16 %v413, %v410
    %v456 = vpack.c.b16 %v414, %v411
    %v457 = vpack.c.b16 %v415, %v412
    %v458 = vpack.c.b16 %v419, %v416
    %v459 = vpack.c.b16 %v420, %v417
    %v460 = vpack.c.b16 %v421, %v418
    %v461 = vpack.c.b16 %v425, %v422
    %v462 = vpack.c.b16 %v426, %v423
    %v463 = vpack.c.b16 %v427, %v424
    %v464 = vpack.c.b16 %v431, %v428
    %v465 = vpack.c.b16 %v432, %v429
    %v466 = vpack.c.b16 %v433, %v430
    %v467 = vpack.c.b16 %v437, %v434
    %v468 = vpack.c.b16 %v438, %v435
    %v469 = vpack.c.b16 %v439, %v436
    %v470 = vpack.c.b16 %v443, %v440
    %v471 = vpack.c.b16 %v444, %v441
    %v472 = vpack.c.b16 %v445, %v442
    %v473 = vpack.c.b16 %v449, %v446
    %v474 = vpack.c.b16 %v450, %v447
    %v475 = vpack.c.b16 %v451, %v448
    %500 = vmatpush.bf16.msra.mxu0 %v473
    %501 = vmatpush.bf16.msra.mxu0 %v470
    %502 = vmatpush.bf16.msra.mxu0 %v467
    %503 = vmatpush.bf16.msra.mxu0 %v464
    %504 = vmatpush.bf16.msra.mxu0 %v461
    %505 = vmatpush.bf16.msra.mxu0 %v458
    %506 = vmatpush.bf16.msra.mxu0 %v455
    %507 = vmatpush.bf16.msra.mxu0 %v452
    %508 = vmatmul.bf16.gmra.mxu0 %v330
    %v509 = vpop.f32.mrf.mxu0
    %v510 = vadd.f32 %v366, %v509
    %v511 = vpop.f32.mrf.mxu0
    %v512 = vadd.f32 %v366, %v511
    %513 = vmatmul.bf16.gmra.mxu0 %v331
    %v514 = vpop.f32.mrf.mxu0
    %v515 = vadd.f32 %v366, %v514
    %v516 = vpop.f32.mrf.mxu0
    %v517 = vadd.f32 %v366, %v516
    %518 = vdwg.mxu0
    %519 = vmatpush.bf16.msra.mxu0 %v474
    %520 = vmatpush.bf16.msra.mxu0 %v471
    %521 = vmatpush.bf16.msra.mxu0 %v468
    %522 = vmatpush.bf16.msra.mxu0 %v465
    %523 = vmatpush.bf16.msra.mxu0 %v462
    %524 = vmatpush.bf16.msra.mxu0 %v459
    %525 = vmatpush.bf16.msra.mxu0 %v456
    %526 = vmatpush.bf16.msra.mxu0 %v453
    %527 = vmatmul.bf16.gmra.mxu0 %v330
    %v528 = vpop.f32.mrf.mxu0
    %v529 = vadd.f32 %v367, %v528
    %v530 = vpop.f32.mrf.mxu0
    %v531 = vadd.f32 %v367, %v530
    %532 = vmatmul.bf16.gmra.mxu0 %v331
    %v533 = vpop.f32.mrf.mxu0
    %v534 = vadd.f32 %v367, %v533
    %v535 = vpop.f32.mrf.mxu0
    %v536 = vadd.f32 %v367, %v535
    %537 = vdwg.mxu0
    %538 = vmatpush.bf16.msra.mxu0 %v475
    %539 = vmatpush.bf16.msra.mxu0 %v472
    %540 = vmatpush.bf16.msra.mxu0 %v469
    %541 = vmatpush.bf16.msra.mxu0 %v466
    %542 = vmatpush.bf16.msra.mxu0 %v463
    %543 = vmatpush.bf16.msra.mxu0 %v460
    %544 = vmatpush.bf16.msra.mxu0 %v457
    %545 = vmatpush.bf16.msra.mxu0 %v454
    %546 = vmatmul.bf16.gmra.mxu0 %v330
    %v547 = vpop.f32.mrf.mxu0
    %v548 = vadd.f32 %v368, %v547
    %v549 = vpop.f32.mrf.mxu0
    %v550 = vadd.f32 %v368, %v549
    %551 = vmatmul.bf16.gmra.mxu0 %v331
    %v552 = vpop.f32.mrf.mxu0
    %v553 = vadd.f32 %v368, %v552
    %v554 = vpop.f32.mrf.mxu0
    %v555 = vadd.f32 %v368, %v554
    %556 = vdwg.mxu0
    %561 = vrot.lane.b32.xlu0 %v510, 96
    %v562 = vpop.permute.xlu0 %561
    %563 = vrot.lane.b32.xlu0 %v512, 96
    %v564 = vpop.permute.xlu0 %563
    %565 = vrot.lane.b32.xlu0 %v515, 96
    %v566 = vpop.permute.xlu0 %565
    %567 = vrot.lane.b32.xlu0 %v517, 96
    %v568 = vpop.permute.xlu0 %567
    %573 = vrot.lane.b32.xlu0 %v510, 64
    %v574 = vpop.permute.xlu0 %573
    %575 = vrot.lane.b32.xlu0 %v512, 64
    %v576 = vpop.permute.xlu0 %575
    %577 = vrot.lane.b32.xlu0 %v515, 64
    %v578 = vpop.permute.xlu0 %577
    %579 = vrot.lane.b32.xlu0 %v517, 64
    %v580 = vpop.permute.xlu0 %579
    %585 = vrot.lane.b32.xlu0 %v510, 32
    %v586 = vpop.permute.xlu0 %585
    %587 = vrot.lane.b32.xlu0 %v512, 32
    %v588 = vpop.permute.xlu0 %587
    %589 = vrot.lane.b32.xlu0 %v515, 32
    %v590 = vpop.permute.xlu0 %589
    %591 = vrot.lane.b32.xlu0 %v517, 32
    %v592 = vpop.permute.xlu0 %591
    %v597 = vpack.c.bf16 %v510, %v510
    %v598 = vpack.c.bf16 %v512, %v512
    %v599 = vpack.c.bf16 %v515, %v515
    %v600 = vpack.c.bf16 %v517, %v517
    %v601 = vpack.c.bf16 %v562, %v562
    %v602 = vpack.c.bf16 %v564, %v564
    %v603 = vpack.c.bf16 %v566, %v566
    %v604 = vpack.c.bf16 %v568, %v568
    %v605 = vpack.c.bf16 %v574, %v574
    %v606 = vpack.c.bf16 %v576, %v576
    %v607 = vpack.c.bf16 %v578, %v578
    %v608 = vpack.c.bf16 %v580, %v580
    %v609 = vpack.c.bf16 %v586, %v586
    %v610 = vpack.c.bf16 %v588, %v588
    %v611 = vpack.c.bf16 %v590, %v590
    %v612 = vpack.c.bf16 %v592, %v592
    %617 = vrot.lane.b32.xlu0 %v529, 96
    %v618 = vpop.permute.xlu0 %617
    %619 = vrot.lane.b32.xlu0 %v531, 96
    %v620 = vpop.permute.xlu0 %619
    %621 = vrot.lane.b32.xlu0 %v534, 96
    %v622 = vpop.permute.xlu0 %621
    %623 = vrot.lane.b32.xlu0 %v536, 96
    %v624 = vpop.permute.xlu0 %623
    %629 = vrot.lane.b32.xlu0 %v529, 64
    %v630 = vpop.permute.xlu0 %629
    %631 = vrot.lane.b32.xlu0 %v531, 64
    %v632 = vpop.permute.xlu0 %631
    %633 = vrot.lane.b32.xlu0 %v534, 64
    %v634 = vpop.permute.xlu0 %633
    %635 = vrot.lane.b32.xlu0 %v536, 64
    %v636 = vpop.permute.xlu0 %635
    %641 = vrot.lane.b32.xlu0 %v529, 32
    %v642 = vpop.permute.xlu0 %641
    %643 = vrot.lane.b32.xlu0 %v531, 32
    %v644 = vpop.permute.xlu0 %643
    %645 = vrot.lane.b32.xlu0 %v534, 32
    %v646 = vpop.permute.xlu0 %645
    %647 = vrot.lane.b32.xlu0 %v536, 32
    %v648 = vpop.permute.xlu0 %647
    %v653 = vpack.c.bf16 %v529, %v529
    %v654 = vpack.c.bf16 %v531, %v531
    %v655 = vpack.c.bf16 %v534, %v534
    %v656 = vpack.c.bf16 %v536, %v536
    %v657 = vpack.c.bf16 %v618, %v618
    %v658 = vpack.c.bf16 %v620, %v620
    %v659 = vpack.c.bf16 %v622, %v622
    %v660 = vpack.c.bf16 %v624, %v624
    %v661 = vpack.c.bf16 %v630, %v630
    %v662 = vpack.c.bf16 %v632, %v632
    %v663 = vpack.c.bf16 %v634, %v634
    %v664 = vpack.c.bf16 %v636, %v636
    %v665 = vpack.c.bf16 %v642, %v642
    %v666 = vpack.c.bf16 %v644, %v644
    %v667 = vpack.c.bf16 %v646, %v646
    %v668 = vpack.c.bf16 %v648, %v648
    %673 = vrot.lane.b32.xlu0 %v548, 96
    %v674 = vpop.permute.xlu0 %673
    %675 = vrot.lane.b32.xlu0 %v550, 96
    %v676 = vpop.permute.xlu0 %675
    %677 = vrot.lane.b32.xlu0 %v553, 96
    %v678 = vpop.permute.xlu0 %677
    %679 = vrot.lane.b32.xlu0 %v555, 96
    %v680 = vpop.permute.xlu0 %679
    %685 = vrot.lane.b32.xlu0 %v548, 64
    %v686 = vpop.permute.xlu0 %685
    %687 = vrot.lane.b32.xlu0 %v550, 64
    %v688 = vpop.permute.xlu0 %687
    %689 = vrot.lane.b32.xlu0 %v553, 64
    %v690 = vpop.permute.xlu0 %689
    %691 = vrot.lane.b32.xlu0 %v555, 64
    %v692 = vpop.permute.xlu0 %691
    %697 = vrot.lane.b32.xlu0 %v548, 32
    %v698 = vpop.permute.xlu0 %697
    %699 = vrot.lane.b32.xlu0 %v550, 32
    %v700 = vpop.permute.xlu0 %699
    %701 = vrot.lane.b32.xlu0 %v553, 32
    %v702 = vpop.permute.xlu0 %701
    %703 = vrot.lane.b32.xlu0 %v555, 32
    %v704 = vpop.permute.xlu0 %703
    %v709 = vpack.c.bf16 %v548, %v548
    %v710 = vpack.c.bf16 %v550, %v550
    %v711 = vpack.c.bf16 %v553, %v553
    %v712 = vpack.c.bf16 %v555, %v555
    %v713 = vpack.c.bf16 %v674, %v674
    %v714 = vpack.c.bf16 %v676, %v676
    %v715 = vpack.c.bf16 %v678, %v678
    %v716 = vpack.c.bf16 %v680, %v680
    %v717 = vpack.c.bf16 %v686, %v686
    %v718 = vpack.c.bf16 %v688, %v688
    %v719 = vpack.c.bf16 %v690, %v690
    %v720 = vpack.c.bf16 %v692, %v692
    %v721 = vpack.c.bf16 %v698, %v698
    %v722 = vpack.c.bf16 %v700, %v700
    %v723 = vpack.c.bf16 %v702, %v702
    %v724 = vpack.c.bf16 %v704, %v704
    %v729 = vunpack.c.l.b16 %v597
    %v730 = vunpack.c.l.b16 %v598
    %v731 = vunpack.c.l.b16 %v599
    %v732 = vunpack.c.l.b16 %v600
    %v733 = vpack.c.b16 %v730, %v729
    %v734 = vpack.c.b16 %v732, %v731
    %v739 = vunpack.c.l.b16 %v653
    %v740 = vunpack.c.l.b16 %v654
    %v741 = vunpack.c.l.b16 %v655
    %v742 = vunpack.c.l.b16 %v656
    %v743 = vpack.c.b16 %v740, %v739
    %v744 = vpack.c.b16 %v742, %v741
    %vm745 = vcmask 261120
    %v747 = vsel %vm745, %v733, 0
    %v750 = vsel %vm745, %v734, 0
    %v753 = vsel %vm745, %v743, 0
    %v756 = vsel %vm745, %v744, 0
    %758 = vmatpush.bf16.xpose.msra.mxu0 0
    %759 = vmatpush.bf16.xpose.msra.mxu0 0
    %760 = vmatpush.bf16.xpose.msra.mxu0 0
    %761 = vmatpush.bf16.xpose.msra.mxu0 0
    %762 = vmatpush.bf16.xpose.msra.mxu0 0
    %763 = vmatpush.bf16.xpose.msra.mxu0 0
    %764 = vmatpush.bf16.xpose.msra.mxu0 %v756
    %765 = vmatpush.bf16.xpose.msra.mxu0 %v753
    %766 = vmatmul.bf16.gmra.mxu0 %v747
    %v767 = vpop.f32.mrf.mxu0
    %v768 = vadd.f32 %v207, %v767
    %v769 = vpop.f32.mrf.mxu0
    %v770 = vadd.f32 %v208, %v769
    %771 = vmatmul.bf16.gmra.mxu0 %v750
    %v772 = vpop.f32.mrf.mxu0
    %v773 = vadd.f32 %v209, %v772
    %v774 = vpop.f32.mrf.mxu0
    %v775 = vadd.f32 %v210, %v774
    %776 = vdwg.mxu0
    %v781 = vunpack.c.l.b16 %v601
    %v782 = vunpack.c.l.b16 %v602
    %v783 = vunpack.c.l.b16 %v603
    %v784 = vunpack.c.l.b16 %v604
    %v785 = vpack.c.b16 %v782, %v781
    %v786 = vpack.c.b16 %v784, %v783
    %v791 = vunpack.c.l.b16 %v657
    %v792 = vunpack.c.l.b16 %v658
    %v793 = vunpack.c.l.b16 %v659
    %v794 = vunpack.c.l.b16 %v660
    %v795 = vpack.c.b16 %v792, %v791
    %v796 = vpack.c.b16 %v794, %v793
    %v798 = vsel %vm745, %v785, 0
    %v801 = vsel %vm745, %v786, 0
    %v804 = vsel %vm745, %v795, 0
    %v807 = vsel %vm745, %v796, 0
    %809 = vmatpush.bf16.xpose.msra.mxu0 0
    %810 = vmatpush.bf16.xpose.msra.mxu0 0
    %811 = vmatpush.bf16.xpose.msra.mxu0 0
    %812 = vmatpush.bf16.xpose.msra.mxu0 0
    %813 = vmatpush.bf16.xpose.msra.mxu0 0
    %814 = vmatpush.bf16.xpose.msra.mxu0 0
    %815 = vmatpush.bf16.xpose.msra.mxu0 %v807
    %816 = vmatpush.bf16.xpose.msra.mxu0 %v804
    %817 = vmatmul.bf16.gmra.mxu0 %v798
    %v818 = vpop.f32.mrf.mxu0
    %v819 = vadd.f32 %v207, %v818
    %v820 = vpop.f32.mrf.mxu0
    %v821 = vadd.f32 %v208, %v820
    %822 = vmatmul.bf16.gmra.mxu0 %v801
    %v823 = vpop.f32.mrf.mxu0
    %v824 = vadd.f32 %v209, %v823
    %v825 = vpop.f32.mrf.mxu0
    %v826 = vadd.f32 %v210, %v825
    %827 = vdwg.mxu0
    %v832 = vunpack.c.l.b16 %v605
    %v833 = vunpack.c.l.b16 %v606
    %v834 = vunpack.c.l.b16 %v607
    %v835 = vunpack.c.l.b16 %v608
    %v836 = vpack.c.b16 %v833, %v832
    %v837 = vpack.c.b16 %v835, %v834
    %v842 = vunpack.c.l.b16 %v661
    %v843 = vunpack.c.l.b16 %v662
    %v844 = vunpack.c.l.b16 %v663
    %v845 = vunpack.c.l.b16 %v664
    %v846 = vpack.c.b16 %v843, %v842
    %v847 = vpack.c.b16 %v845, %v844
    %v849 = vsel %vm745, %v836, 0
    %v852 = vsel %vm745, %v837, 0
    %v855 = vsel %vm745, %v846, 0
    %v858 = vsel %vm745, %v847, 0
    %860 = vmatpush.bf16.xpose.msra.mxu0 0
    %861 = vmatpush.bf16.xpose.msra.mxu0 0
    %862 = vmatpush.bf16.xpose.msra.mxu0 0
    %863 = vmatpush.bf16.xpose.msra.mxu0 0
    %864 = vmatpush.bf16.xpose.msra.mxu0 0
    %865 = vmatpush.bf16.xpose.msra.mxu0 0
    %866 = vmatpush.bf16.xpose.msra.mxu0 %v858
    %867 = vmatpush.bf16.xpose.msra.mxu0 %v855
    %868 = vmatmul.bf16.gmra.mxu0 %v849
    %v869 = vpop.f32.mrf.mxu0
    %v870 = vadd.f32 %v207, %v869
    %v871 = vpop.f32.mrf.mxu0
    %v872 = vadd.f32 %v208, %v871
    %873 = vmatmul.bf16.gmra.mxu0 %v852
    %v874 = vpop.f32.mrf.mxu0
    %v875 = vadd.f32 %v209, %v874
    %v876 = vpop.f32.mrf.mxu0
    %v877 = vadd.f32 %v210, %v876
    %878 = vdwg.mxu0
    %v883 = vunpack.c.l.b16 %v609
    %v884 = vunpack.c.l.b16 %v610
    %v885 = vunpack.c.l.b16 %v611
    %v886 = vunpack.c.l.b16 %v612
    %v887 = vpack.c.b16 %v884, %v883
    %v888 = vpack.c.b16 %v886, %v885
    %v893 = vunpack.c.l.b16 %v665
    %v894 = vunpack.c.l.b16 %v666
    %v895 = vunpack.c.l.b16 %v667
    %v896 = vunpack.c.l.b16 %v668
    %v897 = vpack.c.b16 %v894, %v893
    %v898 = vpack.c.b16 %v896, %v895
    %v900 = vsel %vm745, %v887, 0
    %v903 = vsel %vm745, %v888, 0
    %v906 = vsel %vm745, %v897, 0
    %v909 = vsel %vm745, %v898, 0
    %911 = vmatpush.bf16.xpose.msra.mxu0 0
    %912 = vmatpush.bf16.xpose.msra.mxu0 0
    %913 = vmatpush.bf16.xpose.msra.mxu0 0
    %914 = vmatpush.bf16.xpose.msra.mxu0 0
    %915 = vmatpush.bf16.xpose.msra.mxu0 0
    %916 = vmatpush.bf16.xpose.msra.mxu0 0
    %917 = vmatpush.bf16.xpose.msra.mxu0 %v909
    %918 = vmatpush.bf16.xpose.msra.mxu0 %v906
    %919 = vmatmul.bf16.gmra.mxu0 %v900
    %v920 = vpop.f32.mrf.mxu0
    %v921 = vadd.f32 %v207, %v920
    %v922 = vpop.f32.mrf.mxu0
    %v923 = vadd.f32 %v208, %v922
    %924 = vmatmul.bf16.gmra.mxu0 %v903
    %v925 = vpop.f32.mrf.mxu0
    %v926 = vadd.f32 %v209, %v925
    %v927 = vpop.f32.mrf.mxu0
    %v928 = vadd.f32 %v210, %v927
    %929 = vdwg.mxu0
    %v930 = vsel %vm745, %v768, -inf
    %931 = vmax.xlane.f32.xlu0 %v930
    %v932 = vpop.xlane.xlu0 %931
    %v933 = vsel %vm745, %v770, -inf
    %934 = vmax.xlane.f32.xlu0 %v933
    %v935 = vpop.xlane.xlu0 %934
    %v936 = vsel %vm745, %v773, -inf
    %937 = vmax.xlane.f32.xlu0 %v936
    %v938 = vpop.xlane.xlu0 %937
    %v939 = vsel %vm745, %v775, -inf
    %940 = vmax.xlane.f32.xlu0 %v939
    %v941 = vpop.xlane.xlu0 %940
    %v942 = vsel %vm745, %v819, -inf
    %943 = vmax.xlane.f32.xlu0 %v942
    %v944 = vpop.xlane.xlu0 %943
    %v945 = vsel %vm745, %v821, -inf
    %946 = vmax.xlane.f32.xlu0 %v945
    %v947 = vpop.xlane.xlu0 %946
    %v948 = vsel %vm745, %v824, -inf
    %949 = vmax.xlane.f32.xlu0 %v948
    %v950 = vpop.xlane.xlu0 %949
    %v951 = vsel %vm745, %v826, -inf
    %952 = vmax.xlane.f32.xlu0 %v951
    %v953 = vpop.xlane.xlu0 %952
    %v954 = vsel %vm745, %v870, -inf
    %955 = vmax.xlane.f32.xlu0 %v954
    %v956 = vpop.xlane.xlu0 %955
    %v957 = vsel %vm745, %v872, -inf
    %958 = vmax.xlane.f32.xlu0 %v957
    %v959 = vpop.xlane.xlu0 %958
    %v960 = vsel %vm745, %v875, -inf
    %961 = vmax.xlane.f32.xlu0 %v960
    %v962 = vpop.xlane.xlu0 %961
    %v963 = vsel %vm745, %v877, -inf
    %964 = vmax.xlane.f32.xlu0 %v963
    %v965 = vpop.xlane.xlu0 %964
    %v966 = vsel %vm745, %v921, -inf
    %967 = vmax.xlane.f32.xlu0 %v966
    %v968 = vpop.xlane.xlu0 %967
    %v969 = vsel %vm745, %v923, -inf
    %970 = vmax.xlane.f32.xlu0 %v969
    %v971 = vpop.xlane.xlu0 %970
    %v972 = vsel %vm745, %v926, -inf
    %973 = vmax.xlane.f32.xlu0 %v972
    %v974 = vpop.xlane.xlu0 %973
    %v975 = vsel %vm745, %v928, -inf
    %976 = vmax.xlane.f32.xlu0 %v975
    %v977 = vpop.xlane.xlu0 %976
    %v978 = vsub.f32 %v768, %v932
    %v979 = vsub.f32 %v770, %v935
    %v980 = vsub.f32 %v773, %v938
    %v981 = vsub.f32 %v775, %v941
    %v982 = vsub.f32 %v819, %v944
    %v983 = vsub.f32 %v821, %v947
    %v984 = vsub.f32 %v824, %v950
    %v985 = vsub.f32 %v826, %v953
    %v986 = vsub.f32 %v870, %v956
    %v987 = vsub.f32 %v872, %v959
    %v988 = vsub.f32 %v875, %v962
    %v989 = vsub.f32 %v877, %v965
    %v990 = vsub.f32 %v921, %v968
    %v991 = vsub.f32 %v923, %v971
    %v992 = vsub.f32 %v926, %v974
    %v993 = vsub.f32 %v928, %v977
    %v994 = vmul.f32 %v978, 1.442695
    %v995 = vpow.pop %v994
    %v996 = vmul.f32 %v979, 1.442695
    %v997 = vpow.pop %v996
    %v998 = vmul.f32 %v980, 1.442695
    %v999 = vpow.pop %v998
    %v1000 = vmul.f32 %v981, 1.442695
    %v1001 = vpow.pop %v1000
    %v1002 = vmul.f32 %v982, 1.442695
    %v1003 = vpow.pop %v1002
    %v1004 = vmul.f32 %v983, 1.442695
    %v1005 = vpow.pop %v1004
    %v1006 = vmul.f32 %v984, 1.442695
    %v1007 = vpow.pop %v1006
    %v1008 = vmul.f32 %v985, 1.442695
    %v1009 = vpow.pop %v1008
    %v1010 = vmul.f32 %v986, 1.442695
    %v1011 = vpow.pop %v1010
    %v1012 = vmul.f32 %v987, 1.442695
    %v1013 = vpow.pop %v1012
    %v1014 = vmul.f32 %v988, 1.442695
    %v1015 = vpow.pop %v1014
    %v1016 = vmul.f32 %v989, 1.442695
    %v1017 = vpow.pop %v1016
    %v1018 = vmul.f32 %v990, 1.442695
    %v1019 = vpow.pop %v1018
    %v1020 = vmul.f32 %v991, 1.442695
    %v1021 = vpow.pop %v1020
    %v1022 = vmul.f32 %v992, 1.442695
    %v1023 = vpow.pop %v1022
    %v1024 = vmul.f32 %v993, 1.442695
    %v1025 = vpow.pop %v1024
    %v1026 = vsel %vm745, %v995, 0.0
    %1027 = vadd.xlane.f32.xlu0 %v1026
    %v1028 = vpop.xlane.xlu0 %1027
    %v1029 = vsel %vm745, %v997, 0.0
    %1030 = vadd.xlane.f32.xlu0 %v1029
    %v1031 = vpop.xlane.xlu0 %1030
    %v1032 = vsel %vm745, %v999, 0.0
    %1033 = vadd.xlane.f32.xlu0 %v1032
    %v1034 = vpop.xlane.xlu0 %1033
    %v1035 = vsel %vm745, %v1001, 0.0
    %1036 = vadd.xlane.f32.xlu0 %v1035
    %v1037 = vpop.xlane.xlu0 %1036
    %v1038 = vsel %vm745, %v1003, 0.0
    %1039 = vadd.xlane.f32.xlu0 %v1038
    %v1040 = vpop.xlane.xlu0 %1039
    %v1041 = vsel %vm745, %v1005, 0.0
    %1042 = vadd.xlane.f32.xlu0 %v1041
    %v1043 = vpop.xlane.xlu0 %1042
    %v1044 = vsel %vm745, %v1007, 0.0
    %1045 = vadd.xlane.f32.xlu0 %v1044
    %v1046 = vpop.xlane.xlu0 %1045
    %v1047 = vsel %vm745, %v1009, 0.0
    %1048 = vadd.xlane.f32.xlu0 %v1047
    %v1049 = vpop.xlane.xlu0 %1048
    %v1050 = vsel %vm745, %v1011, 0.0
    %1051 = vadd.xlane.f32.xlu0 %v1050
    %v1052 = vpop.xlane.xlu0 %1051
    %v1053 = vsel %vm745, %v1013, 0.0
    %1054 = vadd.xlane.f32.xlu0 %v1053
    %v1055 = vpop.xlane.xlu0 %1054
    %v1056 = vsel %vm745, %v1015, 0.0
    %1057 = vadd.xlane.f32.xlu0 %v1056
    %v1058 = vpop.xlane.xlu0 %1057
    %v1059 = vsel %vm745, %v1017, 0.0
    %1060 = vadd.xlane.f32.xlu0 %v1059
    %v1061 = vpop.xlane.xlu0 %1060
    %v1062 = vsel %vm745, %v1019, 0.0
    %1063 = vadd.xlane.f32.xlu0 %v1062
    %v1064 = vpop.xlane.xlu0 %1063
    %v1065 = vsel %vm745, %v1021, 0.0
    %1066 = vadd.xlane.f32.xlu0 %v1065
    %v1067 = vpop.xlane.xlu0 %1066
    %v1068 = vsel %vm745, %v1023, 0.0
    %1069 = vadd.xlane.f32.xlu0 %v1068
    %v1070 = vpop.xlane.xlu0 %1069
    %v1071 = vsel %vm745, %v1025, 0.0
    %1072 = vadd.xlane.f32.xlu0 %v1071
    %v1073 = vpop.xlane.xlu0 %1072
    %v1074 = vrcp.pop %v1028
    %v1075 = vrcp.pop %v1031
    %v1076 = vrcp.pop %v1034
    %v1077 = vrcp.pop %v1037
    %v1078 = vrcp.pop %v1040
    %v1079 = vrcp.pop %v1043
    %v1080 = vrcp.pop %v1046
    %v1081 = vrcp.pop %v1049
    %v1082 = vrcp.pop %v1052
    %v1083 = vrcp.pop %v1055
    %v1084 = vrcp.pop %v1058
    %v1085 = vrcp.pop %v1061
    %v1086 = vrcp.pop %v1064
    %v1087 = vrcp.pop %v1067
    %v1088 = vrcp.pop %v1070
    %v1089 = vrcp.pop %v1073
    %v1090 = vmul.f32 %v995, %v1074
    %v1091 = vmul.f32 %v997, %v1075
    %v1092 = vmul.f32 %v999, %v1076
    %v1093 = vmul.f32 %v1001, %v1077
    %v1094 = vmul.f32 %v1003, %v1078
    %v1095 = vmul.f32 %v1005, %v1079
    %v1096 = vmul.f32 %v1007, %v1080
    %v1097 = vmul.f32 %v1009, %v1081
    %v1098 = vmul.f32 %v1011, %v1082
    %v1099 = vmul.f32 %v1013, %v1083
    %v1100 = vmul.f32 %v1015, %v1084
    %v1101 = vmul.f32 %v1017, %v1085
    %v1102 = vmul.f32 %v1019, %v1086
    %v1103 = vmul.f32 %v1021, %v1087
    %v1104 = vmul.f32 %v1023, %v1088
    %v1105 = vmul.f32 %v1025, %v1089
    %v1106 = vpack.c.bf16 %v1090, %v1090
    %v1107 = vpack.c.bf16 %v1091, %v1091
    %v1108 = vpack.c.bf16 %v1092, %v1092
    %v1109 = vpack.c.bf16 %v1093, %v1093
    %v1110 = vpack.c.bf16 %v1094, %v1094
    %v1111 = vpack.c.bf16 %v1095, %v1095
    %v1112 = vpack.c.bf16 %v1096, %v1096
    %v1113 = vpack.c.bf16 %v1097, %v1097
    %v1114 = vpack.c.bf16 %v1098, %v1098
    %v1115 = vpack.c.bf16 %v1099, %v1099
    %v1116 = vpack.c.bf16 %v1100, %v1100
    %v1117 = vpack.c.bf16 %v1101, %v1101
    %v1118 = vpack.c.bf16 %v1102, %v1102
    %v1119 = vpack.c.bf16 %v1103, %v1103
    %v1120 = vpack.c.bf16 %v1104, %v1104
    %v1121 = vpack.c.bf16 %v1105, %v1105
    %v1126 = vunpack.c.l.b16 %v1106
    %v1127 = vunpack.c.l.b16 %v1107
    %v1128 = vunpack.c.l.b16 %v1108
    %v1129 = vunpack.c.l.b16 %v1109
    %v1130 = vpack.c.b16 %v1127, %v1126
    %v1131 = vpack.c.b16 %v1129, %v1128
    %v1136 = vunpack.c.l.b16 %v709
    %v1137 = vunpack.c.l.b16 %v710
    %v1138 = vunpack.c.l.b16 %v711
    %v1139 = vunpack.c.l.b16 %v712
    %v1140 = vpack.c.b16 %v1137, %v1136
    %v1141 = vpack.c.b16 %v1139, %v1138
    %v1145 = vsel %vm745, %v1130, 0
    %v1148 = vsel %vm745, %v1131, 0
    %1150 = vmatpush.bf16.msra.mxu0 0
    %1151 = vmatpush.bf16.msra.mxu0 0
    %1152 = vmatpush.bf16.msra.mxu0 0
    %1153 = vmatpush.bf16.msra.mxu0 0
    %1154 = vmatpush.bf16.msra.mxu0 0
    %1155 = vmatpush.bf16.msra.mxu0 0
    %1156 = vmatpush.bf16.msra.mxu0 %v1141
    %1157 = vmatpush.bf16.msra.mxu0 %v1140
    %1158 = vmatmul.bf16.gmra.mxu0 %v1145
    %v1159 = vpop.f32.mrf.mxu0
    %v1160 = vadd.f32 0.0, %v1159
    %v1161 = vpop.f32.mrf.mxu0
    %v1162 = vadd.f32 0.0, %v1161
    %1163 = vmatmul.bf16.gmra.mxu0 %v1148
    %v1164 = vpop.f32.mrf.mxu0
    %v1165 = vadd.f32 0.0, %v1164
    %v1166 = vpop.f32.mrf.mxu0
    %v1167 = vadd.f32 0.0, %v1166
    %1168 = vdwg.mxu0
    %v1173 = vunpack.c.l.b16 %v1110
    %v1174 = vunpack.c.l.b16 %v1111
    %v1175 = vunpack.c.l.b16 %v1112
    %v1176 = vunpack.c.l.b16 %v1113
    %v1177 = vpack.c.b16 %v1174, %v1173
    %v1178 = vpack.c.b16 %v1176, %v1175
    %v1183 = vunpack.c.l.b16 %v713
    %v1184 = vunpack.c.l.b16 %v714
    %v1185 = vunpack.c.l.b16 %v715
    %v1186 = vunpack.c.l.b16 %v716
    %v1187 = vpack.c.b16 %v1184, %v1183
    %v1188 = vpack.c.b16 %v1186, %v1185
    %v1192 = vsel %vm745, %v1177, 0
    %v1195 = vsel %vm745, %v1178, 0
    %1197 = vmatpush.bf16.msra.mxu0 0
    %1198 = vmatpush.bf16.msra.mxu0 0
    %1199 = vmatpush.bf16.msra.mxu0 0
    %1200 = vmatpush.bf16.msra.mxu0 0
    %1201 = vmatpush.bf16.msra.mxu0 0
    %1202 = vmatpush.bf16.msra.mxu0 0
    %1203 = vmatpush.bf16.msra.mxu0 %v1188
    %1204 = vmatpush.bf16.msra.mxu0 %v1187
    %1205 = vmatmul.bf16.gmra.mxu0 %v1192
    %v1206 = vpop.f32.mrf.mxu0
    %v1207 = vadd.f32 0.0, %v1206
    %v1208 = vpop.f32.mrf.mxu0
    %v1209 = vadd.f32 0.0, %v1208
    %1210 = vmatmul.bf16.gmra.mxu0 %v1195
    %v1211 = vpop.f32.mrf.mxu0
    %v1212 = vadd.f32 0.0, %v1211
    %v1213 = vpop.f32.mrf.mxu0
    %v1214 = vadd.f32 0.0, %v1213
    %1215 = vdwg.mxu0
    %v1220 = vunpack.c.l.b16 %v1114
    %v1221 = vunpack.c.l.b16 %v1115
    %v1222 = vunpack.c.l.b16 %v1116
    %v1223 = vunpack.c.l.b16 %v1117
    %v1224 = vpack.c.b16 %v1221, %v1220
    %v1225 = vpack.c.b16 %v1223, %v1222
    %v1230 = vunpack.c.l.b16 %v717
    %v1231 = vunpack.c.l.b16 %v718
    %v1232 = vunpack.c.l.b16 %v719
    %v1233 = vunpack.c.l.b16 %v720
    %v1234 = vpack.c.b16 %v1231, %v1230
    %v1235 = vpack.c.b16 %v1233, %v1232
    %v1239 = vsel %vm745, %v1224, 0
    %v1242 = vsel %vm745, %v1225, 0
    %1244 = vmatpush.bf16.msra.mxu0 0
    %1245 = vmatpush.bf16.msra.mxu0 0
    %1246 = vmatpush.bf16.msra.mxu0 0
    %1247 = vmatpush.bf16.msra.mxu0 0
    %1248 = vmatpush.bf16.msra.mxu0 0
    %1249 = vmatpush.bf16.msra.mxu0 0
    %1250 = vmatpush.bf16.msra.mxu0 %v1235
    %1251 = vmatpush.bf16.msra.mxu0 %v1234
    %1252 = vmatmul.bf16.gmra.mxu0 %v1239
    %v1253 = vpop.f32.mrf.mxu0
    %v1254 = vadd.f32 0.0, %v1253
    %v1255 = vpop.f32.mrf.mxu0
    %v1256 = vadd.f32 0.0, %v1255
    %1257 = vmatmul.bf16.gmra.mxu0 %v1242
    %v1258 = vpop.f32.mrf.mxu0
    %v1259 = vadd.f32 0.0, %v1258
    %v1260 = vpop.f32.mrf.mxu0
    %v1261 = vadd.f32 0.0, %v1260
    %1262 = vdwg.mxu0
    %v1267 = vunpack.c.l.b16 %v1118
    %v1268 = vunpack.c.l.b16 %v1119
    %v1269 = vunpack.c.l.b16 %v1120
    %v1270 = vunpack.c.l.b16 %v1121
    %v1271 = vpack.c.b16 %v1268, %v1267
    %v1272 = vpack.c.b16 %v1270, %v1269
    %v1277 = vunpack.c.l.b16 %v721
    %v1278 = vunpack.c.l.b16 %v722
    %v1279 = vunpack.c.l.b16 %v723
    %v1280 = vunpack.c.l.b16 %v724
    %v1281 = vpack.c.b16 %v1278, %v1277
    %v1282 = vpack.c.b16 %v1280, %v1279
    %v1286 = vsel %vm745, %v1271, 0
    %v1289 = vsel %vm745, %v1272, 0
    %1291 = vmatpush.bf16.msra.mxu0 0
    %1292 = vmatpush.bf16.msra.mxu0 0
    %1293 = vmatpush.bf16.msra.mxu0 0
    %1294 = vmatpush.bf16.msra.mxu0 0
    %1295 = vmatpush.bf16.msra.mxu0 0
    %1296 = vmatpush.bf16.msra.mxu0 0
    %1297 = vmatpush.bf16.msra.mxu0 %v1282
    %1298 = vmatpush.bf16.msra.mxu0 %v1281
    %1299 = vmatmul.bf16.gmra.mxu0 %v1286
    %v1300 = vpop.f32.mrf.mxu0
    %v1301 = vadd.f32 0.0, %v1300
    %v1302 = vpop.f32.mrf.mxu0
    %v1303 = vadd.f32 0.0, %v1302
    %1304 = vmatmul.bf16.gmra.mxu0 %v1289
    %v1305 = vpop.f32.mrf.mxu0
    %v1306 = vadd.f32 0.0, %v1305
    %v1307 = vpop.f32.mrf.mxu0
    %v1308 = vadd.f32 0.0, %v1307
    %1309 = vdwg.mxu0
    %1314 = vrot.lane.b32.xlu0 %v1207, 32
    %v1315 = vpop.permute.xlu0 %1314
    %1316 = vrot.lane.b32.xlu0 %v1209, 32
    %v1317 = vpop.permute.xlu0 %1316
    %1318 = vrot.lane.b32.xlu0 %v1212, 32
    %v1319 = vpop.permute.xlu0 %1318
    %1320 = vrot.lane.b32.xlu0 %v1214, 32
    %v1321 = vpop.permute.xlu0 %1320
    %1330 = vrot.lane.b32.xlu0 %v1254, 64
    %v1331 = vpop.permute.xlu0 %1330
    %1332 = vrot.lane.b32.xlu0 %v1256, 64
    %v1333 = vpop.permute.xlu0 %1332
    %1334 = vrot.lane.b32.xlu0 %v1259, 64
    %v1335 = vpop.permute.xlu0 %1334
    %1336 = vrot.lane.b32.xlu0 %v1261, 64
    %v1337 = vpop.permute.xlu0 %1336
    %1346 = vrot.lane.b32.xlu0 %v1301, 96
    %v1347 = vpop.permute.xlu0 %1346
    %1348 = vrot.lane.b32.xlu0 %v1303, 96
    %v1349 = vpop.permute.xlu0 %1348
    %1350 = vrot.lane.b32.xlu0 %v1306, 96
    %v1351 = vpop.permute.xlu0 %1350
    %1352 = vrot.lane.b32.xlu0 %v1308, 96
    %v1353 = vpop.permute.xlu0 %1352
    %v1358 = vsel %vm745, %v1160, %v1315
    %v1359 = vsel %vm745, %v1162, %v1317
    %v1360 = vsel %vm745, %v1165, %v1319
    %v1361 = vsel %vm745, %v1167, %v1321
    %vm1362 = vcmask 523264
    %v1363 = vsel %vm1362, %v1358, %v1331
    %v1364 = vsel %vm1362, %v1359, %v1333
    %v1365 = vsel %vm1362, %v1360, %v1335
    %v1366 = vsel %vm1362, %v1361, %v1337
    %vm1367 = vcmask 785408
    %v1368 = vsel %vm1367, %v1363, %v1347
    %v1369 = vsel %vm1367, %v1364, %v1349
    %v1370 = vsel %vm1367, %v1365, %v1351
    %v1371 = vsel %vm1367, %v1366, %v1353
    %v1372 = vpack.c.bf16 %v1369, %v1368
    %v1373 = vpack.c.bf16 %v1371, %v1370
    %v1374 = vld [vmem:[#allocation13] sm:$0xf]
    %v1375 = vld [vmem:[#allocation13 + $0x4] sm:$0xf]
    %v1376 = vld [vmem:[#allocation13 + $0x8] sm:$0xf]
    %v1377 = vld [vmem:[#allocation13 + $0xc] sm:$0xf]
    %v1378 = vld [vmem:[#allocation13 + $0x10] sm:$0xf]
    %v1379 = vld [vmem:[#allocation13 + $0x14] sm:$0xf]
    %v1380 = vld [vmem:[#allocation13 + $0x18] sm:$0xf]
    %v1381 = vld [vmem:[#allocation13 + $0x1c] sm:$0xf]
    %v1382 = vld [vmem:[#allocation13 + $0x20] sm:$0xf]
    %v1383 = vld [vmem:[#allocation13 + $0x24] sm:$0xf]
    %v1384 = vld [vmem:[#allocation13 + $0x28] sm:$0xf]
    %v1385 = vld [vmem:[#allocation13 + $0x2c] sm:$0xf]
    %v1386 = vld [vmem:[#allocation13 + $0x30] sm:$0xf]
    %v1387 = vld [vmem:[#allocation13 + $0x34] sm:$0xf]
    %v1388 = vld [vmem:[#allocation13 + $0x38] sm:$0xf]
    %v1389 = vld [vmem:[#allocation13 + $0x3c] sm:$0xf]
    %v1390 = vld [vmem:[%s7] sm:$0x1]
    %v1392 = vperm.slane %v1390, 0
    %v1410 = vunpack.c.l.b16 %v1374
    %v1411 = vunpack.c.l.b16 %v1375
    %v1412 = vunpack.c.l.b16 %v1376
    %v1413 = vunpack.c.l.b16 %v1377
    %v1414 = vunpack.c.l.b16 %v1378
    %v1415 = vunpack.c.l.b16 %v1379
    %v1416 = vunpack.c.l.b16 %v1380
    %v1417 = vunpack.c.l.b16 %v1381
    %v1418 = vunpack.c.l.b16 %v1382
    %v1419 = vunpack.c.l.b16 %v1383
    %v1420 = vunpack.c.l.b16 %v1384
    %v1421 = vunpack.c.l.b16 %v1385
    %v1422 = vunpack.c.l.b16 %v1386
    %v1423 = vunpack.c.l.b16 %v1387
    %v1424 = vunpack.c.l.b16 %v1388
    %v1425 = vunpack.c.l.b16 %v1389
    %v1426 = vpack.c.b16 %v1411, %v1410
    %v1427 = vpack.c.b16 %v1413, %v1412
    %v1428 = vpack.c.b16 %v1415, %v1414
    %v1429 = vpack.c.b16 %v1417, %v1416
    %v1430 = vpack.c.b16 %v1419, %v1418
    %v1431 = vpack.c.b16 %v1421, %v1420
    %v1432 = vpack.c.b16 %v1423, %v1422
    %v1433 = vpack.c.b16 %v1425, %v1424
    %1442 = vmatpush.bf16.msra.mxu0 %v1433
    %1443 = vmatpush.bf16.msra.mxu0 %v1432
    %1444 = vmatpush.bf16.msra.mxu0 %v1431
    %1445 = vmatpush.bf16.msra.mxu0 %v1430
    %1446 = vmatpush.bf16.msra.mxu0 %v1429
    %1447 = vmatpush.bf16.msra.mxu0 %v1428
    %1448 = vmatpush.bf16.msra.mxu0 %v1427
    %1449 = vmatpush.bf16.msra.mxu0 %v1426
    %1450 = vmatmul.bf16.gmra.mxu0 %v1372
    %v1451 = vpop.f32.mrf.mxu0
    %v1452 = vadd.f32 %v1392, %v1451
    %v1453 = vpop.f32.mrf.mxu0
    %v1454 = vadd.f32 %v1392, %v1453
    %1455 = vmatmul.bf16.gmra.mxu0 %v1373
    %v1456 = vpop.f32.mrf.mxu0
    %v1457 = vadd.f32 %v1392, %v1456
    %v1458 = vpop.f32.mrf.mxu0
    %v1459 = vadd.f32 %v1392, %v1458
    %1460 = vdwg.mxu0
    %v1461 = vadd.f32 %v326, %v1452
    %v1462 = vadd.f32 %v327, %v1454
    %v1463 = vadd.f32 %v328, %v1457
    %v1464 = vadd.f32 %v329, %v1459
    %v1465 = vld [vmem:[#allocation14] sm:$0x1]
    %v1466 = vld [vmem:[%s9] sm:$0x1]
    %1467 = vadd.xlane.f32.xlu0 %v1461
    %v1468 = vpop.xlane.xlu0 %1467
    %1469 = vadd.xlane.f32.xlu0 %v1462
    %v1470 = vpop.xlane.xlu0 %1469
    %1471 = vadd.xlane.f32.xlu0 %v1463
    %v1472 = vpop.xlane.xlu0 %1471
    %1473 = vadd.xlane.f32.xlu0 %v1464
    %v1474 = vpop.xlane.xlu0 %1473
    %v1475 = vmul.f32 %v1468, %v231
    %v1476 = vmul.f32 %v1470, %v231
    %v1477 = vmul.f32 %v1472, %v231
    %v1478 = vmul.f32 %v1474, %v231
    %v1479 = vmul.f32 %v1461, %v1461
    %v1480 = vmul.f32 %v1462, %v1462
    %v1481 = vmul.f32 %v1463, %v1463
    %v1482 = vmul.f32 %v1464, %v1464
    %1483 = vadd.xlane.f32.xlu0 %v1479
    %v1484 = vpop.xlane.xlu0 %1483
    %1485 = vadd.xlane.f32.xlu0 %v1480
    %v1486 = vpop.xlane.xlu0 %1485
    %1487 = vadd.xlane.f32.xlu0 %v1481
    %v1488 = vpop.xlane.xlu0 %1487
    %1489 = vadd.xlane.f32.xlu0 %v1482
    %v1490 = vpop.xlane.xlu0 %1489
    %v1491 = vmul.f32 %v1484, %v231
    %v1492 = vmul.f32 %v1486, %v231
    %v1493 = vmul.f32 %v1488, %v231
    %v1494 = vmul.f32 %v1490, %v231
    %v1495 = vmul.f32 %v1475, %v1475
    %v1496 = vmul.f32 %v1476, %v1476
    %v1497 = vmul.f32 %v1477, %v1477
    %v1498 = vmul.f32 %v1478, %v1478
    %v1499 = vsub.f32 %v1491, %v1495
    %v1500 = vsub.f32 %v1492, %v1496
    %v1501 = vsub.f32 %v1493, %v1497
    %v1502 = vsub.f32 %v1494, %v1498
    %v1503 = vmax.f32 %v1499, 0.0
    %v1504 = vmax.f32 %v1500, 0.0
    %v1505 = vmax.f32 %v1501, 0.0
    %v1506 = vmax.f32 %v1502, 0.0
    %v1507 = vsub.f32 %v1461, %v1475
    %v1508 = vsub.f32 %v1462, %v1476
    %v1509 = vsub.f32 %v1463, %v1477
    %v1510 = vsub.f32 %v1464, %v1478
    %v1511 = vadd.f32 %v1503, 1e-12
    %v1512 = vadd.f32 %v1504, 1e-12
    %v1513 = vadd.f32 %v1505, 1e-12
    %v1514 = vadd.f32 %v1506, 1e-12
    %v1515 = vrsqrt.pop %v1511
    %v1516 = vmul.f32 %v1515, %v1511
    %v1517 = vmul.f32 %v1516, %v1515
    %v1518 = vmul.f32 0.5, %v1517
    %v1519 = vsub.f32 1.5, %v1518
    %v1520 = vmul.f32 %v1515, %v1519
    %vm1521 = vweird.f32 %v1511
    %vm1522 = vweird.f32 %v1515
    %vm1523 = vmor %vm1521, %vm1522
    %v1524 = vsel %vm1523, %v1515, %v1520
    %v1525 = vrsqrt.pop %v1512
    %v1526 = vmul.f32 %v1525, %v1512
    %v1527 = vmul.f32 %v1526, %v1525
    %v1528 = vmul.f32 0.5, %v1527
    %v1529 = vsub.f32 1.5, %v1528
    %v1530 = vmul.f32 %v1525, %v1529
    %vm1531 = vweird.f32 %v1512
    %vm1532 = vweird.f32 %v1525
    %vm1533 = vmor %vm1531, %vm1532
    %v1534 = vsel %vm1533, %v1525, %v1530
    %v1535 = vrsqrt.pop %v1513
    %v1536 = vmul.f32 %v1535, %v1513
    %v1537 = vmul.f32 %v1536, %v1535
    %v1538 = vmul.f32 0.5, %v1537
    %v1539 = vsub.f32 1.5, %v1538
    %v1540 = vmul.f32 %v1535, %v1539
    %vm1541 = vweird.f32 %v1513
    %vm1542 = vweird.f32 %v1535
    %vm1543 = vmor %vm1541, %vm1542
    %v1544 = vsel %vm1543, %v1535, %v1540
    %v1545 = vrsqrt.pop %v1514
    %v1546 = vmul.f32 %v1545, %v1514
    %v1547 = vmul.f32 %v1546, %v1545
    %v1548 = vmul.f32 0.5, %v1547
    %v1549 = vsub.f32 1.5, %v1548
    %v1550 = vmul.f32 %v1545, %v1549
    %vm1551 = vweird.f32 %v1514
    %vm1552 = vweird.f32 %v1545
    %vm1553 = vmor %vm1551, %vm1552
    %v1554 = vsel %vm1553, %v1545, %v1550
    %v1555 = vmul.f32 %v1507, %v1524
    %v1556 = vmul.f32 %v1508, %v1534
    %v1557 = vmul.f32 %v1509, %v1544
    %v1558 = vmul.f32 %v1510, %v1554
    %v1560 = vperm.slane %v1465, 0
    %v1562 = vmul.f32 %v1555, %v1560
    %v1563 = vmul.f32 %v1556, %v1560
    %v1564 = vmul.f32 %v1557, %v1560
    %v1565 = vmul.f32 %v1558, %v1560
    %v1567 = vperm.slane %v1466, 0
    %v1569 = vadd.f32 %v1562, %v1567
    %v1570 = vadd.f32 %v1563, %v1567
    %v1571 = vadd.f32 %v1564, %v1567
    %v1572 = vadd.f32 %v1565, %v1567
    %v1573 = vpack.c.bf16 %v1570, %v1569
    %v1574 = vpack.c.bf16 %v1572, %v1571
    %v1575 = vld [vmem:[#allocation16] sm:$0xff]
    %v1576 = vld [vmem:[#allocation16 + $0x8] sm:$0xff]
    %v1577 = vld [vmem:[#allocation16 + $0x10] sm:$0xff]
    %v1578 = vld [vmem:[#allocation16 + $0x18] sm:$0xff]
    %v1579 = vld [vmem:[#allocation16 + $0x20] sm:$0xff]
    %v1580 = vld [vmem:[#allocation16 + $0x28] sm:$0xff]
    %v1581 = vld [vmem:[#allocation16 + $0x30] sm:$0xff]
    %v1582 = vld [vmem:[#allocation16 + $0x38] sm:$0xff]
    %v1583 = vld [vmem:[#allocation16 + $0x40] sm:$0xff]
    %v1584 = vld [vmem:[#allocation16 + $0x48] sm:$0xff]
    %v1585 = vld [vmem:[#allocation16 + $0x50] sm:$0xff]
    %v1586 = vld [vmem:[#allocation16 + $0x58] sm:$0xff]
    %v1587 = vld [vmem:[#allocation16 + $0x60] sm:$0xff]
    %v1588 = vld [vmem:[#allocation16 + $0x68] sm:$0xff]
    %v1589 = vld [vmem:[#allocation16 + $0x70] sm:$0xff]
    %v1590 = vld [vmem:[#allocation16 + $0x78] sm:$0xff]
    %v1591 = vld [vmem:[%s11] sm:$0x3]
    %v1593 = vperm.slane %v1591, 0
    %v1594 = vperm.slane %v1591, 1
    %v1613 = vunpack.c.l.b16 %v1575
    %v1614 = vunpack.c.h.b16 %v1575
    %v1615 = vunpack.c.l.b16 %v1576
    %v1616 = vunpack.c.h.b16 %v1576
    %v1617 = vunpack.c.l.b16 %v1577
    %v1618 = vunpack.c.h.b16 %v1577
    %v1619 = vunpack.c.l.b16 %v1578
    %v1620 = vunpack.c.h.b16 %v1578
    %v1621 = vunpack.c.l.b16 %v1579
    %v1622 = vunpack.c.h.b16 %v1579
    %v1623 = vunpack.c.l.b16 %v1580
    %v1624 = vunpack.c.h.b16 %v1580
    %v1625 = vunpack.c.l.b16 %v1581
    %v1626 = vunpack.c.h.b16 %v1581
    %v1627 = vunpack.c.l.b16 %v1582
    %v1628 = vunpack.c.h.b16 %v1582
    %v1629 = vunpack.c.l.b16 %v1583
    %v1630 = vunpack.c.h.b16 %v1583
    %v1631 = vunpack.c.l.b16 %v1584
    %v1632 = vunpack.c.h.b16 %v1584
    %v1633 = vunpack.c.l.b16 %v1585
    %v1634 = vunpack.c.h.b16 %v1585
    %v1635 = vunpack.c.l.b16 %v1586
    %v1636 = vunpack.c.h.b16 %v1586
    %v1637 = vunpack.c.l.b16 %v1587
    %v1638 = vunpack.c.h.b16 %v1587
    %v1639 = vunpack.c.l.b16 %v1588
    %v1640 = vunpack.c.h.b16 %v1588
    %v1641 = vunpack.c.l.b16 %v1589
    %v1642 = vunpack.c.h.b16 %v1589
    %v1643 = vunpack.c.l.b16 %v1590
    %v1644 = vunpack.c.h.b16 %v1590
    %v1645 = vpack.c.b16 %v1615, %v1613
    %v1646 = vpack.c.b16 %v1616, %v1614
    %v1647 = vpack.c.b16 %v1619, %v1617
    %v1648 = vpack.c.b16 %v1620, %v1618
    %v1649 = vpack.c.b16 %v1623, %v1621
    %v1650 = vpack.c.b16 %v1624, %v1622
    %v1651 = vpack.c.b16 %v1627, %v1625
    %v1652 = vpack.c.b16 %v1628, %v1626
    %v1653 = vpack.c.b16 %v1631, %v1629
    %v1654 = vpack.c.b16 %v1632, %v1630
    %v1655 = vpack.c.b16 %v1635, %v1633
    %v1656 = vpack.c.b16 %v1636, %v1634
    %v1657 = vpack.c.b16 %v1639, %v1637
    %v1658 = vpack.c.b16 %v1640, %v1638
    %v1659 = vpack.c.b16 %v1643, %v1641
    %v1660 = vpack.c.b16 %v1644, %v1642
    %1677 = vmatpush.bf16.msra.mxu0 %v1659
    %1678 = vmatpush.bf16.msra.mxu0 %v1657
    %1679 = vmatpush.bf16.msra.mxu0 %v1655
    %1680 = vmatpush.bf16.msra.mxu0 %v1653
    %1681 = vmatpush.bf16.msra.mxu0 %v1651
    %1682 = vmatpush.bf16.msra.mxu0 %v1649
    %1683 = vmatpush.bf16.msra.mxu0 %v1647
    %1684 = vmatpush.bf16.msra.mxu0 %v1645
    %1685 = vmatmul.bf16.gmra.mxu0 %v1573
    %v1686 = vpop.f32.mrf.mxu0
    %v1687 = vadd.f32 %v1593, %v1686
    %v1688 = vpop.f32.mrf.mxu0
    %v1689 = vadd.f32 %v1593, %v1688
    %1690 = vmatmul.bf16.gmra.mxu0 %v1574
    %v1691 = vpop.f32.mrf.mxu0
    %v1692 = vadd.f32 %v1593, %v1691
    %v1693 = vpop.f32.mrf.mxu0
    %v1694 = vadd.f32 %v1593, %v1693
    %1695 = vdwg.mxu0
    %1696 = vmatpush.bf16.msra.mxu0 %v1660
    %1697 = vmatpush.bf16.msra.mxu0 %v1658
    %1698 = vmatpush.bf16.msra.mxu0 %v1656
    %1699 = vmatpush.bf16.msra.mxu0 %v1654
    %1700 = vmatpush.bf16.msra.mxu0 %v1652
    %1701 = vmatpush.bf16.msra.mxu0 %v1650
    %1702 = vmatpush.bf16.msra.mxu0 %v1648
    %1703 = vmatpush.bf16.msra.mxu0 %v1646
    %1704 = vmatmul.bf16.gmra.mxu0 %v1573
    %v1705 = vpop.f32.mrf.mxu0
    %v1706 = vadd.f32 %v1594, %v1705
    %v1707 = vpop.f32.mrf.mxu0
    %v1708 = vadd.f32 %v1594, %v1707
    %1709 = vmatmul.bf16.gmra.mxu0 %v1574
    %v1710 = vpop.f32.mrf.mxu0
    %v1711 = vadd.f32 %v1594, %v1710
    %v1712 = vpop.f32.mrf.mxu0
    %v1713 = vadd.f32 %v1594, %v1712
    %1714 = vdwg.mxu0
    %v1715 = vmul.f32 %v1687, 0.5
    %v1716 = vmul.f32 %v1706, 0.5
    %v1717 = vmul.f32 %v1689, 0.5
    %v1718 = vmul.f32 %v1708, 0.5
    %v1719 = vmul.f32 %v1692, 0.5
    %v1720 = vmul.f32 %v1711, 0.5
    %v1721 = vmul.f32 %v1694, 0.5
    %v1722 = vmul.f32 %v1713, 0.5
    %v1723 = vmul.f32 %v1687, 0.044715
    %v1724 = vmul.f32 %v1706, 0.044715
    %v1725 = vmul.f32 %v1689, 0.044715
    %v1726 = vmul.f32 %v1708, 0.044715
    %v1727 = vmul.f32 %v1692, 0.044715
    %v1728 = vmul.f32 %v1711, 0.044715
    %v1729 = vmul.f32 %v1694, 0.044715
    %v1730 = vmul.f32 %v1713, 0.044715
    %v1731 = vmul.f32 %v1723, %v1687
    %v1732 = vmul.f32 %v1724, %v1706
    %v1733 = vmul.f32 %v1725, %v1689
    %v1734 = vmul.f32 %v1726, %v1708
    %v1735 = vmul.f32 %v1727, %v1692
    %v1736 = vmul.f32 %v1728, %v1711
    %v1737 = vmul.f32 %v1729, %v1694
    %v1738 = vmul.f32 %v1730, %v1713
    %v1739 = vmul.f32 %v1731, %v1687
    %v1740 = vmul.f32 %v1732, %v1706
    %v1741 = vmul.f32 %v1733, %v1689
    %v1742 = vmul.f32 %v1734, %v1708
    %v1743 = vmul.f32 %v1735, %v1692
    %v1744 = vmul.f32 %v1736, %v1711
    %v1745 = vmul.f32 %v1737, %v1694
    %v1746 = vmul.f32 %v1738, %v1713
    %v1747 = vadd.f32 %v1687, %v1739
    %v1748 = vadd.f32 %v1706, %v1740
    %v1749 = vadd.f32 %v1689, %v1741
    %v1750 = vadd.f32 %v1708, %v1742
    %v1751 = vadd.f32 %v1692, %v1743
    %v1752 = vadd.f32 %v1711, %v1744
    %v1753 = vadd.f32 %v1694, %v1745
    %v1754 = vadd.f32 %v1713, %v1746
    %v1755 = vmul.f32 %v1747, 0.7978846
    %v1756 = vmul.f32 %v1748, 0.7978846
    %v1757 = vmul.f32 %v1749, 0.7978846
    %v1758 = vmul.f32 %v1750, 0.7978846
    %v1759 = vmul.f32 %v1751, 0.7978846
    %v1760 = vmul.f32 %v1752, 0.7978846
    %v1761 = vmul.f32 %v1753, 0.7978846
    %v1762 = vmul.f32 %v1754, 0.7978846
    %v1763 = vtanh.pop %v1755
    %v1764 = vtanh.pop %v1756
    %v1765 = vtanh.pop %v1757
    %v1766 = vtanh.pop %v1758
    %v1767 = vtanh.pop %v1759
    %v1768 = vtanh.pop %v1760
    %v1769 = vtanh.pop %v1761
    %v1770 = vtanh.pop %v1762
    %v1771 = vadd.f32 %v1763, 1.0
    %v1772 = vadd.f32 %v1764, 1.0
    %v1773 = vadd.f32 %v1765, 1.0
    %v1774 = vadd.f32 %v1766, 1.0
    %v1775 = vadd.f32 %v1767, 1.0
    %v1776 = vadd.f32 %v1768, 1.0
    %v1777 = vadd.f32 %v1769, 1.0
    %v1778 = vadd.f32 %v1770, 1.0
    %v1779 = vmul.f32 %v1715, %v1771
    %v1780 = vmul.f32 %v1716, %v1772
    %v1781 = vmul.f32 %v1717, %v1773
    %v1782 = vmul.f32 %v1718, %v1774
    %v1783 = vmul.f32 %v1719, %v1775
    %v1784 = vmul.f32 %v1720, %v1776
    %v1785 = vmul.f32 %v1721, %v1777
    %v1786 = vmul.f32 %v1722, %v1778
    %v1787 = vpack.c.bf16 %v1781, %v1779
    %v1788 = vpack.c.bf16 %v1782, %v1780
    %v1789 = vpack.c.bf16 %v1785, %v1783
    %v1790 = vpack.c.bf16 %v1786, %v1784
    %v1791 = vld [vmem:[#allocation17] sm:$0xf]
    %v1792 = vld [vmem:[#allocation17 + $0x4] sm:$0xf]
    %v1793 = vld [vmem:[#allocation17 + $0x8] sm:$0xf]
    %v1794 = vld [vmem:[#allocation17 + $0xc] sm:$0xf]
    %v1795 = vld [vmem:[#allocation17 + $0x10] sm:$0xf]
    %v1796 = vld [vmem:[#allocation17 + $0x14] sm:$0xf]
    %v1797 = vld [vmem:[#allocation17 + $0x18] sm:$0xf]
    %v1798 = vld [vmem:[#allocation17 + $0x1c] sm:$0xf]
    %v1799 = vld [vmem:[#allocation17 + $0x20] sm:$0xf]
    %v1800 = vld [vmem:[#allocation17 + $0x24] sm:$0xf]
    %v1801 = vld [vmem:[#allocation17 + $0x28] sm:$0xf]
    %v1802 = vld [vmem:[#allocation17 + $0x2c] sm:$0xf]
    %v1803 = vld [vmem:[#allocation17 + $0x30] sm:$0xf]
    %v1804 = vld [vmem:[#allocation17 + $0x34] sm:$0xf]
    %v1805 = vld [vmem:[#allocation17 + $0x38] sm:$0xf]
    %v1806 = vld [vmem:[#allocation17 + $0x3c] sm:$0xf]
    %v1807 = vld [vmem:[#allocation17 + $0x40] sm:$0xf]
    %v1808 = vld [vmem:[#allocation17 + $0x44] sm:$0xf]
    %v1809 = vld [vmem:[#allocation17 + $0x48] sm:$0xf]
    %v1810 = vld [vmem:[#allocation17 + $0x4c] sm:$0xf]
    %v1811 = vld [vmem:[#allocation17 + $0x50] sm:$0xf]
    %v1812 = vld [vmem:[#allocation17 + $0x54] sm:$0xf]
    %v1813 = vld [vmem:[#allocation17 + $0x58] sm:$0xf]
    %v1814 = vld [vmem:[#allocation17 + $0x5c] sm:$0xf]
    %v1815 = vld [vmem:[#allocation17 + $0x60] sm:$0xf]
    %v1816 = vld [vmem:[#allocation17 + $0x64] sm:$0xf]
    %v1817 = vld [vmem:[#allocation17 + $0x68] sm:$0xf]
    %v1818 = vld [vmem:[#allocation17 + $0x6c] sm:$0xf]
    %v1819 = vld [vmem:[#allocation17 + $0x70] sm:$0xf]
    %v1820 = vld [vmem:[#allocation17 + $0x74] sm:$0xf]
    %v1821 = vld [vmem:[#allocation17 + $0x78] sm:$0xf]
    %v1822 = vld [vmem:[#allocation17 + $0x7c] sm:$0xf]
    %v1823 = vld [vmem:[%s13] sm:$0x1]
    %v1825 = vperm.slane %v1823, 0
    %v1859 = vunpack.c.l.b16 %v1791
    %v1860 = vunpack.c.l.b16 %v1792
    %v1861 = vunpack.c.l.b16 %v1793
    %v1862 = vunpack.c.l.b16 %v1794
    %v1863 = vunpack.c.l.b16 %v1795
    %v1864 = vunpack.c.l.b16 %v1796
    %v1865 = vunpack.c.l.b16 %v1797
    %v1866 = vunpack.c.l.b16 %v1798
    %v1867 = vunpack.c.l.b16 %v1799
    %v1868 = vunpack.c.l.b16 %v1800
    %v1869 = vunpack.c.l.b16 %v1801
    %v1870 = vunpack.c.l.b16 %v1802
    %v1871 = vunpack.c.l.b16 %v1803
    %v1872 = vunpack.c.l.b16 %v1804
    %v1873 = vunpack.c.l.b16 %v1805
    %v1874 = vunpack.c.l.b16 %v1806
    %v1875 = vunpack.c.l.b16 %v1807
    %v1876 = vunpack.c.l.b16 %v1808
    %v1877 = vunpack.c.l.b16 %v1809
    %v1878 = vunpack.c.l.b16 %v1810
    %v1879 = vunpack.c.l.b16 %v1811
    %v1880 = vunpack.c.l.b16 %v1812
    %v1881 = vunpack.c.l.b16 %v1813
    %v1882 = vunpack.c.l.b16 %v1814
    %v1883 = vunpack.c.l.b16 %v1815
    %v1884 = vunpack.c.l.b16 %v1816
    %v1885 = vunpack.c.l.b16 %v1817
    %v1886 = vunpack.c.l.b16 %v1818
    %v1887 = vunpack.c.l.b16 %v1819
    %v1888 = vunpack.c.l.b16 %v1820
    %v1889 = vunpack.c.l.b16 %v1821
    %v1890 = vunpack.c.l.b16 %v1822
    %v1891 = vpack.c.b16 %v1860, %v1859
    %v1892 = vpack.c.b16 %v1862, %v1861
    %v1893 = vpack.c.b16 %v1864, %v1863
    %v1894 = vpack.c.b16 %v1866, %v1865
    %v1895 = vpack.c.b16 %v1868, %v1867
    %v1896 = vpack.c.b16 %v1870, %v1869
    %v1897 = vpack.c.b16 %v1872, %v1871
    %v1898 = vpack.c.b16 %v1874, %v1873
    %v1899 = vpack.c.b16 %v1876, %v1875
    %v1900 = vpack.c.b16 %v1878, %v1877
    %v1901 = vpack.c.b16 %v1880, %v1879
    %v1902 = vpack.c.b16 %v1882, %v1881
    %v1903 = vpack.c.b16 %v1884, %v1883
    %v1904 = vpack.c.b16 %v1886, %v1885
    %v1905 = vpack.c.b16 %v1888, %v1887
    %v1906 = vpack.c.b16 %v1890, %v1889
    %1923 = vmatpush.bf16.msra.mxu0 %v1898
    %1924 = vmatpush.bf16.msra.mxu0 %v1897
    %1925 = vmatpush.bf16.msra.mxu0 %v1896
    %1926 = vmatpush.bf16.msra.mxu0 %v1895
    %1927 = vmatpush.bf16.msra.mxu0 %v1894
    %1928 = vmatpush.bf16.msra.mxu0 %v1893
    %1929 = vmatpush.bf16.msra.mxu0 %v1892
    %1930 = vmatpush.bf16.msra.mxu0 %v1891
    %1931 = vmatmul.bf16.gmra.mxu0 %v1787
    %v1932 = vpop.f32.mrf.mxu0
    %v1933 = vadd.f32 %v1825, %v1932
    %v1934 = vpop.f32.mrf.mxu0
    %v1935 = vadd.f32 %v1825, %v1934
    %1936 = vmatmul.bf16.gmra.mxu0 %v1789
    %v1937 = vpop.f32.mrf.mxu0
    %v1938 = vadd.f32 %v1825, %v1937
    %v1939 = vpop.f32.mrf.mxu0
    %v1940 = vadd.f32 %v1825, %v1939
    %1941 = vdwg.mxu0
    %1942 = vmatpush.bf16.msra.mxu0 %v1906
    %1943 = vmatpush.bf16.msra.mxu0 %v1905
    %1944 = vmatpush.bf16.msra.mxu0 %v1904
    %1945 = vmatpush.bf16.msra.mxu0 %v1903
    %1946 = vmatpush.bf16.msra.mxu0 %v1902
    %1947 = vmatpush.bf16.msra.mxu0 %v1901
    %1948 = vmatpush.bf16.msra.mxu0 %v1900
    %1949 = vmatpush.bf16.msra.mxu0 %v1899
    %1950 = vmatmul.bf16.gmra.mxu0 %v1788
    %v1951 = vpop.f32.mrf.mxu0
    %v1952 = vadd.f32 %v1933, %v1951
    %v1953 = vpop.f32.mrf.mxu0
    %v1954 = vadd.f32 %v1935, %v1953
    %1955 = vmatmul.bf16.gmra.mxu0 %v1790
    %v1956 = vpop.f32.mrf.mxu0
    %v1957 = vadd.f32 %v1938, %v1956
    %v1958 = vpop.f32.mrf.mxu0
    %v1959 = vadd.f32 %v1940, %v1958
    %1960 = vdwg.mxu0
    %v1961 = vadd.f32 %v1569, %v1952
    %v1962 = vadd.f32 %v1570, %v1954
    %v1963 = vadd.f32 %v1571, %v1957
    %v1964 = vadd.f32 %v1572, %v1959
    %v1965 = vld [vmem:[%s14] sm:$0x1]
    %v1966 = vld [vmem:[%s15] sm:$0x1]
    %1967 = vadd.xlane.f32.xlu0 %v1961
    %v1968 = vpop.xlane.xlu0 %1967
    %1969 = vadd.xlane.f32.xlu0 %v1962
    %v1970 = vpop.xlane.xlu0 %1969
    %1971 = vadd.xlane.f32.xlu0 %v1963
    %v1972 = vpop.xlane.xlu0 %1971
    %1973 = vadd.xlane.f32.xlu0 %v1964
    %v1974 = vpop.xlane.xlu0 %1973
    %v1975 = vmul.f32 %v1968, %v231
    %v1976 = vmul.f32 %v1970, %v231
    %v1977 = vmul.f32 %v1972, %v231
    %v1978 = vmul.f32 %v1974, %v231
    %v1979 = vmul.f32 %v1961, %v1961
    %v1980 = vmul.f32 %v1962, %v1962
    %v1981 = vmul.f32 %v1963, %v1963
    %v1982 = vmul.f32 %v1964, %v1964
    %1983 = vadd.xlane.f32.xlu0 %v1979
    %v1984 = vpop.xlane.xlu0 %1983
    %1985 = vadd.xlane.f32.xlu0 %v1980
    %v1986 = vpop.xlane.xlu0 %1985
    %1987 = vadd.xlane.f32.xlu0 %v1981
    %v1988 = vpop.xlane.xlu0 %1987
    %1989 = vadd.xlane.f32.xlu0 %v1982
    %v1990 = vpop.xlane.xlu0 %1989
    %v1991 = vmul.f32 %v1984, %v231
    %v1992 = vmul.f32 %v1986, %v231
    %v1993 = vmul.f32 %v1988, %v231
    %v1994 = vmul.f32 %v1990, %v231
    %v1995 = vmul.f32 %v1975, %v1975
    %v1996 = vmul.f32 %v1976, %v1976
    %v1997 = vmul.f32 %v1977, %v1977
    %v1998 = vmul.f32 %v1978, %v1978
    %v1999 = vsub.f32 %v1991, %v1995
    %v2000 = vsub.f32 %v1992, %v1996
    %v2001 = vsub.f32 %v1993, %v1997
    %v2002 = vsub.f32 %v1994, %v1998
    %v2003 = vmax.f32 %v1999, 0.0
    %v2004 = vmax.f32 %v2000, 0.0
    %v2005 = vmax.f32 %v2001, 0.0
    %v2006 = vmax.f32 %v2002, 0.0
    %v2007 = vsub.f32 %v1961, %v1975
    %v2008 = vsub.f32 %v1962, %v1976
    %v2009 = vsub.f32 %v1963, %v1977
    %v2010 = vsub.f32 %v1964, %v1978
    %v2011 = vadd.f32 %v2003, 1e-12
    %v2012 = vadd.f32 %v2004, 1e-12
    %v2013 = vadd.f32 %v2005, 1e-12
    %v2014 = vadd.f32 %v2006, 1e-12
    %v2015 = vrsqrt.pop %v2011
    %v2016 = vmul.f32 %v2015, %v2011
    %v2017 = vmul.f32 %v2016, %v2015
    %v2018 = vmul.f32 0.5, %v2017
    %v2019 = vsub.f32 1.5, %v2018
    %v2020 = vmul.f32 %v2015, %v2019
    %vm2021 = vweird.f32 %v2011
    %vm2022 = vweird.f32 %v2015
    %vm2023 = vmor %vm2021, %vm2022
    %v2024 = vsel %vm2023, %v2015, %v2020
    %v2025 = vrsqrt.pop %v2012
    %v2026 = vmul.f32 %v2025, %v2012
    %v2027 = vmul.f32 %v2026, %v2025
    %v2028 = vmul.f32 0.5, %v2027
    %v2029 = vsub.f32 1.5, %v2028
    %v2030 = vmul.f32 %v2025, %v2029
    %vm2031 = vweird.f32 %v2012
    %vm2032 = vweird.f32 %v2025
    %vm2033 = vmor %vm2031, %vm2032
    %v2034 = vsel %vm2033, %v2025, %v2030
    %v2035 = vrsqrt.pop %v2013
    %v2036 = vmul.f32 %v2035, %v2013
    %v2037 = vmul.f32 %v2036, %v2035
    %v2038 = vmul.f32 0.5, %v2037
    %v2039 = vsub.f32 1.5, %v2038
    %v2040 = vmul.f32 %v2035, %v2039
    %vm2041 = vweird.f32 %v2013
    %vm2042 = vweird.f32 %v2035
    %vm2043 = vmor %vm2041, %vm2042
    %v2044 = vsel %vm2043, %v2035, %v2040
    %v2045 = vrsqrt.pop %v2014
    %v2046 = vmul.f32 %v2045, %v2014
    %v2047 = vmul.f32 %v2046, %v2045
    %v2048 = vmul.f32 0.5, %v2047
    %v2049 = vsub.f32 1.5, %v2048
    %v2050 = vmul.f32 %v2045, %v2049
    %vm2051 = vweird.f32 %v2014
    %vm2052 = vweird.f32 %v2045
    %vm2053 = vmor %vm2051, %vm2052
    %v2054 = vsel %vm2053, %v2045, %v2050
    %v2055 = vmul.f32 %v2007, %v2024
    %v2056 = vmul.f32 %v2008, %v2034
    %v2057 = vmul.f32 %v2009, %v2044
    %v2058 = vmul.f32 %v2010, %v2054
    %v2060 = vperm.slane %v1965, 0
    %v2062 = vmul.f32 %v2055, %v2060
    %v2063 = vmul.f32 %v2056, %v2060
    %v2064 = vmul.f32 %v2057, %v2060
    %v2065 = vmul.f32 %v2058, %v2060
    %v2067 = vperm.slane %v1966, 0
    %v2069 = vadd.f32 %v2062, %v2067
    %v2070 = vadd.f32 %v2063, %v2067
    %v2071 = vadd.f32 %v2064, %v2067
    %v2072 = vadd.f32 %v2065, %v2067
    %v2073 = vpack.c.bf16 %v2070, %v2069
    %v2074 = vpack.c.bf16 %v2072, %v2071
    %s2075 = scalar_lea.vmem [#allocation10], 192
    %v2076 = vld [vmem:[%s2075] sm:$0xff]
    %v2077 = vld [vmem:[%s2075 + $0x8] sm:$0xf]
    %v2078 = vld [vmem:[%s2075 + $0xc] sm:$0xff]
    %v2079 = vld [vmem:[%s2075 + $0x14] sm:$0xf]
    %v2080 = vld [vmem:[%s2075 + $0x18] sm:$0xff]
    %v2081 = vld [vmem:[%s2075 + $0x20] sm:$0xf]
    %v2082 = vld [vmem:[%s2075 + $0x24] sm:$0xff]
    %v2083 = vld [vmem:[%s2075 + $0x2c] sm:$0xf]
    %v2084 = vld [vmem:[%s2075 + $0x30] sm:$0xff]
    %v2085 = vld [vmem:[%s2075 + $0x38] sm:$0xf]
    %v2086 = vld [vmem:[%s2075 + $0x3c] sm:$0xff]
    %v2087 = vld [vmem:[%s2075 + $0x44] sm:$0xf]
    %v2088 = vld [vmem:[%s2075 + $0x48] sm:$0xff]
    %v2089 = vld [vmem:[%s2075 + $0x50] sm:$0xf]
    %v2090 = vld [vmem:[%s2075 + $0x54] sm:$0xff]
    %v2091 = vld [vmem:[%s2075 + $0x5c] sm:$0xf]
    %v2092 = vld [vmem:[%s2075 + $0x60] sm:$0xff]
    %v2093 = vld [vmem:[%s2075 + $0x68] sm:$0xf]
    %v2094 = vld [vmem:[%s2075 + $0x6c] sm:$0xff]
    %v2095 = vld [vmem:[%s2075 + $0x74] sm:$0xf]
    %v2096 = vld [vmem:[%s2075 + $0x78] sm:$0xff]
    %v2097 = vld [vmem:[%s2075 + $0x80] sm:$0xf]
    %v2098 = vld [vmem:[%s2075 + $0x84] sm:$0xff]
    %v2099 = vld [vmem:[%s2075 + $0x8c] sm:$0xf]
    %v2100 = vld [vmem:[%s2075 + $0x90] sm:$0xff]
    %v2101 = vld [vmem:[%s2075 + $0x98] sm:$0xf]
    %v2102 = vld [vmem:[%s2075 + $0x9c] sm:$0xff]
    %v2103 = vld [vmem:[%s2075 + $0xa4] sm:$0xf]
    %v2104 = vld [vmem:[%s2075 + $0xa8] sm:$0xff]
    %v2105 = vld [vmem:[%s2075 + $0xb0] sm:$0xf]
    %v2106 = vld [vmem:[%s2075 + $0xb4] sm:$0xff]
    %v2107 = vld [vmem:[%s2075 + $0xbc] sm:$0xf]
    %s2108 = scalar_lea.vmem [#allocation11], 3
    %v2109 = vld [vmem:[%s2108] sm:$0x7]
    %v2111 = vperm.slane %v2109, 0
    %v2112 = vperm.slane %v2109, 1
    %v2113 = vperm.slane %v2109, 2
    %v2149 = vunpack.c.l.b16 %v2076
    %v2150 = vunpack.c.h.b16 %v2076
    %v2151 = vunpack.c.l.b16 %v2077
    %v2152 = vunpack.c.l.b16 %v2078
    %v2153 = vunpack.c.h.b16 %v2078
    %v2154 = vunpack.c.l.b16 %v2079
    %v2155 = vunpack.c.l.b16 %v2080
    %v2156 = vunpack.c.h.b16 %v2080
    %v2157 = vunpack.c.l.b16 %v2081
    %v2158 = vunpack.c.l.b16 %v2082
    %v2159 = vunpack.c.h.b16 %v2082
    %v2160 = vunpack.c.l.b16 %v2083
    %v2161 = vunpack.c.l.b16 %v2084
    %v2162 = vunpack.c.h.b16 %v2084
    %v2163 = vunpack.c.l.b16 %v2085
    %v2164 = vunpack.c.l.b16 %v2086
    %v2165 = vunpack.c.h.b16 %v2086
    %v2166 = vunpack.c.l.b16 %v2087
    %v2167 = vunpack.c.l.b16 %v2088
    %v2168 = vunpack.c.h.b16 %v2088
    %v2169 = vunpack.c.l.b16 %v2089
    %v2170 = vunpack.c.l.b16 %v2090
    %v2171 = vunpack.c.h.b16 %v2090
    %v2172 = vunpack.c.l.b16 %v2091
    %v2173 = vunpack.c.l.b16 %v2092
    %v2174 = vunpack.c.h.b16 %v2092
    %v2175 = vunpack.c.l.b16 %v2093
    %v2176 = vunpack.c.l.b16 %v2094
    %v2177 = vunpack.c.h.b16 %v2094
    %v2178 = vunpack.c.l.b16 %v2095
    %v2179 = vunpack.c.l.b16 %v2096
    %v2180 = vunpack.c.h.b16 %v2096
    %v2181 = vunpack.c.l.b16 %v2097
    %v2182 = vunpack.c.l.b16 %v2098
    %v2183 = vunpack.c.h.b16 %v2098
    %v2184 = vunpack.c.l.b16 %v2099
    %v2185 = vunpack.c.l.b16 %v2100
    %v2186 = vunpack.c.h.b16 %v2100
    %v2187 = vunpack.c.l.b16 %v2101
    %v2188 = vunpack.c.l.b16 %v2102
    %v2189 = vunpack.c.h.b16 %v2102
    %v2190 = vunpack.c.l.b16 %v2103
    %v2191 = vunpack.c.l.b16 %v2104
    %v2192 = vunpack.c.h.b16 %v2104
    %v2193 = vunpack.c.l.b16 %v2105
    %v2194 = vunpack.c.l.b16 %v2106
    %v2195 = vunpack.c.h.b16 %v2106
    %v2196 = vunpack.c.l.b16 %v2107
    %v2197 = vpack.c.b16 %v2152, %v2149
    %v2198 = vpack.c.b16 %v2153, %v2150
    %v2199 = vpack.c.b16 %v2154, %v2151
    %v2200 = vpack.c.b16 %v2158, %v2155
    %v2201 = vpack.c.b16 %v2159, %v2156
    %v2202 = vpack.c.b16 %v2160, %v2157
    %v2203 = vpack.c.b16 %v2164, %v2161
    %v2204 = vpack.c.b16 %v2165, %v2162
    %v2205 = vpack.c.b16 %v2166, %v2163
    %v2206 = vpack.c.b16 %v2170, %v2167
    %v2207 = vpack.c.b16 %v2171, %v2168
    %v2208 = vpack.c.b16 %v2172, %v2169
    %v2209 = vpack.c.b16 %v2176, %v2173
    %v2210 = vpack.c.b16 %v2177, %v2174
    %v2211 = vpack.c.b16 %v2178, %v2175
    %v2212 = vpack.c.b16 %v2182, %v2179
    %v2213 = vpack.c.b16 %v2183, %v2180
    %v2214 = vpack.c.b16 %v2184, %v2181
    %v2215 = vpack.c.b16 %v2188, %v2185
    %v2216 = vpack.c.b16 %v2189, %v2186
    %v2217 = vpack.c.b16 %v2190, %v2187
    %v2218 = vpack.c.b16 %v2194, %v2191
    %v2219 = vpack.c.b16 %v2195, %v2192
    %v2220 = vpack.c.b16 %v2196, %v2193
    %2245 = vmatpush.bf16.msra.mxu0 %v2218
    %2246 = vmatpush.bf16.msra.mxu0 %v2215
    %2247 = vmatpush.bf16.msra.mxu0 %v2212
    %2248 = vmatpush.bf16.msra.mxu0 %v2209
    %2249 = vmatpush.bf16.msra.mxu0 %v2206
    %2250 = vmatpush.bf16.msra.mxu0 %v2203
    %2251 = vmatpush.bf16.msra.mxu0 %v2200
    %2252 = vmatpush.bf16.msra.mxu0 %v2197
    %2253 = vmatmul.bf16.gmra.mxu0 %v2073
    %v2254 = vpop.f32.mrf.mxu0
    %v2255 = vadd.f32 %v2111, %v2254
    %v2256 = vpop.f32.mrf.mxu0
    %v2257 = vadd.f32 %v2111, %v2256
    %2258 = vmatmul.bf16.gmra.mxu0 %v2074
    %v2259 = vpop.f32.mrf.mxu0
    %v2260 = vadd.f32 %v2111, %v2259
    %v2261 = vpop.f32.mrf.mxu0
    %v2262 = vadd.f32 %v2111, %v2261
    %2263 = vdwg.mxu0
    %2264 = vmatpush.bf16.msra.mxu0 %v2219
    %2265 = vmatpush.bf16.msra.mxu0 %v2216
    %2266 = vmatpush.bf16.msra.mxu0 %v2213
    %2267 = vmatpush.bf16.msra.mxu0 %v2210
    %2268 = vmatpush.bf16.msra.mxu0 %v2207
    %2269 = vmatpush.bf16.msra.mxu0 %v2204
    %2270 = vmatpush.bf16.msra.mxu0 %v2201
    %2271 = vmatpush.bf16.msra.mxu0 %v2198
    %2272 = vmatmul.bf16.gmra.mxu0 %v2073
    %v2273 = vpop.f32.mrf.mxu0
    %v2274 = vadd.f32 %v2112, %v2273
    %v2275 = vpop.f32.mrf.mxu0
    %v2276 = vadd.f32 %v2112, %v2275
    %2277 = vmatmul.bf16.gmra.mxu0 %v2074
    %v2278 = vpop.f32.mrf.mxu0
    %v2279 = vadd.f32 %v2112, %v2278
    %v2280 = vpop.f32.mrf.mxu0
    %v2281 = vadd.f32 %v2112, %v2280
    %2282 = vdwg.mxu0
    %2283 = vmatpush.bf16.msra.mxu0 %v2220
    %2284 = vmatpush.bf16.msra.mxu0 %v2217
    %2285 = vmatpush.bf16.msra.mxu0 %v2214
    %2286 = vmatpush.bf16.msra.mxu0 %v2211
    %2287 = vmatpush.bf16.msra.mxu0 %v2208
    %2288 = vmatpush.bf16.msra.mxu0 %v2205
    %2289 = vmatpush.bf16.msra.mxu0 %v2202
    %2290 = vmatpush.bf16.msra.mxu0 %v2199
    %2291 = vmatmul.bf16.gmra.mxu0 %v2073
    %v2292 = vpop.f32.mrf.mxu0
    %v2293 = vadd.f32 %v2113, %v2292
    %v2294 = vpop.f32.mrf.mxu0
    %v2295 = vadd.f32 %v2113, %v2294
    %2296 = vmatmul.bf16.gmra.mxu0 %v2074
    %v2297 = vpop.f32.mrf.mxu0
    %v2298 = vadd.f32 %v2113, %v2297
    %v2299 = vpop.f32.mrf.mxu0
    %v2300 = vadd.f32 %v2113, %v2299
    %2301 = vdwg.mxu0
    %2306 = vrot.lane.b32.xlu0 %v2255, 96
    %v2307 = vpop.permute.xlu0 %2306
    %2308 = vrot.lane.b32.xlu0 %v2257, 96
    %v2309 = vpop.permute.xlu0 %2308
    %2310 = vrot.lane.b32.xlu0 %v2260, 96
    %v2311 = vpop.permute.xlu0 %2310
    %2312 = vrot.lane.b32.xlu0 %v2262, 96
    %v2313 = vpop.permute.xlu0 %2312
    %2318 = vrot.lane.b32.xlu0 %v2255, 64
    %v2319 = vpop.permute.xlu0 %2318
    %2320 = vrot.lane.b32.xlu0 %v2257, 64
    %v2321 = vpop.permute.xlu0 %2320
    %2322 = vrot.lane.b32.xlu0 %v2260, 64
    %v2323 = vpop.permute.xlu0 %2322
    %2324 = vrot.lane.b32.xlu0 %v2262, 64
    %v2325 = vpop.permute.xlu0 %2324
    %2330 = vrot.lane.b32.xlu0 %v2255, 32
    %v2331 = vpop.permute.xlu0 %2330
    %2332 = vrot.lane.b32.xlu0 %v2257, 32
    %v2333 = vpop.permute.xlu0 %2332
    %2334 = vrot.lane.b32.xlu0 %v2260, 32
    %v2335 = vpop.permute.xlu0 %2334
    %2336 = vrot.lane.b32.xlu0 %v2262, 32
    %v2337 = vpop.permute.xlu0 %2336
    %v2342 = vpack.c.bf16 %v2255, %v2255
    %v2343 = vpack.c.bf16 %v2257, %v2257
    %v2344 = vpack.c.bf16 %v2260, %v2260
    %v2345 = vpack.c.bf16 %v2262, %v2262
    %v2346 = vpack.c.bf16 %v2307, %v2307
    %v2347 = vpack.c.bf16 %v2309, %v2309
    %v2348 = vpack.c.bf16 %v2311, %v2311
    %v2349 = vpack.c.bf16 %v2313, %v2313
    %v2350 = vpack.c.bf16 %v2319, %v2319
    %v2351 = vpack.c.bf16 %v2321, %v2321
    %v2352 = vpack.c.bf16 %v2323, %v2323
    %v2353 = vpack.c.bf16 %v2325, %v2325
    %v2354 = vpack.c.bf16 %v2331, %v2331
    %v2355 = vpack.c.bf16 %v2333, %v2333
    %v2356 = vpack.c.bf16 %v2335, %v2335
    %v2357 = vpack.c.bf16 %v2337, %v2337
    %2362 = vrot.lane.b32.xlu0 %v2274, 96
    %v2363 = vpop.permute.xlu0 %2362
    %2364 = vrot.lane.b32.xlu0 %v2276, 96
    %v2365 = vpop.permute.xlu0 %2364
    %2366 = vrot.lane.b32.xlu0 %v2279, 96
    %v2367 = vpop.permute.xlu0 %2366
    %2368 = vrot.lane.b32.xlu0 %v2281, 96
    %v2369 = vpop.permute.xlu0 %2368
    %2374 = vrot.lane.b32.xlu0 %v2274, 64
    %v2375 = vpop.permute.xlu0 %2374
    %2376 = vrot.lane.b32.xlu0 %v2276, 64
    %v2377 = vpop.permute.xlu0 %2376
    %2378 = vrot.lane.b32.xlu0 %v2279, 64
    %v2379 = vpop.permute.xlu0 %2378
    %2380 = vrot.lane.b32.xlu0 %v2281, 64
    %v2381 = vpop.permute.xlu0 %2380
    %2386 = vrot.lane.b32.xlu0 %v2274, 32
    %v2387 = vpop.permute.xlu0 %2386
    %2388 = vrot.lane.b32.xlu0 %v2276, 32
    %v2389 = vpop.permute.xlu0 %2388
    %2390 = vrot.lane.b32.xlu0 %v2279, 32
    %v2391 = vpop.permute.xlu0 %2390
    %2392 = vrot.lane.b32.xlu0 %v2281, 32
    %v2393 = vpop.permute.xlu0 %2392
    %v2398 = vpack.c.bf16 %v2274, %v2274
    %v2399 = vpack.c.bf16 %v2276, %v2276
    %v2400 = vpack.c.bf16 %v2279, %v2279
    %v2401 = vpack.c.bf16 %v2281, %v2281
    %v2402 = vpack.c.bf16 %v2363, %v2363
    %v2403 = vpack.c.bf16 %v2365, %v2365
    %v2404 = vpack.c.bf16 %v2367, %v2367
    %v2405 = vpack.c.bf16 %v2369, %v2369
    %v2406 = vpack.c.bf16 %v2375, %v2375
    %v2407 = vpack.c.bf16 %v2377, %v2377
    %v2408 = vpack.c.bf16 %v2379, %v2379
    %v2409 = vpack.c.bf16 %v2381, %v2381
    %v2410 = vpack.c.bf16 %v2387, %v2387
    %v2411 = vpack.c.bf16 %v2389, %v2389
    %v2412 = vpack.c.bf16 %v2391, %v2391
    %v2413 = vpack.c.bf16 %v2393, %v2393
    %2418 = vrot.lane.b32.xlu0 %v2293, 96
    %v2419 = vpop.permute.xlu0 %2418
    %2420 = vrot.lane.b32.xlu0 %v2295, 96
    %v2421 = vpop.permute.xlu0 %2420
    %2422 = vrot.lane.b32.xlu0 %v2298, 96
    %v2423 = vpop.permute.xlu0 %2422
    %2424 = vrot.lane.b32.xlu0 %v2300, 96
    %v2425 = vpop.permute.xlu0 %2424
    %2430 = vrot.lane.b32.xlu0 %v2293, 64
    %v2431 = vpop.permute.xlu0 %2430
    %2432 = vrot.lane.b32.xlu0 %v2295, 64
    %v2433 = vpop.permute.xlu0 %2432
    %2434 = vrot.lane.b32.xlu0 %v2298, 64
    %v2435 = vpop.permute.xlu0 %2434
    %2436 = vrot.lane.b32.xlu0 %v2300, 64
    %v2437 = vpop.permute.xlu0 %2436
    %2442 = vrot.lane.b32.xlu0 %v2293, 32
    %v2443 = vpop.permute.xlu0 %2442
    %2444 = vrot.lane.b32.xlu0 %v2295, 32
    %v2445 = vpop.permute.xlu0 %2444
    %2446 = vrot.lane.b32.xlu0 %v2298, 32
    %v2447 = vpop.permute.xlu0 %2446
    %2448 = vrot.lane.b32.xlu0 %v2300, 32
    %v2449 = vpop.permute.xlu0 %2448
    %v2454 = vpack.c.bf16 %v2293, %v2293
    %v2455 = vpack.c.bf16 %v2295, %v2295
    %v2456 = vpack.c.bf16 %v2298, %v2298
    %v2457 = vpack.c.bf16 %v2300, %v2300
    %v2458 = vpack.c.bf16 %v2419, %v2419
    %v2459 = vpack.c.bf16 %v2421, %v2421
    %v2460 = vpack.c.bf16 %v2423, %v2423
    %v2461 = vpack.c.bf16 %v2425, %v2425
    %v2462 = vpack.c.bf16 %v2431, %v2431
    %v2463 = vpack.c.bf16 %v2433, %v2433
    %v2464 = vpack.c.bf16 %v2435, %v2435
    %v2465 = vpack.c.bf16 %v2437, %v2437
    %v2466 = vpack.c.bf16 %v2443, %v2443
    %v2467 = vpack.c.bf16 %v2445, %v2445
    %v2468 = vpack.c.bf16 %v2447, %v2447
    %v2469 = vpack.c.bf16 %v2449, %v2449
    %v2474 = vunpack.c.l.b16 %v2342
    %v2475 = vunpack.c.l.b16 %v2343
    %v2476 = vunpack.c.l.b16 %v2344
    %v2477 = vunpack.c.l.b16 %v2345
    %v2478 = vpack.c.b16 %v2475, %v2474
    %v2479 = vpack.c.b16 %v2477, %v2476
    %v2484 = vunpack.c.l.b16 %v2398
    %v2485 = vunpack.c.l.b16 %v2399
    %v2486 = vunpack.c.l.b16 %v2400
    %v2487 = vunpack.c.l.b16 %v2401
    %v2488 = vpack.c.b16 %v2485, %v2484
    %v2489 = vpack.c.b16 %v2487, %v2486
    %v2491 = vsel %vm745, %v2478, 0
    %v2494 = vsel %vm745, %v2479, 0
    %v2497 = vsel %vm745, %v2488, 0
    %v2500 = vsel %vm745, %v2489, 0
    %2502 = vmatpush.bf16.xpose.msra.mxu0 0
    %2503 = vmatpush.bf16.xpose.msra.mxu0 0
    %2504 = vmatpush.bf16.xpose.msra.mxu0 0
    %2505 = vmatpush.bf16.xpose.msra.mxu0 0
    %2506 = vmatpush.bf16.xpose.msra.mxu0 0
    %2507 = vmatpush.bf16.xpose.msra.mxu0 0
    %2508 = vmatpush.bf16.xpose.msra.mxu0 %v2500
    %2509 = vmatpush.bf16.xpose.msra.mxu0 %v2497
    %2510 = vmatmul.bf16.gmra.mxu0 %v2491
    %v2511 = vpop.f32.mrf.mxu0
    %v2512 = vadd.f32 %v207, %v2511
    %v2513 = vpop.f32.mrf.mxu0
    %v2514 = vadd.f32 %v208, %v2513
    %2515 = vmatmul.bf16.gmra.mxu0 %v2494
    %v2516 = vpop.f32.mrf.mxu0
    %v2517 = vadd.f32 %v209, %v2516
    %v2518 = vpop.f32.mrf.mxu0
    %v2519 = vadd.f32 %v210, %v2518
    %2520 = vdwg.mxu0
    %v2525 = vunpack.c.l.b16 %v2346
    %v2526 = vunpack.c.l.b16 %v2347
    %v2527 = vunpack.c.l.b16 %v2348
    %v2528 = vunpack.c.l.b16 %v2349
    %v2529 = vpack.c.b16 %v2526, %v2525
    %v2530 = vpack.c.b16 %v2528, %v2527
    %v2535 = vunpack.c.l.b16 %v2402
    %v2536 = vunpack.c.l.b16 %v2403
    %v2537 = vunpack.c.l.b16 %v2404
    %v2538 = vunpack.c.l.b16 %v2405
    %v2539 = vpack.c.b16 %v2536, %v2535
    %v2540 = vpack.c.b16 %v2538, %v2537
    %v2542 = vsel %vm745, %v2529, 0
    %v2545 = vsel %vm745, %v2530, 0
    %v2548 = vsel %vm745, %v2539, 0
    %v2551 = vsel %vm745, %v2540, 0
    %2553 = vmatpush.bf16.xpose.msra.mxu0 0
    %2554 = vmatpush.bf16.xpose.msra.mxu0 0
    %2555 = vmatpush.bf16.xpose.msra.mxu0 0
    %2556 = vmatpush.bf16.xpose.msra.mxu0 0
    %2557 = vmatpush.bf16.xpose.msra.mxu0 0
    %2558 = vmatpush.bf16.xpose.msra.mxu0 0
    %2559 = vmatpush.bf16.xpose.msra.mxu0 %v2551
    %2560 = vmatpush.bf16.xpose.msra.mxu0 %v2548
    %2561 = vmatmul.bf16.gmra.mxu0 %v2542
    %v2562 = vpop.f32.mrf.mxu0
    %v2563 = vadd.f32 %v207, %v2562
    %v2564 = vpop.f32.mrf.mxu0
    %v2565 = vadd.f32 %v208, %v2564
    %2566 = vmatmul.bf16.gmra.mxu0 %v2545
    %v2567 = vpop.f32.mrf.mxu0
    %v2568 = vadd.f32 %v209, %v2567
    %v2569 = vpop.f32.mrf.mxu0
    %v2570 = vadd.f32 %v210, %v2569
    %2571 = vdwg.mxu0
    %v2576 = vunpack.c.l.b16 %v2350
    %v2577 = vunpack.c.l.b16 %v2351
    %v2578 = vunpack.c.l.b16 %v2352
    %v2579 = vunpack.c.l.b16 %v2353
    %v2580 = vpack.c.b16 %v2577, %v2576
    %v2581 = vpack.c.b16 %v2579, %v2578
    %v2586 = vunpack.c.l.b16 %v2406
    %v2587 = vunpack.c.l.b16 %v2407
    %v2588 = vunpack.c.l.b16 %v2408
    %v2589 = vunpack.c.l.b16 %v2409
    %v2590 = vpack.c.b16 %v2587, %v2586
    %v2591 = vpack.c.b16 %v2589, %v2588
    %v2593 = vsel %vm745, %v2580, 0
    %v2596 = vsel %vm745, %v2581, 0
    %v2599 = vsel %vm745, %v2590, 0
    %v2602 = vsel %vm745, %v2591, 0
    %2604 = vmatpush.bf16.xpose.msra.mxu0 0
    %2605 = vmatpush.bf16.xpose.msra.mxu0 0
    %2606 = vmatpush.bf16.xpose.msra.mxu0 0
    %2607 = vmatpush.bf16.xpose.msra.mxu0 0
    %2608 = vmatpush.bf16.xpose.msra.mxu0 0
    %2609 = vmatpush.bf16.xpose.msra.mxu0 0
    %2610 = vmatpush.bf16.xpose.msra.mxu0 %v2602
    %2611 = vmatpush.bf16.xpose.msra.mxu0 %v2599
    %2612 = vmatmul.bf16.gmra.mxu0 %v2593
    %v2613 = vpop.f32.mrf.mxu0
    %v2614 = vadd.f32 %v207, %v2613
    %v2615 = vpop.f32.mrf.mxu0
    %v2616 = vadd.f32 %v208, %v2615
    %2617 = vmatmul.bf16.gmra.mxu0 %v2596
    %v2618 = vpop.f32.mrf.mxu0
    %v2619 = vadd.f32 %v209, %v2618
    %v2620 = vpop.f32.mrf.mxu0
    %v2621 = vadd.f32 %v210, %v2620
    %2622 = vdwg.mxu0
    %v2627 = vunpack.c.l.b16 %v2354
    %v2628 = vunpack.c.l.b16 %v2355
    %v2629 = vunpack.c.l.b16 %v2356
    %v2630 = vunpack.c.l.b16 %v2357
    %v2631 = vpack.c.b16 %v2628, %v2627
    %v2632 = vpack.c.b16 %v2630, %v2629
    %v2637 = vunpack.c.l.b16 %v2410
    %v2638 = vunpack.c.l.b16 %v2411
    %v2639 = vunpack.c.l.b16 %v2412
    %v2640 = vunpack.c.l.b16 %v2413
    %v2641 = vpack.c.b16 %v2638, %v2637
    %v2642 = vpack.c.b16 %v2640, %v2639
    %v2644 = vsel %vm745, %v2631, 0
    %v2647 = vsel %vm745, %v2632, 0
    %v2650 = vsel %vm745, %v2641, 0
    %v2653 = vsel %vm745, %v2642, 0
    %2655 = vmatpush.bf16.xpose.msra.mxu0 0
    %2656 = vmatpush.bf16.xpose.msra.mxu0 0
    %2657 = vmatpush.bf16.xpose.msra.mxu0 0
    %2658 = vmatpush.bf16.xpose.msra.mxu0 0
    %2659 = vmatpush.bf16.xpose.msra.mxu0 0
    %2660 = vmatpush.bf16.xpose.msra.mxu0 0
    %2661 = vmatpush.bf16.xpose.msra.mxu0 %v2653
    %2662 = vmatpush.bf16.xpose.msra.mxu0 %v2650
    %2663 = vmatmul.bf16.gmra.mxu0 %v2644
    %v2664 = vpop.f32.mrf.mxu0
    %v2665 = vadd.f32 %v207, %v2664
    %v2666 = vpop.f32.mrf.mxu0
    %v2667 = vadd.f32 %v208, %v2666
    %2668 = vmatmul.bf16.gmra.mxu0 %v2647
    %v2669 = vpop.f32.mrf.mxu0
    %v2670 = vadd.f32 %v209, %v2669
    %v2671 = vpop.f32.mrf.mxu0
    %v2672 = vadd.f32 %v210, %v2671
    %2673 = vdwg.mxu0
    %v2674 = vsel %vm745, %v2512, -inf
    %2675 = vmax.xlane.f32.xlu0 %v2674
    %v2676 = vpop.xlane.xlu0 %2675
    %v2677 = vsel %vm745, %v2514, -inf
    %2678 = vmax.xlane.f32.xlu0 %v2677
    %v2679 = vpop.xlane.xlu0 %2678
    %v2680 = vsel %vm745, %v2517, -inf
    %2681 = vmax.xlane.f32.xlu0 %v2680
    %v2682 = vpop.xlane.xlu0 %2681
    %v2683 = vsel %vm745, %v2519, -inf
    %2684 = vmax.xlane.f32.xlu0 %v2683
    %v2685 = vpop.xlane.xlu0 %2684
    %v2686 = vsel %vm745, %v2563, -inf
    %2687 = vmax.xlane.f32.xlu0 %v2686
    %v2688 = vpop.xlane.xlu0 %2687
    %v2689 = vsel %vm745, %v2565, -inf
    %2690 = vmax.xlane.f32.xlu0 %v2689
    %v2691 = vpop.xlane.xlu0 %2690
    %v2692 = vsel %vm745, %v2568, -inf
    %2693 = vmax.xlane.f32.xlu0 %v2692
    %v2694 = vpop.xlane.xlu0 %2693
    %v2695 = vsel %vm745, %v2570, -inf
    %2696 = vmax.xlane.f32.xlu0 %v2695
    %v2697 = vpop.xlane.xlu0 %2696
    %v2698 = vsel %vm745, %v2614, -inf
    %2699 = vmax.xlane.f32.xlu0 %v2698
    %v2700 = vpop.xlane.xlu0 %2699
    %v2701 = vsel %vm745, %v2616, -inf
    %2702 = vmax.xlane.f32.xlu0 %v2701
    %v2703 = vpop.xlane.xlu0 %2702
    %v2704 = vsel %vm745, %v2619, -inf
    %2705 = vmax.xlane.f32.xlu0 %v2704
    %v2706 = vpop.xlane.xlu0 %2705
    %v2707 = vsel %vm745, %v2621, -inf
    %2708 = vmax.xlane.f32.xlu0 %v2707
    %v2709 = vpop.xlane.xlu0 %2708
    %v2710 = vsel %vm745, %v2665, -inf
    %2711 = vmax.xlane.f32.xlu0 %v2710
    %v2712 = vpop.xlane.xlu0 %2711
    %v2713 = vsel %vm745, %v2667, -inf
    %2714 = vmax.xlane.f32.xlu0 %v2713
    %v2715 = vpop.xlane.xlu0 %2714
    %v2716 = vsel %vm745, %v2670, -inf
    %2717 = vmax.xlane.f32.xlu0 %v2716
    %v2718 = vpop.xlane.xlu0 %2717
    %v2719 = vsel %vm745, %v2672, -inf
    %2720 = vmax.xlane.f32.xlu0 %v2719
    %v2721 = vpop.xlane.xlu0 %2720
    %v2722 = vsub.f32 %v2512, %v2676
    %v2723 = vsub.f32 %v2514, %v2679
    %v2724 = vsub.f32 %v2517, %v2682
    %v2725 = vsub.f32 %v2519, %v2685
    %v2726 = vsub.f32 %v2563, %v2688
    %v2727 = vsub.f32 %v2565, %v2691
    %v2728 = vsub.f32 %v2568, %v2694
    %v2729 = vsub.f32 %v2570, %v2697
    %v2730 = vsub.f32 %v2614, %v2700
    %v2731 = vsub.f32 %v2616, %v2703
    %v2732 = vsub.f32 %v2619, %v2706
    %v2733 = vsub.f32 %v2621, %v2709
    %v2734 = vsub.f32 %v2665, %v2712
    %v2735 = vsub.f32 %v2667, %v2715
    %v2736 = vsub.f32 %v2670, %v2718
    %v2737 = vsub.f32 %v2672, %v2721
    %v2738 = vmul.f32 %v2722, 1.442695
    %v2739 = vpow.pop %v2738
    %v2740 = vmul.f32 %v2723, 1.442695
    %v2741 = vpow.pop %v2740
    %v2742 = vmul.f32 %v2724, 1.442695
    %v2743 = vpow.pop %v2742
    %v2744 = vmul.f32 %v2725, 1.442695
    %v2745 = vpow.pop %v2744
    %v2746 = vmul.f32 %v2726, 1.442695
    %v2747 = vpow.pop %v2746
    %v2748 = vmul.f32 %v2727, 1.442695
    %v2749 = vpow.pop %v2748
    %v2750 = vmul.f32 %v2728, 1.442695
    %v2751 = vpow.pop %v2750
    %v2752 = vmul.f32 %v2729, 1.442695
    %v2753 = vpow.pop %v2752
    %v2754 = vmul.f32 %v2730, 1.442695
    %v2755 = vpow.pop %v2754
    %v2756 = vmul.f32 %v2731, 1.442695
    %v2757 = vpow.pop %v2756
    %v2758 = vmul.f32 %v2732, 1.442695
    %v2759 = vpow.pop %v2758
    %v2760 = vmul.f32 %v2733, 1.442695
    %v2761 = vpow.pop %v2760
    %v2762 = vmul.f32 %v2734, 1.442695
    %v2763 = vpow.pop %v2762
    %v2764 = vmul.f32 %v2735, 1.442695
    %v2765 = vpow.pop %v2764
    %v2766 = vmul.f32 %v2736, 1.442695
    %v2767 = vpow.pop %v2766
    %v2768 = vmul.f32 %v2737, 1.442695
    %v2769 = vpow.pop %v2768
    %v2770 = vsel %vm745, %v2739, 0.0
    %2771 = vadd.xlane.f32.xlu0 %v2770
    %v2772 = vpop.xlane.xlu0 %2771
    %v2773 = vsel %vm745, %v2741, 0.0
    %2774 = vadd.xlane.f32.xlu0 %v2773
    %v2775 = vpop.xlane.xlu0 %2774
    %v2776 = vsel %vm745, %v2743, 0.0
    %2777 = vadd.xlane.f32.xlu0 %v2776
    %v2778 = vpop.xlane.xlu0 %2777
    %v2779 = vsel %vm745, %v2745, 0.0
    %2780 = vadd.xlane.f32.xlu0 %v2779
    %v2781 = vpop.xlane.xlu0 %2780
    %v2782 = vsel %vm745, %v2747, 0.0
    %2783 = vadd.xlane.f32.xlu0 %v2782
    %v2784 = vpop.xlane.xlu0 %2783
    %v2785 = vsel %vm745, %v2749, 0.0
    %2786 = vadd.xlane.f32.xlu0 %v2785
    %v2787 = vpop.xlane.xlu0 %2786
    %v2788 = vsel %vm745, %v2751, 0.0
    %2789 = vadd.xlane.f32.xlu0 %v2788
    %v2790 = vpop.xlane.xlu0 %2789
    %v2791 = vsel %vm745, %v2753, 0.0
    %2792 = vadd.xlane.f32.xlu0 %v2791
    %v2793 = vpop.xlane.xlu0 %2792
    %v2794 = vsel %vm745, %v2755, 0.0
    %2795 = vadd.xlane.f32.xlu0 %v2794
    %v2796 = vpop.xlane.xlu0 %2795
    %v2797 = vsel %vm745, %v2757, 0.0
    %2798 = vadd.xlane.f32.xlu0 %v2797
    %v2799 = vpop.xlane.xlu0 %2798
    %v2800 = vsel %vm745, %v2759, 0.0
    %2801 = vadd.xlane.f32.xlu0 %v2800
    %v2802 = vpop.xlane.xlu0 %2801
    %v2803 = vsel %vm745, %v2761, 0.0
    %2804 = vadd.xlane.f32.xlu0 %v2803
    %v2805 = vpop.xlane.xlu0 %2804
    %v2806 = vsel %vm745, %v2763, 0.0
    %2807 = vadd.xlane.f32.xlu0 %v2806
    %v2808 = vpop.xlane.xlu0 %2807
    %v2809 = vsel %vm745, %v2765, 0.0
    %2810 = vadd.xlane.f32.xlu0 %v2809
    %v2811 = vpop.xlane.xlu0 %2810
    %v2812 = vsel %vm745, %v2767, 0.0
    %2813 = vadd.xlane.f32.xlu0 %v2812
    %v2814 = vpop.xlane.xlu0 %2813
    %v2815 = vsel %vm745, %v2769, 0.0
    %2816 = vadd.xlane.f32.xlu0 %v2815
    %v2817 = vpop.xlane.xlu0 %2816
    %v2818 = vrcp.pop %v2772
    %v2819 = vrcp.pop %v2775
    %v2820 = vrcp.pop %v2778
    %v2821 = vrcp.pop %v2781
    %v2822 = vrcp.pop %v2784
    %v2823 = vrcp.pop %v2787
    %v2824 = vrcp.pop %v2790
    %v2825 = vrcp.pop %v2793
    %v2826 = vrcp.pop %v2796
    %v2827 = vrcp.pop %v2799
    %v2828 = vrcp.pop %v2802
    %v2829 = vrcp.pop %v2805
    %v2830 = vrcp.pop %v2808
    %v2831 = vrcp.pop %v2811
    %v2832 = vrcp.pop %v2814
    %v2833 = vrcp.pop %v2817
    %v2834 = vmul.f32 %v2739, %v2818
    %v2835 = vmul.f32 %v2741, %v2819
    %v2836 = vmul.f32 %v2743, %v2820
    %v2837 = vmul.f32 %v2745, %v2821
    %v2838 = vmul.f32 %v2747, %v2822
    %v2839 = vmul.f32 %v2749, %v2823
    %v2840 = vmul.f32 %v2751, %v2824
    %v2841 = vmul.f32 %v2753, %v2825
    %v2842 = vmul.f32 %v2755, %v2826
    %v2843 = vmul.f32 %v2757, %v2827
    %v2844 = vmul.f32 %v2759, %v2828
    %v2845 = vmul.f32 %v2761, %v2829
    %v2846 = vmul.f32 %v2763, %v2830
    %v2847 = vmul.f32 %v2765, %v2831
    %v2848 = vmul.f32 %v2767, %v2832
    %v2849 = vmul.f32 %v2769, %v2833
    %v2850 = vpack.c.bf16 %v2834, %v2834
    %v2851 = vpack.c.bf16 %v2835, %v2835
    %v2852 = vpack.c.bf16 %v2836, %v2836
    %v2853 = vpack.c.bf16 %v2837, %v2837
    %v2854 = vpack.c.bf16 %v2838, %v2838
    %v2855 = vpack.c.bf16 %v2839, %v2839
    %v2856 = vpack.c.bf16 %v2840, %v2840
    %v2857 = vpack.c.bf16 %v2841, %v2841
    %v2858 = vpack.c.bf16 %v2842, %v2842
    %v2859 = vpack.c.bf16 %v2843, %v2843
    %v2860 = vpack.c.bf16 %v2844, %v2844
    %v2861 = vpack.c.bf16 %v2845, %v2845
    %v2862 = vpack.c.bf16 %v2846, %v2846
    %v2863 = vpack.c.bf16 %v2847, %v2847
    %v2864 = vpack.c.bf16 %v2848, %v2848
    %v2865 = vpack.c.bf16 %v2849, %v2849
    %v2870 = vunpack.c.l.b16 %v2850
    %v2871 = vunpack.c.l.b16 %v2851
    %v2872 = vunpack.c.l.b16 %v2852
    %v2873 = vunpack.c.l.b16 %v2853
    %v2874 = vpack.c.b16 %v2871, %v2870
    %v2875 = vpack.c.b16 %v2873, %v2872
    %v2880 = vunpack.c.l.b16 %v2454
    %v2881 = vunpack.c.l.b16 %v2455
    %v2882 = vunpack.c.l.b16 %v2456
    %v2883 = vunpack.c.l.b16 %v2457
    %v2884 = vpack.c.b16 %v2881, %v2880
    %v2885 = vpack.c.b16 %v2883, %v2882
    %v2889 = vsel %vm745, %v2874, 0
    %v2892 = vsel %vm745, %v2875, 0
    %2894 = vmatpush.bf16.msra.mxu0 0
    %2895 = vmatpush.bf16.msra.mxu0 0
    %2896 = vmatpush.bf16.msra.mxu0 0
    %2897 = vmatpush.bf16.msra.mxu0 0
    %2898 = vmatpush.bf16.msra.mxu0 0
    %2899 = vmatpush.bf16.msra.mxu0 0
    %2900 = vmatpush.bf16.msra.mxu0 %v2885
    %2901 = vmatpush.bf16.msra.mxu0 %v2884
    %2902 = vmatmul.bf16.gmra.mxu0 %v2889
    %v2903 = vpop.f32.mrf.mxu0
    %v2904 = vadd.f32 0.0, %v2903
    %v2905 = vpop.f32.mrf.mxu0
    %v2906 = vadd.f32 0.0, %v2905
    %2907 = vmatmul.bf16.gmra.mxu0 %v2892
    %v2908 = vpop.f32.mrf.mxu0
    %v2909 = vadd.f32 0.0, %v2908
    %v2910 = vpop.f32.mrf.mxu0
    %v2911 = vadd.f32 0.0, %v2910
    %2912 = vdwg.mxu0
    %v2917 = vunpack.c.l.b16 %v2854
    %v2918 = vunpack.c.l.b16 %v2855
    %v2919 = vunpack.c.l.b16 %v2856
    %v2920 = vunpack.c.l.b16 %v2857
    %v2921 = vpack.c.b16 %v2918, %v2917
    %v2922 = vpack.c.b16 %v2920, %v2919
    %v2927 = vunpack.c.l.b16 %v2458
    %v2928 = vunpack.c.l.b16 %v2459
    %v2929 = vunpack.c.l.b16 %v2460
    %v2930 = vunpack.c.l.b16 %v2461
    %v2931 = vpack.c.b16 %v2928, %v2927
    %v2932 = vpack.c.b16 %v2930, %v2929
    %v2936 = vsel %vm745, %v2921, 0
    %v2939 = vsel %vm745, %v2922, 0
    %2941 = vmatpush.bf16.msra.mxu0 0
    %2942 = vmatpush.bf16.msra.mxu0 0
    %2943 = vmatpush.bf16.msra.mxu0 0
    %2944 = vmatpush.bf16.msra.mxu0 0
    %2945 = vmatpush.bf16.msra.mxu0 0
    %2946 = vmatpush.bf16.msra.mxu0 0
    %2947 = vmatpush.bf16.msra.mxu0 %v2932
    %2948 = vmatpush.bf16.msra.mxu0 %v2931
    %2949 = vmatmul.bf16.gmra.mxu0 %v2936
    %v2950 = vpop.f32.mrf.mxu0
    %v2951 = vadd.f32 0.0, %v2950
    %v2952 = vpop.f32.mrf.mxu0
    %v2953 = vadd.f32 0.0, %v2952
    %2954 = vmatmul.bf16.gmra.mxu0 %v2939
    %v2955 = vpop.f32.mrf.mxu0
    %v2956 = vadd.f32 0.0, %v2955
    %v2957 = vpop.f32.mrf.mxu0
    %v2958 = vadd.f32 0.0, %v2957
    %2959 = vdwg.mxu0
    %v2964 = vunpack.c.l.b16 %v2858
    %v2965 = vunpack.c.l.b16 %v2859
    %v2966 = vunpack.c.l.b16 %v2860
    %v2967 = vunpack.c.l.b16 %v2861
    %v2968 = vpack.c.b16 %v2965, %v2964
    %v2969 = vpack.c.b16 %v2967, %v2966
    %v2974 = vunpack.c.l.b16 %v2462
    %v2975 = vunpack.c.l.b16 %v2463
    %v2976 = vunpack.c.l.b16 %v2464
    %v2977 = vunpack.c.l.b16 %v2465
    %v2978 = vpack.c.b16 %v2975, %v2974
    %v2979 = vpack.c.b16 %v2977, %v2976
    %v2983 = vsel %vm745, %v2968, 0
    %v2986 = vsel %vm745, %v2969, 0
    %2988 = vmatpush.bf16.msra.mxu0 0
    %2989 = vmatpush.bf16.msra.mxu0 0
    %2990 = vmatpush.bf16.msra.mxu0 0
    %2991 = vmatpush.bf16.msra.mxu0 0
    %2992 = vmatpush.bf16.msra.mxu0 0
    %2993 = vmatpush.bf16.msra.mxu0 0
    %2994 = vmatpush.bf16.msra.mxu0 %v2979
    %2995 = vmatpush.bf16.msra.mxu0 %v2978
    %2996 = vmatmul.bf16.gmra.mxu0 %v2983
    %v2997 = vpop.f32.mrf.mxu0
    %v2998 = vadd.f32 0.0, %v2997
    %v2999 = vpop.f32.mrf.mxu0
    %v3000 = vadd.f32 0.0, %v2999
    %3001 = vmatmul.bf16.gmra.mxu0 %v2986
    %v3002 = vpop.f32.mrf.mxu0
    %v3003 = vadd.f32 0.0, %v3002
    %v3004 = vpop.f32.mrf.mxu0
    %v3005 = vadd.f32 0.0, %v3004
    %3006 = vdwg.mxu0
    %v3011 = vunpack.c.l.b16 %v2862
    %v3012 = vunpack.c.l.b16 %v2863
    %v3013 = vunpack.c.l.b16 %v2864
    %v3014 = vunpack.c.l.b16 %v2865
    %v3015 = vpack.c.b16 %v3012, %v3011
    %v3016 = vpack.c.b16 %v3014, %v3013
    %v3021 = vunpack.c.l.b16 %v2466
    %v3022 = vunpack.c.l.b16 %v2467
    %v3023 = vunpack.c.l.b16 %v2468
    %v3024 = vunpack.c.l.b16 %v2469
    %v3025 = vpack.c.b16 %v3022, %v3021
    %v3026 = vpack.c.b16 %v3024, %v3023
    %v3030 = vsel %vm745, %v3015, 0
    %v3033 = vsel %vm745, %v3016, 0
    %3035 = vmatpush.bf16.msra.mxu0 0
    %3036 = vmatpush.bf16.msra.mxu0 0
    %3037 = vmatpush.bf16.msra.mxu0 0
    %3038 = vmatpush.bf16.msra.mxu0 0
    %3039 = vmatpush.bf16.msra.mxu0 0
    %3040 = vmatpush.bf16.msra.mxu0 0
    %3041 = vmatpush.bf16.msra.mxu0 %v3026
    %3042 = vmatpush.bf16.msra.mxu0 %v3025
    %3043 = vmatmul.bf16.gmra.mxu0 %v3030
    %v3044 = vpop.f32.mrf.mxu0
    %v3045 = vadd.f32 0.0, %v3044
    %v3046 = vpop.f32.mrf.mxu0
    %v3047 = vadd.f32 0.0, %v3046
    %3048 = vmatmul.bf16.gmra.mxu0 %v3033
    %v3049 = vpop.f32.mrf.mxu0
    %v3050 = vadd.f32 0.0, %v3049
    %v3051 = vpop.f32.mrf.mxu0
    %v3052 = vadd.f32 0.0, %v3051
    %3053 = vdwg.mxu0
    %3058 = vrot.lane.b32.xlu0 %v2951, 32
    %v3059 = vpop.permute.xlu0 %3058
    %3060 = vrot.lane.b32.xlu0 %v2953, 32
    %v3061 = vpop.permute.xlu0 %3060
    %3062 = vrot.lane.b32.xlu0 %v2956, 32
    %v3063 = vpop.permute.xlu0 %3062
    %3064 = vrot.lane.b32.xlu0 %v2958, 32
    %v3065 = vpop.permute.xlu0 %3064
    %3074 = vrot.lane.b32.xlu0 %v2998, 64
    %v3075 = vpop.permute.xlu0 %3074
    %3076 = vrot.lane.b32.xlu0 %v3000, 64
    %v3077 = vpop.permute.xlu0 %3076
    %3078 = vrot.lane.b32.xlu0 %v3003, 64
    %v3079 = vpop.permute.xlu0 %3078
    %3080 = vrot.lane.b32.xlu0 %v3005, 64
    %v3081 = vpop.permute.xlu0 %3080
    %3090 = vrot.lane.b32.xlu0 %v3045, 96
    %v3091 = vpop.permute.xlu0 %3090
    %3092 = vrot.lane.b32.xlu0 %v3047, 96
    %v3093 = vpop.permute.xlu0 %3092
    %3094 = vrot.lane.b32.xlu0 %v3050, 96
    %v3095 = vpop.permute.xlu0 %3094
    %3096 = vrot.lane.b32.xlu0 %v3052, 96
    %v3097 = vpop.permute.xlu0 %3096
    %v3102 = vsel %vm745, %v2904, %v3059
    %v3103 = vsel %vm745, %v2906, %v3061
    %v3104 = vsel %vm745, %v2909, %v3063
    %v3105 = vsel %vm745, %v2911, %v3065
    %v3106 = vsel %vm1362, %v3102, %v3075
    %v3107 = vsel %vm1362, %v3103, %v3077
    %v3108 = vsel %vm1362, %v3104, %v3079
    %v3109 = vsel %vm1362, %v3105, %v3081
    %v3110 = vsel %vm1367, %v3106, %v3091
    %v3111 = vsel %vm1367, %v3107, %v3093
    %v3112 = vsel %vm1367, %v3108, %v3095
    %v3113 = vsel %vm1367, %v3109, %v3097
    %v3114 = vpack.c.bf16 %v3111, %v3110
    %v3115 = vpack.c.bf16 %v3113, %v3112
    %s3116 = scalar_lea.vmem [#allocation13], 64
    %v3117 = vld [vmem:[%s3116] sm:$0xf]
    %v3118 = vld [vmem:[%s3116 + $0x4] sm:$0xf]
    %v3119 = vld [vmem:[%s3116 + $0x8] sm:$0xf]
    %v3120 = vld [vmem:[%s3116 + $0xc] sm:$0xf]
    %v3121 = vld [vmem:[%s3116 + $0x10] sm:$0xf]
    %v3122 = vld [vmem:[%s3116 + $0x14] sm:$0xf]
    %v3123 = vld [vmem:[%s3116 + $0x18] sm:$0xf]
    %v3124 = vld [vmem:[%s3116 + $0x1c] sm:$0xf]
    %v3125 = vld [vmem:[%s3116 + $0x20] sm:$0xf]
    %v3126 = vld [vmem:[%s3116 + $0x24] sm:$0xf]
    %v3127 = vld [vmem:[%s3116 + $0x28] sm:$0xf]
    %v3128 = vld [vmem:[%s3116 + $0x2c] sm:$0xf]
    %v3129 = vld [vmem:[%s3116 + $0x30] sm:$0xf]
    %v3130 = vld [vmem:[%s3116 + $0x34] sm:$0xf]
    %v3131 = vld [vmem:[%s3116 + $0x38] sm:$0xf]
    %v3132 = vld [vmem:[%s3116 + $0x3c] sm:$0xf]
    %s3133 = scalar_lea.vmem %s7, 1
    %v3134 = vld [vmem:[%s3133] sm:$0x1]
    %v3136 = vperm.slane %v3134, 0
    %v3154 = vunpack.c.l.b16 %v3117
    %v3155 = vunpack.c.l.b16 %v3118
    %v3156 = vunpack.c.l.b16 %v3119
    %v3157 = vunpack.c.l.b16 %v3120
    %v3158 = vunpack.c.l.b16 %v3121
    %v3159 = vunpack.c.l.b16 %v3122
    %v3160 = vunpack.c.l.b16 %v3123
    %v3161 = vunpack.c.l.b16 %v3124
    %v3162 = vunpack.c.l.b16 %v3125
    %v3163 = vunpack.c.l.b16 %v3126
    %v3164 = vunpack.c.l.b16 %v3127
    %v3165 = vunpack.c.l.b16 %v3128
    %v3166 = vunpack.c.l.b16 %v3129
    %v3167 = vunpack.c.l.b16 %v3130
    %v3168 = vunpack.c.l.b16 %v3131
    %v3169 = vunpack.c.l.b16 %v3132
    %v3170 = vpack.c.b16 %v3155, %v3154
    %v3171 = vpack.c.b16 %v3157, %v3156
    %v3172 = vpack.c.b16 %v3159, %v3158
    %v3173 = vpack.c.b16 %v3161, %v3160
    %v3174 = vpack.c.b16 %v3163, %v3162
    %v3175 = vpack.c.b16 %v3165, %v3164
    %v3176 = vpack.c.b16 %v3167, %v3166
    %v3177 = vpack.c.b16 %v3169, %v3168
    %3186 = vmatpush.bf16.msra.mxu0 %v3177
    %3187 = vmatpush.bf16.msra.mxu0 %v3176
    %3188 = vmatpush.bf16.msra.mxu0 %v3175
    %3189 = vmatpush.bf16.msra.mxu0 %v3174
    %3190 = vmatpush.bf16.msra.mxu0 %v3173
    %3191 = vmatpush.bf16.msra.mxu0 %v3172
    %3192 = vmatpush.bf16.msra.mxu0 %v3171
    %3193 = vmatpush.bf16.msra.mxu0 %v3170
    %3194 = vmatmul.bf16.gmra.mxu0 %v3114
    %v3195 = vpop.f32.mrf.mxu0
    %v3196 = vadd.f32 %v3136, %v3195
    %v3197 = vpop.f32.mrf.mxu0
    %v3198 = vadd.f32 %v3136, %v3197
    %3199 = vmatmul.bf16.gmra.mxu0 %v3115
    %v3200 = vpop.f32.mrf.mxu0
    %v3201 = vadd.f32 %v3136, %v3200
    %v3202 = vpop.f32.mrf.mxu0
    %v3203 = vadd.f32 %v3136, %v3202
    %3204 = vdwg.mxu0
    %v3205 = vadd.f32 %v2069, %v3196
    %v3206 = vadd.f32 %v2070, %v3198
    %v3207 = vadd.f32 %v2071, %v3201
    %v3208 = vadd.f32 %v2072, %v3203
    %s3209 = scalar_lea.vmem [#allocation14], 1
    %v3210 = vld [vmem:[%s3209] sm:$0x1]
    %s3211 = scalar_lea.vmem %s9, 1
    %v3212 = vld [vmem:[%s3211] sm:$0x1]
    %3213 = vadd.xlane.f32.xlu0 %v3205
    %v3214 = vpop.xlane.xlu0 %3213
    %3215 = vadd.xlane.f32.xlu0 %v3206
    %v3216 = vpop.xlane.xlu0 %3215
    %3217 = vadd.xlane.f32.xlu0 %v3207
    %v3218 = vpop.xlane.xlu0 %3217
    %3219 = vadd.xlane.f32.xlu0 %v3208
    %v3220 = vpop.xlane.xlu0 %3219
    %v3221 = vmul.f32 %v3214, %v231
    %v3222 = vmul.f32 %v3216, %v231
    %v3223 = vmul.f32 %v3218, %v231
    %v3224 = vmul.f32 %v3220, %v231
    %v3225 = vmul.f32 %v3205, %v3205
    %v3226 = vmul.f32 %v3206, %v3206
    %v3227 = vmul.f32 %v3207, %v3207
    %v3228 = vmul.f32 %v3208, %v3208
    %3229 = vadd.xlane.f32.xlu0 %v3225
    %v3230 = vpop.xlane.xlu0 %3229
    %3231 = vadd.xlane.f32.xlu0 %v3226
    %v3232 = vpop.xlane.xlu0 %3231
    %3233 = vadd.xlane.f32.xlu0 %v3227
    %v3234 = vpop.xlane.xlu0 %3233
    %3235 = vadd.xlane.f32.xlu0 %v3228
    %v3236 = vpop.xlane.xlu0 %3235
    %v3237 = vmul.f32 %v3230, %v231
    %v3238 = vmul.f32 %v3232, %v231
    %v3239 = vmul.f32 %v3234, %v231
    %v3240 = vmul.f32 %v3236, %v231
    %v3241 = vmul.f32 %v3221, %v3221
    %v3242 = vmul.f32 %v3222, %v3222
    %v3243 = vmul.f32 %v3223, %v3223
    %v3244 = vmul.f32 %v3224, %v3224
    %v3245 = vsub.f32 %v3237, %v3241
    %v3246 = vsub.f32 %v3238, %v3242
    %v3247 = vsub.f32 %v3239, %v3243
    %v3248 = vsub.f32 %v3240, %v3244
    %v3249 = vmax.f32 %v3245, 0.0
    %v3250 = vmax.f32 %v3246, 0.0
    %v3251 = vmax.f32 %v3247, 0.0
    %v3252 = vmax.f32 %v3248, 0.0
    %v3253 = vsub.f32 %v3205, %v3221
    %v3254 = vsub.f32 %v3206, %v3222
    %v3255 = vsub.f32 %v3207, %v3223
    %v3256 = vsub.f32 %v3208, %v3224
    %v3257 = vadd.f32 %v3249, 1e-12
    %v3258 = vadd.f32 %v3250, 1e-12
    %v3259 = vadd.f32 %v3251, 1e-12
    %v3260 = vadd.f32 %v3252, 1e-12
    %v3261 = vrsqrt.pop %v3257
    %v3262 = vmul.f32 %v3261, %v3257
    %v3263 = vmul.f32 %v3262, %v3261
    %v3264 = vmul.f32 0.5, %v3263
    %v3265 = vsub.f32 1.5, %v3264
    %v3266 = vmul.f32 %v3261, %v3265
    %vm3267 = vweird.f32 %v3257
    %vm3268 = vweird.f32 %v3261
    %vm3269 = vmor %vm3267, %vm3268
    %v3270 = vsel %vm3269, %v3261, %v3266
    %v3271 = vrsqrt.pop %v3258
    %v3272 = vmul.f32 %v3271, %v3258
    %v3273 = vmul.f32 %v3272, %v3271
    %v3274 = vmul.f32 0.5, %v3273
    %v3275 = vsub.f32 1.5, %v3274
    %v3276 = vmul.f32 %v3271, %v3275
    %vm3277 = vweird.f32 %v3258
    %vm3278 = vweird.f32 %v3271
    %vm3279 = vmor %vm3277, %vm3278
    %v3280 = vsel %vm3279, %v3271, %v3276
    %v3281 = vrsqrt.pop %v3259
    %v3282 = vmul.f32 %v3281, %v3259
    %v3283 = vmul.f32 %v3282, %v3281
    %v3284 = vmul.f32 0.5, %v3283
    %v3285 = vsub.f32 1.5, %v3284
    %v3286 = vmul.f32 %v3281, %v3285
    %vm3287 = vweird.f32 %v3259
    %vm3288 = vweird.f32 %v3281
    %vm3289 = vmor %vm3287, %vm3288
    %v3290 = vsel %vm3289, %v3281, %v3286
    %v3291 = vrsqrt.pop %v3260
    %v3292 = vmul.f32 %v3291, %v3260
    %v3293 = vmul.f32 %v3292, %v3291
    %v3294 = vmul.f32 0.5, %v3293
    %v3295 = vsub.f32 1.5, %v3294
    %v3296 = vmul.f32 %v3291, %v3295
    %vm3297 = vweird.f32 %v3260
    %vm3298 = vweird.f32 %v3291
    %vm3299 = vmor %vm3297, %vm3298
    %v3300 = vsel %vm3299, %v3291, %v3296
    %v3301 = vmul.f32 %v3253, %v3270
    %v3302 = vmul.f32 %v3254, %v3280
    %v3303 = vmul.f32 %v3255, %v3290
    %v3304 = vmul.f32 %v3256, %v3300
    %v3306 = vperm.slane %v3210, 0
    %v3308 = vmul.f32 %v3301, %v3306
    %v3309 = vmul.f32 %v3302, %v3306
    %v3310 = vmul.f32 %v3303, %v3306
    %v3311 = vmul.f32 %v3304, %v3306
    %v3313 = vperm.slane %v3212, 0
    %v3315 = vadd.f32 %v3308, %v3313
    %v3316 = vadd.f32 %v3309, %v3313
    %v3317 = vadd.f32 %v3310, %v3313
    %v3318 = vadd.f32 %v3311, %v3313
    %v3319 = vpack.c.bf16 %v3316, %v3315
    %v3320 = vpack.c.bf16 %v3318, %v3317
    %s3321 = scalar_lea.vmem [#allocation16], 128
    %v3322 = vld [vmem:[%s3321] sm:$0xff]
    %v3323 = vld [vmem:[%s3321 + $0x8] sm:$0xff]
    %v3324 = vld [vmem:[%s3321 + $0x10] sm:$0xff]
    %v3325 = vld [vmem:[%s3321 + $0x18] sm:$0xff]
    %v3326 = vld [vmem:[%s3321 + $0x20] sm:$0xff]
    %v3327 = vld [vmem:[%s3321 + $0x28] sm:$0xff]
    %v3328 = vld [vmem:[%s3321 + $0x30] sm:$0xff]
    %v3329 = vld [vmem:[%s3321 + $0x38] sm:$0xff]
    %v3330 = vld [vmem:[%s3321 + $0x40] sm:$0xff]
    %v3331 = vld [vmem:[%s3321 + $0x48] sm:$0xff]
    %v3332 = vld [vmem:[%s3321 + $0x50] sm:$0xff]
    %v3333 = vld [vmem:[%s3321 + $0x58] sm:$0xff]
    %v3334 = vld [vmem:[%s3321 + $0x60] sm:$0xff]
    %v3335 = vld [vmem:[%s3321 + $0x68] sm:$0xff]
    %v3336 = vld [vmem:[%s3321 + $0x70] sm:$0xff]
    %v3337 = vld [vmem:[%s3321 + $0x78] sm:$0xff]
    %s3338 = scalar_lea.vmem %s11, 2
    %v3339 = vld [vmem:[%s3338] sm:$0x3]
    %v3341 = vperm.slane %v3339, 0
    %v3342 = vperm.slane %v3339, 1
    %v3361 = vunpack.c.l.b16 %v3322
    %v3362 = vunpack.c.h.b16 %v3322
    %v3363 = vunpack.c.l.b16 %v3323
    %v3364 = vunpack.c.h.b16 %v3323
    %v3365 = vunpack.c.l.b16 %v3324
    %v3366 = vunpack.c.h.b16 %v3324
    %v3367 = vunpack.c.l.b16 %v3325
    %v3368 = vunpack.c.h.b16 %v3325
    %v3369 = vunpack.c.l.b16 %v3326
    %v3370 = vunpack.c.h.b16 %v3326
    %v3371 = vunpack.c.l.b16 %v3327
    %v3372 = vunpack.c.h.b16 %v3327
    %v3373 = vunpack.c.l.b16 %v3328
    %v3374 = vunpack.c.h.b16 %v3328
    %v3375 = vunpack.c.l.b16 %v3329
    %v3376 = vunpack.c.h.b16 %v3329
    %v3377 = vunpack.c.l.b16 %v3330
    %v3378 = vunpack.c.h.b16 %v3330
    %v3379 = vunpack.c.l.b16 %v3331
    %v3380 = vunpack.c.h.b16 %v3331
    %v3381 = vunpack.c.l.b16 %v3332
    %v3382 = vunpack.c.h.b16 %v3332
    %v3383 = vunpack.c.l.b16 %v3333
    %v3384 = vunpack.c.h.b16 %v3333
    %v3385 = vunpack.c.l.b16 %v3334
    %v3386 = vunpack.c.h.b16 %v3334
    %v3387 = vunpack.c.l.b16 %v3335
    %v3388 = vunpack.c.h.b16 %v3335
    %v3389 = vunpack.c.l.b16 %v3336
    %v3390 = vunpack.c.h.b16 %v3336
    %v3391 = vunpack.c.l.b16 %v3337
    %v3392 = vunpack.c.h.b16 %v3337
    %v3393 = vpack.c.b16 %v3363, %v3361
    %v3394 = vpack.c.b16 %v3364, %v3362
    %v3395 = vpack.c.b16 %v3367, %v3365
    %v3396 = vpack.c.b16 %v3368, %v3366
    %v3397 = vpack.c.b16 %v3371, %v3369
    %v3398 = vpack.c.b16 %v3372, %v3370
    %v3399 = vpack.c.b16 %v3375, %v3373
    %v3400 = vpack.c.b16 %v3376, %v3374
    %v3401 = vpack.c.b16 %v3379, %v3377
    %v3402 = vpack.c.b16 %v3380, %v3378
    %v3403 = vpack.c.b16 %v3383, %v3381
    %v3404 = vpack.c.b16 %v3384, %v3382
    %v3405 = vpack.c.b16 %v3387, %v3385
    %v3406 = vpack.c.b16 %v3388, %v3386
    %v3407 = vpack.c.b16 %v3391, %v3389
    %v3408 = vpack.c.b16 %v3392, %v3390
    %3425 = vmatpush.bf16.msra.mxu0 %v3407
    %3426 = vmatpush.bf16.msra.mxu0 %v3405
    %3427 = vmatpush.bf16.msra.mxu0 %v3403
    %3428 = vmatpush.bf16.msra.mxu0 %v3401
    %3429 = vmatpush.bf16.msra.mxu0 %v3399
    %3430 = vmatpush.bf16.msra.mxu0 %v3397
    %3431 = vmatpush.bf16.msra.mxu0 %v3395
    %3432 = vmatpush.bf16.msra.mxu0 %v3393
    %3433 = vmatmul.bf16.gmra.mxu0 %v3319
    %v3434 = vpop.f32.mrf.mxu0
    %v3435 = vadd.f32 %v3341, %v3434
    %v3436 = vpop.f32.mrf.mxu0
    %v3437 = vadd.f32 %v3341, %v3436
    %3438 = vmatmul.bf16.gmra.mxu0 %v3320
    %v3439 = vpop.f32.mrf.mxu0
    %v3440 = vadd.f32 %v3341, %v3439
    %v3441 = vpop.f32.mrf.mxu0
    %v3442 = vadd.f32 %v3341, %v3441
    %3443 = vdwg.mxu0
    %3444 = vmatpush.bf16.msra.mxu0 %v3408
    %3445 = vmatpush.bf16.msra.mxu0 %v3406
    %3446 = vmatpush.bf16.msra.mxu0 %v3404
    %3447 = vmatpush.bf16.msra.mxu0 %v3402
    %3448 = vmatpush.bf16.msra.mxu0 %v3400
    %3449 = vmatpush.bf16.msra.mxu0 %v3398
    %3450 = vmatpush.bf16.msra.mxu0 %v3396
    %3451 = vmatpush.bf16.msra.mxu0 %v3394
    %3452 = vmatmul.bf16.gmra.mxu0 %v3319
    %v3453 = vpop.f32.mrf.mxu0
    %v3454 = vadd.f32 %v3342, %v3453
    %v3455 = vpop.f32.mrf.mxu0
    %v3456 = vadd.f32 %v3342, %v3455
    %3457 = vmatmul.bf16.gmra.mxu0 %v3320
    %v3458 = vpop.f32.mrf.mxu0
    %v3459 = vadd.f32 %v3342, %v3458
    %v3460 = vpop.f32.mrf.mxu0
    %v3461 = vadd.f32 %v3342, %v3460
    %3462 = vdwg.mxu0
    %v3463 = vmul.f32 %v3435, 0.5
    %v3464 = vmul.f32 %v3454, 0.5
    %v3465 = vmul.f32 %v3437, 0.5
    %v3466 = vmul.f32 %v3456, 0.5
    %v3467 = vmul.f32 %v3440, 0.5
    %v3468 = vmul.f32 %v3459, 0.5
    %v3469 = vmul.f32 %v3442, 0.5
    %v3470 = vmul.f32 %v3461, 0.5
    %v3471 = vmul.f32 %v3435, 0.044715
    %v3472 = vmul.f32 %v3454, 0.044715
    %v3473 = vmul.f32 %v3437, 0.044715
    %v3474 = vmul.f32 %v3456, 0.044715
    %v3475 = vmul.f32 %v3440, 0.044715
    %v3476 = vmul.f32 %v3459, 0.044715
    %v3477 = vmul.f32 %v3442, 0.044715
    %v3478 = vmul.f32 %v3461, 0.044715
    %v3479 = vmul.f32 %v3471, %v3435
    %v3480 = vmul.f32 %v3472, %v3454
    %v3481 = vmul.f32 %v3473, %v3437
    %v3482 = vmul.f32 %v3474, %v3456
    %v3483 = vmul.f32 %v3475, %v3440
    %v3484 = vmul.f32 %v3476, %v3459
    %v3485 = vmul.f32 %v3477, %v3442
    %v3486 = vmul.f32 %v3478, %v3461
    %v3487 = vmul.f32 %v3479, %v3435
    %v3488 = vmul.f32 %v3480, %v3454
    %v3489 = vmul.f32 %v3481, %v3437
    %v3490 = vmul.f32 %v3482, %v3456
    %v3491 = vmul.f32 %v3483, %v3440
    %v3492 = vmul.f32 %v3484, %v3459
    %v3493 = vmul.f32 %v3485, %v3442
    %v3494 = vmul.f32 %v3486, %v3461
    %v3495 = vadd.f32 %v3435, %v3487
    %v3496 = vadd.f32 %v3454, %v3488
    %v3497 = vadd.f32 %v3437, %v3489
    %v3498 = vadd.f32 %v3456, %v3490
    %v3499 = vadd.f32 %v3440, %v3491
    %v3500 = vadd.f32 %v3459, %v3492
    %v3501 = vadd.f32 %v3442, %v3493
    %v3502 = vadd.f32 %v3461, %v3494
    %v3503 = vmul.f32 %v3495, 0.7978846
    %v3504 = vmul.f32 %v3496, 0.7978846
    %v3505 = vmul.f32 %v3497, 0.7978846
    %v3506 = vmul.f32 %v3498, 0.7978846
    %v3507 = vmul.f32 %v3499, 0.7978846
    %v3508 = vmul.f32 %v3500, 0.7978846
    %v3509 = vmul.f32 %v3501, 0.7978846
    %v3510 = vmul.f32 %v3502, 0.7978846
    %v3511 = vtanh.pop %v3503
    %v3512 = vtanh.pop %v3504
    %v3513 = vtanh.pop %v3505
    %v3514 = vtanh.pop %v3506
    %v3515 = vtanh.pop %v3507
    %v3516 = vtanh.pop %v3508
    %v3517 = vtanh.pop %v3509
    %v3518 = vtanh.pop %v3510
    %v3519 = vadd.f32 %v3511, 1.0
    %v3520 = vadd.f32 %v3512, 1.0
    %v3521 = vadd.f32 %v3513, 1.0
    %v3522 = vadd.f32 %v3514, 1.0
    %v3523 = vadd.f32 %v3515, 1.0
    %v3524 = vadd.f32 %v3516, 1.0
    %v3525 = vadd.f32 %v3517, 1.0
    %v3526 = vadd.f32 %v3518, 1.0
    %v3527 = vmul.f32 %v3463, %v3519
    %v3528 = vmul.f32 %v3464, %v3520
    %v3529 = vmul.f32 %v3465, %v3521
    %v3530 = vmul.f32 %v3466, %v3522
    %v3531 = vmul.f32 %v3467, %v3523
    %v3532 = vmul.f32 %v3468, %v3524
    %v3533 = vmul.f32 %v3469, %v3525
    %v3534 = vmul.f32 %v3470, %v3526
    %v3535 = vpack.c.bf16 %v3529, %v3527
    %v3536 = vpack.c.bf16 %v3530, %v3528
    %v3537 = vpack.c.bf16 %v3533, %v3531
    %v3538 = vpack.c.bf16 %v3534, %v3532
    %s3539 = scalar_lea.vmem [#allocation17], 128
    %v3540 = vld [vmem:[%s3539] sm:$0xf]
    %v3541 = vld [vmem:[%s3539 + $0x4] sm:$0xf]
    %v3542 = vld [vmem:[%s3539 + $0x8] sm:$0xf]
    %v3543 = vld [vmem:[%s3539 + $0xc] sm:$0xf]
    %v3544 = vld [vmem:[%s3539 + $0x10] sm:$0xf]
    %v3545 = vld [vmem:[%s3539 + $0x14] sm:$0xf]
    %v3546 = vld [vmem:[%s3539 + $0x18] sm:$0xf]
    %v3547 = vld [vmem:[%s3539 + $0x1c] sm:$0xf]
    %v3548 = vld [vmem:[%s3539 + $0x20] sm:$0xf]
    %v3549 = vld [vmem:[%s3539 + $0x24] sm:$0xf]
    %v3550 = vld [vmem:[%s3539 + $0x28] sm:$0xf]
    %v3551 = vld [vmem:[%s3539 + $0x2c] sm:$0xf]
    %v3552 = vld [vmem:[%s3539 + $0x30] sm:$0xf]
    %v3553 = vld [vmem:[%s3539 + $0x34] sm:$0xf]
    %v3554 = vld [vmem:[%s3539 + $0x38] sm:$0xf]
    %v3555 = vld [vmem:[%s3539 + $0x3c] sm:$0xf]
    %v3556 = vld [vmem:[%s3539 + $0x40] sm:$0xf]
    %v3557 = vld [vmem:[%s3539 + $0x44] sm:$0xf]
    %v3558 = vld [vmem:[%s3539 + $0x48] sm:$0xf]
    %v3559 = vld [vmem:[%s3539 + $0x4c] sm:$0xf]
    %v3560 = vld [vmem:[%s3539 + $0x50] sm:$0xf]
    %v3561 = vld [vmem:[%s3539 + $0x54] sm:$0xf]
    %v3562 = vld [vmem:[%s3539 + $0x58] sm:$0xf]
    %v3563 = vld [vmem:[%s3539 + $0x5c] sm:$0xf]
    %v3564 = vld [vmem:[%s3539 + $0x60] sm:$0xf]
    %v3565 = vld [vmem:[%s3539 + $0x64] sm:$0xf]
    %v3566 = vld [vmem:[%s3539 + $0x68] sm:$0xf]
    %v3567 = vld [vmem:[%s3539 + $0x6c] sm:$0xf]
    %v3568 = vld [vmem:[%s3539 + $0x70] sm:$0xf]
    %v3569 = vld [vmem:[%s3539 + $0x74] sm:$0xf]
    %v3570 = vld [vmem:[%s3539 + $0x78] sm:$0xf]
    %v3571 = vld [vmem:[%s3539 + $0x7c] sm:$0xf]
    %s3572 = scalar_lea.vmem %s13, 1
    %v3573 = vld [vmem:[%s3572] sm:$0x1]
    %v3575 = vperm.slane %v3573, 0
    %v3609 = vunpack.c.l.b16 %v3540
    %v3610 = vunpack.c.l.b16 %v3541
    %v3611 = vunpack.c.l.b16 %v3542
    %v3612 = vunpack.c.l.b16 %v3543
    %v3613 = vunpack.c.l.b16 %v3544
    %v3614 = vunpack.c.l.b16 %v3545
    %v3615 = vunpack.c.l.b16 %v3546
    %v3616 = vunpack.c.l.b16 %v3547
    %v3617 = vunpack.c.l.b16 %v3548
    %v3618 = vunpack.c.l.b16 %v3549
    %v3619 = vunpack.c.l.b16 %v3550
    %v3620 = vunpack.c.l.b16 %v3551
    %v3621 = vunpack.c.l.b16 %v3552
    %v3622 = vunpack.c.l.b16 %v3553
    %v3623 = vunpack.c.l.b16 %v3554
    %v3624 = vunpack.c.l.b16 %v3555
    %v3625 = vunpack.c.l.b16 %v3556
    %v3626 = vunpack.c.l.b16 %v3557
    %v3627 = vunpack.c.l.b16 %v3558
    %v3628 = vunpack.c.l.b16 %v3559
    %v3629 = vunpack.c.l.b16 %v3560
    %v3630 = vunpack.c.l.b16 %v3561
    %v3631 = vunpack.c.l.b16 %v3562
    %v3632 = vunpack.c.l.b16 %v3563
    %v3633 = vunpack.c.l.b16 %v3564
    %v3634 = vunpack.c.l.b16 %v3565
    %v3635 = vunpack.c.l.b16 %v3566
    %v3636 = vunpack.c.l.b16 %v3567
    %v3637 = vunpack.c.l.b16 %v3568
    %v3638 = vunpack.c.l.b16 %v3569
    %v3639 = vunpack.c.l.b16 %v3570
    %v3640 = vunpack.c.l.b16 %v3571
    %v3641 = vpack.c.b16 %v3610, %v3609
    %v3642 = vpack.c.b16 %v3612, %v3611
    %v3643 = vpack.c.b16 %v3614, %v3613
    %v3644 = vpack.c.b16 %v3616, %v3615
    %v3645 = vpack.c.b16 %v3618, %v3617
    %v3646 = vpack.c.b16 %v3620, %v3619
    %v3647 = vpack.c.b16 %v3622, %v3621
    %v3648 = vpack.c.b16 %v3624, %v3623
    %v3649 = vpack.c.b16 %v3626, %v3625
    %v3650 = vpack.c.b16 %v3628, %v3627
    %v3651 = vpack.c.b16 %v3630, %v3629
    %v3652 = vpack.c.b16 %v3632, %v3631
    %v3653 = vpack.c.b16 %v3634, %v3633
    %v3654 = vpack.c.b16 %v3636, %v3635
    %v3655 = vpack.c.b16 %v3638, %v3637
    %v3656 = vpack.c.b16 %v3640, %v3639
    %3673 = vmatpush.bf16.msra.mxu0 %v3648
    %3674 = vmatpush.bf16.msra.mxu0 %v3647
    %3675 = vmatpush.bf16.msra.mxu0 %v3646
    %3676 = vmatpush.bf16.msra.mxu0 %v3645
    %3677 = vmatpush.bf16.msra.mxu0 %v3644
    %3678 = vmatpush.bf16.msra.mxu0 %v3643
    %3679 = vmatpush.bf16.msra.mxu0 %v3642
    %3680 = vmatpush.bf16.msra.mxu0 %v3641
    %3681 = vmatmul.bf16.gmra.mxu0 %v3535
    %v3682 = vpop.f32.mrf.mxu0
    %v3683 = vadd.f32 %v3575, %v3682
    %v3684 = vpop.f32.mrf.mxu0
    %v3685 = vadd.f32 %v3575, %v3684
    %3686 = vmatmul.bf16.gmra.mxu0 %v3537
    %v3687 = vpop.f32.mrf.mxu0
    %v3688 = vadd.f32 %v3575, %v3687
    %v3689 = vpop.f32.mrf.mxu0
    %v3690 = vadd.f32 %v3575, %v3689
    %3691 = vdwg.mxu0
    %3692 = vmatpush.bf16.msra.mxu0 %v3656
    %3693 = vmatpush.bf16.msra.mxu0 %v3655
    %3694 = vmatpush.bf16.msra.mxu0 %v3654
    %3695 = vmatpush.bf16.msra.mxu0 %v3653
    %3696 = vmatpush.bf16.msra.mxu0 %v3652
    %3697 = vmatpush.bf16.msra.mxu0 %v3651
    %3698 = vmatpush.bf16.msra.mxu0 %v3650
    %3699 = vmatpush.bf16.msra.mxu0 %v3649
    %3700 = vmatmul.bf16.gmra.mxu0 %v3536
    %v3701 = vpop.f32.mrf.mxu0
    %v3702 = vadd.f32 %v3683, %v3701
    %v3703 = vpop.f32.mrf.mxu0
    %v3704 = vadd.f32 %v3685, %v3703
    %3705 = vmatmul.bf16.gmra.mxu0 %v3538
    %v3706 = vpop.f32.mrf.mxu0
    %v3707 = vadd.f32 %v3688, %v3706
    %v3708 = vpop.f32.mrf.mxu0
    %v3709 = vadd.f32 %v3690, %v3708
    %3710 = vdwg.mxu0
    %v3711 = vadd.f32 %v3315, %v3702
    %v3712 = vadd.f32 %v3316, %v3704
    %v3713 = vadd.f32 %v3317, %v3707
    %v3714 = vadd.f32 %v3318, %v3709
    %s3715 = scalar_lea.vmem %s14, 1
    %v3716 = vld [vmem:[%s3715] sm:$0x1]
    %s3717 = scalar_lea.vmem %s15, 1
    %v3718 = vld [vmem:[%s3717] sm:$0x1]
    %3719 = vadd.xlane.f32.xlu0 %v3711
    %v3720 = vpop.xlane.xlu0 %3719
    %3721 = vadd.xlane.f32.xlu0 %v3712
    %v3722 = vpop.xlane.xlu0 %3721
    %3723 = vadd.xlane.f32.xlu0 %v3713
    %v3724 = vpop.xlane.xlu0 %3723
    %3725 = vadd.xlane.f32.xlu0 %v3714
    %v3726 = vpop.xlane.xlu0 %3725
    %v3727 = vmul.f32 %v3720, %v231
    %v3728 = vmul.f32 %v3722, %v231
    %v3729 = vmul.f32 %v3724, %v231
    %v3730 = vmul.f32 %v3726, %v231
    %v3731 = vmul.f32 %v3711, %v3711
    %v3732 = vmul.f32 %v3712, %v3712
    %v3733 = vmul.f32 %v3713, %v3713
    %v3734 = vmul.f32 %v3714, %v3714
    %3735 = vadd.xlane.f32.xlu0 %v3731
    %v3736 = vpop.xlane.xlu0 %3735
    %3737 = vadd.xlane.f32.xlu0 %v3732
    %v3738 = vpop.xlane.xlu0 %3737
    %3739 = vadd.xlane.f32.xlu0 %v3733
    %v3740 = vpop.xlane.xlu0 %3739
    %3741 = vadd.xlane.f32.xlu0 %v3734
    %v3742 = vpop.xlane.xlu0 %3741
    %v3743 = vmul.f32 %v3736, %v231
    %v3744 = vmul.f32 %v3738, %v231
    %v3745 = vmul.f32 %v3740, %v231
    %v3746 = vmul.f32 %v3742, %v231
    %v3747 = vmul.f32 %v3727, %v3727
    %v3748 = vmul.f32 %v3728, %v3728
    %v3749 = vmul.f32 %v3729, %v3729
    %v3750 = vmul.f32 %v3730, %v3730
    %v3751 = vsub.f32 %v3743, %v3747
    %v3752 = vsub.f32 %v3744, %v3748
    %v3753 = vsub.f32 %v3745, %v3749
    %v3754 = vsub.f32 %v3746, %v3750
    %v3755 = vmax.f32 %v3751, 0.0
    %v3756 = vmax.f32 %v3752, 0.0
    %v3757 = vmax.f32 %v3753, 0.0
    %v3758 = vmax.f32 %v3754, 0.0
    %v3759 = vsub.f32 %v3711, %v3727
    %v3760 = vsub.f32 %v3712, %v3728
    %v3761 = vsub.f32 %v3713, %v3729
    %v3762 = vsub.f32 %v3714, %v3730
    %v3763 = vadd.f32 %v3755, 1e-12
    %v3764 = vadd.f32 %v3756, 1e-12
    %v3765 = vadd.f32 %v3757, 1e-12
    %v3766 = vadd.f32 %v3758, 1e-12
    %v3767 = vrsqrt.pop %v3763
    %v3768 = vmul.f32 %v3767, %v3763
    %v3769 = vmul.f32 %v3768, %v3767
    %v3770 = vmul.f32 0.5, %v3769
    %v3771 = vsub.f32 1.5, %v3770
    %v3772 = vmul.f32 %v3767, %v3771
    %vm3773 = vweird.f32 %v3763
    %vm3774 = vweird.f32 %v3767
    %vm3775 = vmor %vm3773, %vm3774
    %v3776 = vsel %vm3775, %v3767, %v3772
    %v3777 = vrsqrt.pop %v3764
    %v3778 = vmul.f32 %v3777, %v3764
    %v3779 = vmul.f32 %v3778, %v3777
    %v3780 = vmul.f32 0.5, %v3779
    %v3781 = vsub.f32 1.5, %v3780
    %v3782 = vmul.f32 %v3777, %v3781
    %vm3783 = vweird.f32 %v3764
    %vm3784 = vweird.f32 %v3777
    %vm3785 = vmor %vm3783, %vm3784
    %v3786 = vsel %vm3785, %v3777, %v3782
    %v3787 = vrsqrt.pop %v3765
    %v3788 = vmul.f32 %v3787, %v3765
    %v3789 = vmul.f32 %v3788, %v3787
    %v3790 = vmul.f32 0.5, %v3789
    %v3791 = vsub.f32 1.5, %v3790
    %v3792 = vmul.f32 %v3787, %v3791
    %vm3793 = vweird.f32 %v3765
    %vm3794 = vweird.f32 %v3787
    %vm3795 = vmor %vm3793, %vm3794
    %v3796 = vsel %vm3795, %v3787, %v3792
    %v3797 = vrsqrt.pop %v3766
    %v3798 = vmul.f32 %v3797, %v3766
    %v3799 = vmul.f32 %v3798, %v3797
    %v3800 = vmul.f32 0.5, %v3799
    %v3801 = vsub.f32 1.5, %v3800
    %v3802 = vmul.f32 %v3797, %v3801
    %vm3803 = vweird.f32 %v3766
    %vm3804 = vweird.f32 %v3797
    %vm3805 = vmor %vm3803, %vm3804
    %v3806 = vsel %vm3805, %v3797, %v3802
    %v3807 = vmul.f32 %v3759, %v3776
    %v3808 = vmul.f32 %v3760, %v3786
    %v3809 = vmul.f32 %v3761, %v3796
    %v3810 = vmul.f32 %v3762, %v3806
    %v3812 = vperm.slane %v3716, 0
    %v3814 = vmul.f32 %v3807, %v3812
    %v3815 = vmul.f32 %v3808, %v3812
    %v3816 = vmul.f32 %v3809, %v3812
    %v3817 = vmul.f32 %v3810, %v3812
    %v3819 = vperm.slane %v3718, 0
    %v3821 = vadd.f32 %v3814, %v3819
    %v3822 = vadd.f32 %v3815, %v3819
    %v3823 = vadd.f32 %v3816, %v3819
    %v3824 = vadd.f32 %v3817, %v3819
    %3825 = vst [vmem:[#allocation19] sm:$0xff] %v3821
    %3826 = vst [vmem:[#allocation19 + $0x8] sm:$0xff] %v3822
    %3827 = vst [vmem:[#allocation19 + $0x10] sm:$0xff] %v3823
    %3828 = vst [vmem:[#allocation19 + $0x18] sm:$0xff] %v3824
    // Predicated region
    $region106: #{tpu_custom_call.1} parent=1 // pred_check
      _
    $region107: #{tpu_custom_call.1} parent=1 // pred_check_branch
      %3830 = sbr.rel (0) target = $region109
    $region108: #{tpu_custom_call.1} parent=1 // pred_region
      %3832 = vsyncadd [#allocation4], 0
      %s3833 = sshll.u32 [#allocation19], 4
      %s3834 = int_to_ptr.vmem [resolvable:$true] %s3833
      %s3835 = sshll.u32 %s16, 4
      %s3836 = int_to_ptr.hbm [resolvable:$true] %s3835
      %3841 = dma.vmem_to_hbm [thread:$0]  %s3834, 512, %s3836, [#allocation4], 128, 128, 8
    $region109: #{tpu_custom_call.1} parent=1 // pred_fallthru
      _
    // Predicated region
    $region110: #{tpu_custom_call.1} parent=1 // pred_check
      _
    $region111: #{tpu_custom_call.1} parent=1 // pred_check_branch
      %3843 = sbr.rel (0) target = $region113
    $region112: #{tpu_custom_call.1} parent=1 // pred_region
      %3845 = dma.done [#allocation4], 512
    $region113: #{tpu_custom_call.1} parent=1 // pred_fallthru
      _
    %3846 = vsyncpa [#allocation3], 1
    %3847 = vsyncpa [#allocation6], 1
    %3848 = vsyncpa [#allocation9], 1
    %3849 = vsyncpa [#allocation12], 1
    %3850 = vsyncpa [#allocation15], 1
    %3851 = vsyncpa [#allocation18], 1
    %3852 = vsyncpa [#allocation4], 1

</llo_original>
